<compile_context>
chip_gen: v7x
topology: tpu7x:2x2x1
jax: 0.10.0
libtpu: 0.0.40
codegen_flags: <defaults>
</compile_context>

<pallas_src>
import functools

import jax
import jax.numpy as jnp
from jax import lax
from jax.experimental import pallas as pl
from jax.experimental.pallas import tpu as pltpu


def _round_up(x, m):
    return (x + m - 1) // m * m


def fused_lstm_fc_kernel(
    x_ref,       # [T, BT, F]     layer-0 input (zero padded, time-major)
    wih_ref,     # [L, F, 4Hp]    input->gate weights (padded, gate-blocked)
    whh_ref,     # [L, Hp, 4Hp]   hidden->gate weights (padded, gate-blocked)
    b_ref,       # [L, 1, 4Hp]    b_ih + b_hh (padded, gate-blocked)
    fcw_ref,     # [Hp, Cp]       classifier weight (padded)
    fcb_ref,     # [1, Cp]        classifier bias  (padded)
    logits_ref,  # [BT, Cp]       output
    gates_ref,   # scratch [T, BT, 4Hp]  precomputed input projections
    seq_a_ref,   # scratch [T, BT, F]    inter-layer hidden sequence (ping)
    seq_b_ref,   # scratch [T, BT, F]    inter-layer hidden sequence (pong)
    *,
    num_layers,
    seq_len,
    hid_pad,
    feat_pad,
    matmul_dtype,
):
    T = seq_len
    BT = x_ref.shape[1]
    Hp = hid_pad
    F = feat_pad

    if F > Hp:
        # Padded tail columns of the inter-layer buffers must hold finite zeros.
        seq_a_ref[...] = jnp.zeros_like(seq_a_ref)
        seq_b_ref[...] = jnp.zeros_like(seq_b_ref)

    bufs = (seq_a_ref, seq_b_ref)
    h_last = None

    for layer in range(num_layers):
        in_ref = x_ref if layer == 0 else bufs[(layer - 1) % 2]
        out_ref = bufs[layer % 2]
        is_last = layer == num_layers - 1

        # ---- hoisted input projection: one big MXU matmul for all timesteps ----
        x_all = in_ref[...].reshape(T * BT, F).astype(matmul_dtype)
        w_ih = wih_ref[layer].astype(matmul_dtype)                 # [F, 4Hp]
        gx = jnp.dot(x_all, w_ih, preferred_element_type=jnp.float32)
        gates_ref[...] = (gx + b_ref[layer]).reshape(T, BT, 4 * Hp)

        w_hh = whh_ref[layer].astype(matmul_dtype)                 # [Hp, 4Hp]

        # ---- serial recurrence: one small matmul + activations per step ----
        def step(t, carry, gates_scr=gates_ref, out_ref=out_ref, w_hh=w_hh,
                 is_last=is_last):
            h, c = carry
            gates = gates_scr[t] + jnp.dot(
                h.astype(matmul_dtype), w_hh, preferred_element_type=jnp.float32
            )                                                       # [BT, 4Hp]
            i_g = jax.nn.sigmoid(gates[:, 0 * Hp:1 * Hp])
            f_g = jax.nn.sigmoid(gates[:, 1 * Hp:2 * Hp])
            g_g = jnp.tanh(gates[:, 2 * Hp:3 * Hp])
            o_g = jax.nn.sigmoid(gates[:, 3 * Hp:4 * Hp])
            c_new = f_g * c + i_g * g_g                             # f32 recurrence
            h_new = o_g * jnp.tanh(c_new)
            if not is_last:                                         # last layer: keep only h_{T-1}
                if F == Hp:
                    out_ref[t] = h_new
                else:
                    out_ref[t, :, 0:Hp] = h_new
            return (h_new, c_new)

        h0 = jnp.zeros((BT, Hp), jnp.float32)
        c0 = jnp.zeros((BT, Hp), jnp.float32)
        h_last, _ = lax.fori_loop(0, T, step, (h0, c0), unroll=True)

    # ---- classifier head on h_{T-1} of the last layer (dropout = identity in eval) ----
    logits_ref[...] = (
        jnp.dot(h_last.astype(matmul_dtype), fcw_ref[...].astype(matmul_dtype),
                preferred_element_type=jnp.float32)
        + fcb_ref[...]
    )


def pack_params(params, *, input_dim, hidden_dim, num_layers, num_classes,
                feat_pad, hid_pad, cls_pad):
    """Pad PyTorch-shaped weights into lane-aligned, gate-blocked stacks."""
    H, Hp, F, Cp = hidden_dim, hid_pad, feat_pad, cls_pad
    wih_l, whh_l, b_l = [], [], []
    for layer in range(num_layers):
        din = input_dim if layer == 0 else hidden_dim
        w_ih, w_hh, b_ih, b_hh = params[f"lstm_{layer}"]
        w_ih_t = w_ih.T.astype(jnp.float32)      # [din, 4H]
        w_hh_t = w_hh.T.astype(jnp.float32)      # [H,   4H]
        b = (b_ih + b_hh).astype(jnp.float32)    # [4H]
        wih_p = jnp.zeros((F, 4 * Hp), jnp.float32)
        whh_p = jnp.zeros((Hp, 4 * Hp), jnp.float32)
        b_p = jnp.zeros((4 * Hp,), jnp.float32)
        for gi in range(4):  # gate order i, f, g, o — each gate gets a lane-aligned 128-wide block
            wih_p = wih_p.at[:din, gi * Hp:gi * Hp + H].set(w_ih_t[:, gi * H:(gi + 1) * H])
            whh_p = whh_p.at[:H, gi * Hp:gi * Hp + H].set(w_hh_t[:, gi * H:(gi + 1) * H])
            b_p = b_p.at[gi * Hp:gi * Hp + H].set(b[gi * H:(gi + 1) * H])
        wih_l.append(wih_p)
        whh_l.append(whh_p)
        b_l.append(b_p.reshape(1, 4 * Hp))
    fc_w, fc_b = params["fc"]                    # [C, H], [C]
    fcw_p = jnp.zeros((Hp, Cp), jnp.float32).at[:H, :num_classes].set(fc_w.T.astype(jnp.float32))
    fcb_p = jnp.zeros((1, Cp), jnp.float32).at[0, :num_classes].set(fc_b.astype(jnp.float32))
    return jnp.stack(wih_l), jnp.stack(whh_l), jnp.stack(b_l), fcw_p, fcb_p


def lstm_classifier_forward(x, params, *, hidden_dim, num_layers, num_classes,
                            matmul_dtype=jnp.float32):
    """x: [B, T, input_dim] (batch_first like the PyTorch module). Returns [B, num_classes]."""
    B, T, input_dim = x.shape
    Hp = _round_up(hidden_dim, 128)                    # lane-aligned hidden width
    F = max(_round_up(input_dim, 128), Hp)             # common padded feature width across layers
    Cp = _round_up(num_classes, 128)                   # lane-dense logits store
    Bp = _round_up(B, 8)                               # sublane-aligned batch
    BT = min(Bp, 128)                                  # batch tile (parallel grid axis)
    Bp = _round_up(Bp, BT)

    wih_s, whh_s, b_s, fcw_p, fcb_p = pack_params(
        params, input_dim=input_dim, hidden_dim=hidden_dim, num_layers=num_layers,
        num_classes=num_classes, feat_pad=F, hid_pad=Hp, cls_pad=Cp)

    # time-major, zero-padded layer-0 input: [T, Bp, F]
    x_tm = jnp.transpose(x, (1, 0, 2)).astype(jnp.float32)
    x_p = jnp.zeros((T, Bp, F), jnp.float32).at[:, :B, :input_dim].set(x_tm)

    kernel = functools.partial(
        fused_lstm_fc_kernel, num_layers=num_layers, seq_len=T,
        hid_pad=Hp, feat_pad=F, matmul_dtype=matmul_dtype)

    logits_p = pl.pallas_call(
        kernel,
        out_shape=jax.ShapeDtypeStruct((Bp, Cp), jnp.float32),
        grid_spec=pltpu.PrefetchScalarGridSpec(
            num_scalar_prefetch=0,
            grid=(Bp // BT,),                                        # batch tiles (parallel)
            in_specs=[
                pl.BlockSpec((T, BT, F), lambda b: (0, b, 0)),       # x: tile over batch
                pl.BlockSpec((num_layers, F, 4 * Hp), lambda b: (0, 0, 0)),
                pl.BlockSpec((num_layers, Hp, 4 * Hp), lambda b: (0, 0, 0)),
                pl.BlockSpec((num_layers, 1, 4 * Hp), lambda b: (0, 0, 0)),
                pl.BlockSpec((Hp, Cp), lambda b: (0, 0)),
                pl.BlockSpec((1, Cp), lambda b: (0, 0)),
            ],
            out_specs=pl.BlockSpec((BT, Cp), lambda b: (b, 0)),
            scratch_shapes=[
                pltpu.VMEM((T, BT, 4 * Hp), jnp.float32),            # precomputed input gates
                pltpu.VMEM((T, BT, F), jnp.float32),                 # inter-layer h (ping)
                pltpu.VMEM((T, BT, F), jnp.float32),                 # inter-layer h (pong)
            ],
        ),
        # TODO(synk): for large T*B*H set vmem_limit_bytes / chunk T (v7x has 64 MiB VMEM).
        compiler_params=pltpu.CompilerParams(
            dimension_semantics=("parallel",),
        ),
    )(x_p, wih_s, whh_s, b_s, fcw_p, fcb_p)

    return logits_p[:B, :num_classes]


def init_params(key, input_dim, hidden_dim, num_layers, num_classes):
    """Deterministic init with PyTorch nn.LSTM / nn.Linear shapes."""
    params = {}
    bound = 1.0 / float(hidden_dim) ** 0.5
    for layer in range(num_layers):
        din = input_dim if layer == 0 else hidden_dim
        key, k1, k2, k3, k4 = jax.random.split(key, 5)
        params[f"lstm_{layer}"] = (
            jax.random.uniform(k1, (4 * hidden_dim, din), jnp.float32, -bound, bound),
            jax.random.uniform(k2, (4 * hidden_dim, hidden_dim), jnp.float32, -bound, bound),
            jax.random.uniform(k3, (4 * hidden_dim,), jnp.float32, -bound, bound),
            jax.random.uniform(k4, (4 * hidden_dim,), jnp.float32, -bound, bound),
        )
    key, k5, k6 = jax.random.split(key, 3)
    params["fc"] = (
        jax.random.uniform(k5, (num_classes, hidden_dim), jnp.float32, -bound, bound),
        jax.random.uniform(k6, (num_classes,), jnp.float32, -bound, bound),
    )
    return params


def reference_forward(x, params, *, hidden_dim, num_layers, num_classes):
    """Pure-JAX reference matching PyTorch eval-mode semantics."""
    B, T, _ = x.shape
    H = hidden_dim
    h_seq = x.astype(jnp.float32)
    for layer in range(num_layers):
        w_ih, w_hh, b_ih, b_hh = params[f"lstm_{layer}"]

        def step(carry, x_t, w_ih=w_ih, w_hh=w_hh, b_ih=b_ih, b_hh=b_hh):
            h, c = carry
            gates = x_t @ w_ih.T + b_ih + h @ w_hh.T + b_hh
            i = jax.nn.sigmoid(gates[:, 0 * H:1 * H])
            f = jax.nn.sigmoid(gates[:, 1 * H:2 * H])
            g = jnp.tanh(gates[:, 2 * H:3 * H])
            o = jax.nn.sigmoid(gates[:, 3 * H:4 * H])
            c = f * c + i * g
            h = o * jnp.tanh(c)
            return (h, c), h

        h0 = jnp.zeros((B, H), jnp.float32)
        c0 = jnp.zeros((B, H), jnp.float32)
        _, hs = lax.scan(step, (h0, c0), jnp.transpose(h_seq, (1, 0, 2)))
        h_seq = jnp.transpose(hs, (1, 0, 2))
    fc_w, fc_b = params["fc"]
    return h_seq[:, -1, :] @ fc_w.T + fc_b


if __name__ == "__main__":
    # Small shapes consistent with the module: x is [batch, seq, input_dim].
    B, T, INPUT_DIM, HIDDEN_DIM, NUM_LAYERS, NUM_CLASSES = 2, 8, 16, 32, 2, 2

    root = jax.random.PRNGKey(0)
    k_x, k_p = jax.random.split(root)
    x = jax.random.normal(k_x, (B, T, INPUT_DIM), jnp.float32)
    params = init_params(k_p, INPUT_DIM, HIDDEN_DIM, NUM_LAYERS, NUM_CLASSES)

    logits = lstm_classifier_forward(
        x, params,
        hidden_dim=HIDDEN_DIM, num_layers=NUM_LAYERS, num_classes=NUM_CLASSES,
        matmul_dtype=jnp.float32,   # set jnp.bfloat16 on v6e/v7x for MXU throughput
    )
    jax.block_until_ready(logits)
    assert logits.shape == (B, NUM_CLASSES)

    ref = reference_forward(
        x, params, hidden_dim=HIDDEN_DIM, num_layers=NUM_LAYERS, num_classes=NUM_CLASSES)
    assert jnp.allclose(logits, ref, atol=2e-2, rtol=2e-2)

    print("KERNEL_OK")
</pallas_src>

<mosaic_0001>
module attributes {stable_mosaic.version = 11 : i64} {
  func.func @fused_lstm_fc_kernel(%arg0: i32, %arg1: memref<8x8x128xf32, #tpu.memory_space<vmem>>, %arg2: memref<2x128x512xf32, #tpu.memory_space<vmem>>, %arg3: memref<2x128x512xf32, #tpu.memory_space<vmem>>, %arg4: memref<2x1x512xf32, #tpu.memory_space<vmem>>, %arg5: memref<128x128xf32, #tpu.memory_space<vmem>>, %arg6: memref<1x128xf32, #tpu.memory_space<vmem>>, %arg7: memref<8x128xf32, #tpu.memory_space<vmem>>, %arg8: memref<8x8x512xf32, #tpu.memory_space<vmem>>, %arg9: memref<8x8x128xf32, #tpu.memory_space<vmem>>, %arg10: memref<8x8x128xf32, #tpu.memory_space<vmem>>) attributes {dimension_semantics = [#tpu.dimension_semantics<parallel>], iteration_bounds = array<i64: 1>, scalar_prefetch = 0 : i64, scratch_operands = 3 : i64, tpu.core_type = #tpu.core_type<tc>, window_params = [{transform_indices = @transform_0, window_bounds = array<i64: 8, 8, 128>}, {pipeline_mode = #tpu.pipeline_mode<synchronous>, transform_indices = @transform_1, window_bounds = array<i64: 2, 128, 512>}, {pipeline_mode = #tpu.pipeline_mode<synchronous>, transform_indices = @transform_2, window_bounds = array<i64: 2, 128, 512>}, {pipeline_mode = #tpu.pipeline_mode<synchronous>, transform_indices = @transform_3, window_bounds = array<i64: 2, 1, 512>}, {pipeline_mode = #tpu.pipeline_mode<synchronous>, transform_indices = @transform_4, window_bounds = array<i64: 128, 128>}, {pipeline_mode = #tpu.pipeline_mode<synchronous>, transform_indices = @transform_5, window_bounds = array<i64: 1, 128>}, {transform_indices = @transform_6, window_bounds = array<i64: 8, 128>}]} {
    %c0 = arith.constant 0 : index
    %c0_0 = arith.constant 0 : index
    %c0_1 = arith.constant 0 : index
    %0 = vector.load %arg1[%c0, %c0_0, %c0_1] : memref<8x8x128xf32, #tpu.memory_space<vmem>>, vector<8x8x128xf32>
    %1 = vector.shape_cast %0 : vector<8x8x128xf32> to vector<64x128xf32>
    %c0_2 = arith.constant 0 : index
    %c0_3 = arith.constant 0 : index
    %c0_4 = arith.constant 0 : index
    %2 = vector.load %arg2[%c0_2, %c0_3, %c0_4] : memref<2x128x512xf32, #tpu.memory_space<vmem>>, vector<1x128x512xf32>
    %3 = vector.shape_cast %2 : vector<1x128x512xf32> to vector<128x512xf32>
    %cst = arith.constant dense<0.000000e+00> : vector<64x512xf32>
    %4 = tpu.matmul %1, %3, %cst {dimension_numbers = #tpu.dot_dimension_numbers<[1], [0], [0], [1], [0, 0, 1, 1], [], []>} : vector<64x128xf32>, vector<128x512xf32>, vector<64x512xf32> -> vector<64x512xf32>
    %c0_5 = arith.constant 0 : index
    %c0_6 = arith.constant 0 : index
    %c0_7 = arith.constant 0 : index
    %5 = vector.load %arg4[%c0_5, %c0_6, %c0_7] : memref<2x1x512xf32, #tpu.memory_space<vmem>>, vector<1x1x512xf32>
    %6 = vector.shape_cast %5 : vector<1x1x512xf32> to vector<1x512xf32>
    %7 = vector.broadcast %6 : vector<1x512xf32> to vector<64x512xf32>
    %8 = arith.addf %4, %7 : vector<64x512xf32>
    %9 = vector.shape_cast %8 : vector<64x512xf32> to vector<8x8x512xf32>
    %c0_8 = arith.constant 0 : index
    %c0_9 = arith.constant 0 : index
    %c0_10 = arith.constant 0 : index
    %10 = vector.load %arg8[%c0_8, %c0_9, %c0_10] : memref<8x8x512xf32, #tpu.memory_space<vmem>>, vector<8x8x512xf32>
    tpu.vector_store %arg8[%c0_8, %c0_9, %c0_10], %9 {strides = array<i32>} : memref<8x8x512xf32, #tpu.memory_space<vmem>>, vector<8x8x512xf32>,
    %c0_11 = arith.constant 0 : index
    %c0_12 = arith.constant 0 : index
    %c0_13 = arith.constant 0 : index
    %11 = vector.load %arg3[%c0_11, %c0_12, %c0_13] : memref<2x128x512xf32, #tpu.memory_space<vmem>>, vector<1x128x512xf32>
    %12 = vector.shape_cast %11 : vector<1x128x512xf32> to vector<128x512xf32>
    %cst_14 = arith.constant 0.000000e+00 : f32
    %13 = vector.broadcast %cst_14 : f32 to vector<8x128xf32>
    %cst_15 = arith.constant 0.000000e+00 : f32
    %14 = vector.broadcast %cst_15 : f32 to vector<8x128xf32>
    %c0_i32 = arith.constant 0 : i32
    %15 = arith.index_cast %c0_i32 : i32 to index
    %c0_16 = arith.constant 0 : index
    %c0_17 = arith.constant 0 : index
    %16 = vector.load %arg8[%15, %c0_16, %c0_17] : memref<8x8x512xf32, #tpu.memory_space<vmem>>, vector<1x8x512xf32>
    %17 = vector.shape_cast %16 : vector<1x8x512xf32> to vector<8x512xf32>
    %cst_18 = arith.constant dense<0.000000e+00> : vector<8x512xf32>
    %18 = tpu.matmul %13, %12, %cst_18 {dimension_numbers = #tpu.dot_dimension_numbers<[1], [0], [0], [1], [0, 0, 1, 1], [], []>} : vector<8x128xf32>, vector<128x512xf32>, vector<8x512xf32> -> vector<8x512xf32>
    %19 = arith.addf %17, %18 : vector<8x512xf32>
    %20 = vector.extract_strided_slice %19 {offsets = [0, 0], sizes = [8, 128], strides = [1, 1]} : vector<8x512xf32> to vector<8x128xf32>
    %21 = arith.negf %20 : vector<8x128xf32>
    %22 = math.exp %21 : vector<8x128xf32>
    %cst_19 = arith.constant 1.000000e+00 : f32
    %23 = vector.broadcast %cst_19 : f32 to vector<8x128xf32>
    %24 = arith.addf %23, %22 : vector<8x128xf32>
    %25 = arith.divf %23, %24 : vector<8x128xf32>
    %26 = vector.extract_strided_slice %19 {offsets = [0, 128], sizes = [8, 128], strides = [1, 1]} : vector<8x512xf32> to vector<8x128xf32>
    %27 = arith.negf %26 : vector<8x128xf32>
    %28 = math.exp %27 : vector<8x128xf32>
    %cst_20 = arith.constant 1.000000e+00 : f32
    %29 = vector.broadcast %cst_20 : f32 to vector<8x128xf32>
    %30 = arith.addf %29, %28 : vector<8x128xf32>
    %31 = arith.divf %29, %30 : vector<8x128xf32>
    %32 = vector.extract_strided_slice %19 {offsets = [0, 256], sizes = [8, 128], strides = [1, 1]} : vector<8x512xf32> to vector<8x128xf32>
    %33 = math.tanh %32 : vector<8x128xf32>
    %34 = vector.extract_strided_slice %19 {offsets = [0, 384], sizes = [8, 128], strides = [1, 1]} : vector<8x512xf32> to vector<8x128xf32>
    %35 = arith.negf %34 : vector<8x128xf32>
    %36 = math.exp %35 : vector<8x128xf32>
    %cst_21 = arith.constant 1.000000e+00 : f32
    %37 = vector.broadcast %cst_21 : f32 to vector<8x128xf32>
    %38 = arith.addf %37, %36 : vector<8x128xf32>
    %39 = arith.divf %37, %38 : vector<8x128xf32>
    %40 = arith.mulf %31, %14 : vector<8x128xf32>
    %41 = arith.mulf %25, %33 : vector<8x128xf32>
    %42 = arith.addf %40, %41 : vector<8x128xf32>
    %43 = math.tanh %42 : vector<8x128xf32>
    %44 = arith.mulf %39, %43 : vector<8x128xf32>
    %45 = arith.index_cast %c0_i32 : i32 to index
    %c0_22 = arith.constant 0 : index
    %c0_23 = arith.constant 0 : index
    %46 = vector.load %arg9[%45, %c0_22, %c0_23] : memref<8x8x128xf32, #tpu.memory_space<vmem>>, vector<1x8x128xf32>
    %47 = vector.shape_cast %46 : vector<1x8x128xf32> to vector<8x128xf32>
    %48 = vector.shape_cast %44 : vector<8x128xf32> to vector<1x8x128xf32>
    tpu.vector_store %arg9[%45, %c0_22, %c0_23], %48 {strides = array<i32>} : memref<8x8x128xf32, #tpu.memory_space<vmem>>, vector<1x8x128xf32>,
    %c1_i32 = arith.constant 1 : i32
    %49 = arith.index_cast %c1_i32 : i32 to index
    %c0_24 = arith.constant 0 : index
    %c0_25 = arith.constant 0 : index
    %50 = vector.load %arg8[%49, %c0_24, %c0_25] : memref<8x8x512xf32, #tpu.memory_space<vmem>>, vector<1x8x512xf32>
    %51 = vector.shape_cast %50 : vector<1x8x512xf32> to vector<8x512xf32>
    %cst_26 = arith.constant dense<0.000000e+00> : vector<8x512xf32>
    %52 = tpu.matmul %44, %12, %cst_26 {dimension_numbers = #tpu.dot_dimension_numbers<[1], [0], [0], [1], [0, 0, 1, 1], [], []>} : vector<8x128xf32>, vector<128x512xf32>, vector<8x512xf32> -> vector<8x512xf32>
    %53 = arith.addf %51, %52 : vector<8x512xf32>
    %54 = vector.extract_strided_slice %53 {offsets = [0, 0], sizes = [8, 128], strides = [1, 1]} : vector<8x512xf32> to vector<8x128xf32>
    %55 = arith.negf %54 : vector<8x128xf32>
    %56 = math.exp %55 : vector<8x128xf32>
    %cst_27 = arith.constant 1.000000e+00 : f32
    %57 = vector.broadcast %cst_27 : f32 to vector<8x128xf32>
    %58 = arith.addf %57, %56 : vector<8x128xf32>
    %59 = arith.divf %57, %58 : vector<8x128xf32>
    %60 = vector.extract_strided_slice %53 {offsets = [0, 128], sizes = [8, 128], strides = [1, 1]} : vector<8x512xf32> to vector<8x128xf32>
    %61 = arith.negf %60 : vector<8x128xf32>
    %62 = math.exp %61 : vector<8x128xf32>
    %cst_28 = arith.constant 1.000000e+00 : f32
    %63 = vector.broadcast %cst_28 : f32 to vector<8x128xf32>
    %64 = arith.addf %63, %62 : vector<8x128xf32>
    %65 = arith.divf %63, %64 : vector<8x128xf32>
    %66 = vector.extract_strided_slice %53 {offsets = [0, 256], sizes = [8, 128], strides = [1, 1]} : vector<8x512xf32> to vector<8x128xf32>
    %67 = math.tanh %66 : vector<8x128xf32>
    %68 = vector.extract_strided_slice %53 {offsets = [0, 384], sizes = [8, 128], strides = [1, 1]} : vector<8x512xf32> to vector<8x128xf32>
    %69 = arith.negf %68 : vector<8x128xf32>
    %70 = math.exp %69 : vector<8x128xf32>
    %cst_29 = arith.constant 1.000000e+00 : f32
    %71 = vector.broadcast %cst_29 : f32 to vector<8x128xf32>
    %72 = arith.addf %71, %70 : vector<8x128xf32>
    %73 = arith.divf %71, %72 : vector<8x128xf32>
    %74 = arith.mulf %65, %42 : vector<8x128xf32>
    %75 = arith.mulf %59, %67 : vector<8x128xf32>
    %76 = arith.addf %74, %75 : vector<8x128xf32>
    %77 = math.tanh %76 : vector<8x128xf32>
    %78 = arith.mulf %73, %77 : vector<8x128xf32>
    %79 = arith.index_cast %c1_i32 : i32 to index
    %c0_30 = arith.constant 0 : index
    %c0_31 = arith.constant 0 : index
    %80 = vector.load %arg9[%79, %c0_30, %c0_31] : memref<8x8x128xf32, #tpu.memory_space<vmem>>, vector<1x8x128xf32>
    %81 = vector.shape_cast %80 : vector<1x8x128xf32> to vector<8x128xf32>
    %82 = vector.shape_cast %78 : vector<8x128xf32> to vector<1x8x128xf32>
    tpu.vector_store %arg9[%79, %c0_30, %c0_31], %82 {strides = array<i32>} : memref<8x8x128xf32, #tpu.memory_space<vmem>>, vector<1x8x128xf32>,
    %c2_i32 = arith.constant 2 : i32
    %83 = arith.index_cast %c2_i32 : i32 to index
    %c0_32 = arith.constant 0 : index
    %c0_33 = arith.constant 0 : index
    %84 = vector.load %arg8[%83, %c0_32, %c0_33] : memref<8x8x512xf32, #tpu.memory_space<vmem>>, vector<1x8x512xf32>
    %85 = vector.shape_cast %84 : vector<1x8x512xf32> to vector<8x512xf32>
    %cst_34 = arith.constant dense<0.000000e+00> : vector<8x512xf32>
    %86 = tpu.matmul %78, %12, %cst_34 {dimension_numbers = #tpu.dot_dimension_numbers<[1], [0], [0], [1], [0, 0, 1, 1], [], []>} : vector<8x128xf32>, vector<128x512xf32>, vector<8x512xf32> -> vector<8x512xf32>
    %87 = arith.addf %85, %86 : vector<8x512xf32>
    %88 = vector.extract_strided_slice %87 {offsets = [0, 0], sizes = [8, 128], strides = [1, 1]} : vector<8x512xf32> to vector<8x128xf32>
    %89 = arith.negf %88 : vector<8x128xf32>
    %90 = math.exp %89 : vector<8x128xf32>
    %cst_35 = arith.constant 1.000000e+00 : f32
    %91 = vector.broadcast %cst_35 : f32 to vector<8x128xf32>
    %92 = arith.addf %91, %90 : vector<8x128xf32>
    %93 = arith.divf %91, %92 : vector<8x128xf32>
    %94 = vector.extract_strided_slice %87 {offsets = [0, 128], sizes = [8, 128], strides = [1, 1]} : vector<8x512xf32> to vector<8x128xf32>
    %95 = arith.negf %94 : vector<8x128xf32>
    %96 = math.exp %95 : vector<8x128xf32>
    %cst_36 = arith.constant 1.000000e+00 : f32
    %97 = vector.broadcast %cst_36 : f32 to vector<8x128xf32>
    %98 = arith.addf %97, %96 : vector<8x128xf32>
    %99 = arith.divf %97, %98 : vector<8x128xf32>
    %100 = vector.extract_strided_slice %87 {offsets = [0, 256], sizes = [8, 128], strides = [1, 1]} : vector<8x512xf32> to vector<8x128xf32>
    %101 = math.tanh %100 : vector<8x128xf32>
    %102 = vector.extract_strided_slice %87 {offsets = [0, 384], sizes = [8, 128], strides = [1, 1]} : vector<8x512xf32> to vector<8x128xf32>
    %103 = arith.negf %102 : vector<8x128xf32>
    %104 = math.exp %103 : vector<8x128xf32>
    %cst_37 = arith.constant 1.000000e+00 : f32
    %105 = vector.broadcast %cst_37 : f32 to vector<8x128xf32>
    %106 = arith.addf %105, %104 : vector<8x128xf32>
    %107 = arith.divf %105, %106 : vector<8x128xf32>
    %108 = arith.mulf %99, %76 : vector<8x128xf32>
    %109 = arith.mulf %93, %101 : vector<8x128xf32>
    %110 = arith.addf %108, %109 : vector<8x128xf32>
    %111 = math.tanh %110 : vector<8x128xf32>
    %112 = arith.mulf %107, %111 : vector<8x128xf32>
    %113 = arith.index_cast %c2_i32 : i32 to index
    %c0_38 = arith.constant 0 : index
    %c0_39 = arith.constant 0 : index
    %114 = vector.load %arg9[%113, %c0_38, %c0_39] : memref<8x8x128xf32, #tpu.memory_space<vmem>>, vector<1x8x128xf32>
    %115 = vector.shape_cast %114 : vector<1x8x128xf32> to vector<8x128xf32>
    %116 = vector.shape_cast %112 : vector<8x128xf32> to vector<1x8x128xf32>
    tpu.vector_store %arg9[%113, %c0_38, %c0_39], %116 {strides = array<i32>} : memref<8x8x128xf32, #tpu.memory_space<vmem>>, vector<1x8x128xf32>,
    %c3_i32 = arith.constant 3 : i32
    %117 = arith.index_cast %c3_i32 : i32 to index
    %c0_40 = arith.constant 0 : index
    %c0_41 = arith.constant 0 : index
    %118 = vector.load %arg8[%117, %c0_40, %c0_41] : memref<8x8x512xf32, #tpu.memory_space<vmem>>, vector<1x8x512xf32>
    %119 = vector.shape_cast %118 : vector<1x8x512xf32> to vector<8x512xf32>
    %cst_42 = arith.constant dense<0.000000e+00> : vector<8x512xf32>
    %120 = tpu.matmul %112, %12, %cst_42 {dimension_numbers = #tpu.dot_dimension_numbers<[1], [0], [0], [1], [0, 0, 1, 1], [], []>} : vector<8x128xf32>, vector<128x512xf32>, vector<8x512xf32> -> vector<8x512xf32>
    %121 = arith.addf %119, %120 : vector<8x512xf32>
    %122 = vector.extract_strided_slice %121 {offsets = [0, 0], sizes = [8, 128], strides = [1, 1]} : vector<8x512xf32> to vector<8x128xf32>
    %123 = arith.negf %122 : vector<8x128xf32>
    %124 = math.exp %123 : vector<8x128xf32>
    %cst_43 = arith.constant 1.000000e+00 : f32
    %125 = vector.broadcast %cst_43 : f32 to vector<8x128xf32>
    %126 = arith.addf %125, %124 : vector<8x128xf32>
    %127 = arith.divf %125, %126 : vector<8x128xf32>
    %128 = vector.extract_strided_slice %121 {offsets = [0, 128], sizes = [8, 128], strides = [1, 1]} : vector<8x512xf32> to vector<8x128xf32>
    %129 = arith.negf %128 : vector<8x128xf32>
    %130 = math.exp %129 : vector<8x128xf32>
    %cst_44 = arith.constant 1.000000e+00 : f32
    %131 = vector.broadcast %cst_44 : f32 to vector<8x128xf32>
    %132 = arith.addf %131, %130 : vector<8x128xf32>
    %133 = arith.divf %131, %132 : vector<8x128xf32>
    %134 = vector.extract_strided_slice %121 {offsets = [0, 256], sizes = [8, 128], strides = [1, 1]} : vector<8x512xf32> to vector<8x128xf32>
    %135 = math.tanh %134 : vector<8x128xf32>
    %136 = vector.extract_strided_slice %121 {offsets = [0, 384], sizes = [8, 128], strides = [1, 1]} : vector<8x512xf32> to vector<8x128xf32>
    %137 = arith.negf %136 : vector<8x128xf32>
    %138 = math.exp %137 : vector<8x128xf32>
    %cst_45 = arith.constant 1.000000e+00 : f32
    %139 = vector.broadcast %cst_45 : f32 to vector<8x128xf32>
    %140 = arith.addf %139, %138 : vector<8x128xf32>
    %141 = arith.divf %139, %140 : vector<8x128xf32>
    %142 = arith.mulf %133, %110 : vector<8x128xf32>
    %143 = arith.mulf %127, %135 : vector<8x128xf32>
    %144 = arith.addf %142, %143 : vector<8x128xf32>
    %145 = math.tanh %144 : vector<8x128xf32>
    %146 = arith.mulf %141, %145 : vector<8x128xf32>
    %147 = arith.index_cast %c3_i32 : i32 to index
    %c0_46 = arith.constant 0 : index
    %c0_47 = arith.constant 0 : index
    %148 = vector.load %arg9[%147, %c0_46, %c0_47] : memref<8x8x128xf32, #tpu.memory_space<vmem>>, vector<1x8x128xf32>
    %149 = vector.shape_cast %148 : vector<1x8x128xf32> to vector<8x128xf32>
    %150 = vector.shape_cast %146 : vector<8x128xf32> to vector<1x8x128xf32>
    tpu.vector_store %arg9[%147, %c0_46, %c0_47], %150 {strides = array<i32>} : memref<8x8x128xf32, #tpu.memory_space<vmem>>, vector<1x8x128xf32>,
    %c4_i32 = arith.constant 4 : i32
    %151 = arith.index_cast %c4_i32 : i32 to index
    %c0_48 = arith.constant 0 : index
    %c0_49 = arith.constant 0 : index
    %152 = vector.load %arg8[%151, %c0_48, %c0_49] : memref<8x8x512xf32, #tpu.memory_space<vmem>>, vector<1x8x512xf32>
    %153 = vector.shape_cast %152 : vector<1x8x512xf32> to vector<8x512xf32>
    %cst_50 = arith.constant dense<0.000000e+00> : vector<8x512xf32>
    %154 = tpu.matmul %146, %12, %cst_50 {dimension_numbers = #tpu.dot_dimension_numbers<[1], [0], [0], [1], [0, 0, 1, 1], [], []>} : vector<8x128xf32>, vector<128x512xf32>, vector<8x512xf32> -> vector<8x512xf32>
    %155 = arith.addf %153, %154 : vector<8x512xf32>
    %156 = vector.extract_strided_slice %155 {offsets = [0, 0], sizes = [8, 128], strides = [1, 1]} : vector<8x512xf32> to vector<8x128xf32>
    %157 = arith.negf %156 : vector<8x128xf32>
    %158 = math.exp %157 : vector<8x128xf32>
    %cst_51 = arith.constant 1.000000e+00 : f32
    %159 = vector.broadcast %cst_51 : f32 to vector<8x128xf32>
    %160 = arith.addf %159, %158 : vector<8x128xf32>
    %161 = arith.divf %159, %160 : vector<8x128xf32>
    %162 = vector.extract_strided_slice %155 {offsets = [0, 128], sizes = [8, 128], strides = [1, 1]} : vector<8x512xf32> to vector<8x128xf32>
    %163 = arith.negf %162 : vector<8x128xf32>
    %164 = math.exp %163 : vector<8x128xf32>
    %cst_52 = arith.constant 1.000000e+00 : f32
    %165 = vector.broadcast %cst_52 : f32 to vector<8x128xf32>
    %166 = arith.addf %165, %164 : vector<8x128xf32>
    %167 = arith.divf %165, %166 : vector<8x128xf32>
    %168 = vector.extract_strided_slice %155 {offsets = [0, 256], sizes = [8, 128], strides = [1, 1]} : vector<8x512xf32> to vector<8x128xf32>
    %169 = math.tanh %168 : vector<8x128xf32>
    %170 = vector.extract_strided_slice %155 {offsets = [0, 384], sizes = [8, 128], strides = [1, 1]} : vector<8x512xf32> to vector<8x128xf32>
    %171 = arith.negf %170 : vector<8x128xf32>
    %172 = math.exp %171 : vector<8x128xf32>
    %cst_53 = arith.constant 1.000000e+00 : f32
    %173 = vector.broadcast %cst_53 : f32 to vector<8x128xf32>
    %174 = arith.addf %173, %172 : vector<8x128xf32>
    %175 = arith.divf %173, %174 : vector<8x128xf32>
    %176 = arith.mulf %167, %144 : vector<8x128xf32>
    %177 = arith.mulf %161, %169 : vector<8x128xf32>
    %178 = arith.addf %176, %177 : vector<8x128xf32>
    %179 = math.tanh %178 : vector<8x128xf32>
    %180 = arith.mulf %175, %179 : vector<8x128xf32>
    %181 = arith.index_cast %c4_i32 : i32 to index
    %c0_54 = arith.constant 0 : index
    %c0_55 = arith.constant 0 : index
    %182 = vector.load %arg9[%181, %c0_54, %c0_55] : memref<8x8x128xf32, #tpu.memory_space<vmem>>, vector<1x8x128xf32>
    %183 = vector.shape_cast %182 : vector<1x8x128xf32> to vector<8x128xf32>
    %184 = vector.shape_cast %180 : vector<8x128xf32> to vector<1x8x128xf32>
    tpu.vector_store %arg9[%181, %c0_54, %c0_55], %184 {strides = array<i32>} : memref<8x8x128xf32, #tpu.memory_space<vmem>>, vector<1x8x128xf32>,
    %c5_i32 = arith.constant 5 : i32
    %185 = arith.index_cast %c5_i32 : i32 to index
    %c0_56 = arith.constant 0 : index
    %c0_57 = arith.constant 0 : index
    %186 = vector.load %arg8[%185, %c0_56, %c0_57] : memref<8x8x512xf32, #tpu.memory_space<vmem>>, vector<1x8x512xf32>
    %187 = vector.shape_cast %186 : vector<1x8x512xf32> to vector<8x512xf32>
    %cst_58 = arith.constant dense<0.000000e+00> : vector<8x512xf32>
    %188 = tpu.matmul %180, %12, %cst_58 {dimension_numbers = #tpu.dot_dimension_numbers<[1], [0], [0], [1], [0, 0, 1, 1], [], []>} : vector<8x128xf32>, vector<128x512xf32>, vector<8x512xf32> -> vector<8x512xf32>
    %189 = arith.addf %187, %188 : vector<8x512xf32>
    %190 = vector.extract_strided_slice %189 {offsets = [0, 0], sizes = [8, 128], strides = [1, 1]} : vector<8x512xf32> to vector<8x128xf32>
    %191 = arith.negf %190 : vector<8x128xf32>
    %192 = math.exp %191 : vector<8x128xf32>
    %cst_59 = arith.constant 1.000000e+00 : f32
    %193 = vector.broadcast %cst_59 : f32 to vector<8x128xf32>
    %194 = arith.addf %193, %192 : vector<8x128xf32>
    %195 = arith.divf %193, %194 : vector<8x128xf32>
    %196 = vector.extract_strided_slice %189 {offsets = [0, 128], sizes = [8, 128], strides = [1, 1]} : vector<8x512xf32> to vector<8x128xf32>
    %197 = arith.negf %196 : vector<8x128xf32>
    %198 = math.exp %197 : vector<8x128xf32>
    %cst_60 = arith.constant 1.000000e+00 : f32
    %199 = vector.broadcast %cst_60 : f32 to vector<8x128xf32>
    %200 = arith.addf %199, %198 : vector<8x128xf32>
    %201 = arith.divf %199, %200 : vector<8x128xf32>
    %202 = vector.extract_strided_slice %189 {offsets = [0, 256], sizes = [8, 128], strides = [1, 1]} : vector<8x512xf32> to vector<8x128xf32>
    %203 = math.tanh %202 : vector<8x128xf32>
    %204 = vector.extract_strided_slice %189 {offsets = [0, 384], sizes = [8, 128], strides = [1, 1]} : vector<8x512xf32> to vector<8x128xf32>
    %205 = arith.negf %204 : vector<8x128xf32>
    %206 = math.exp %205 : vector<8x128xf32>
    %cst_61 = arith.constant 1.000000e+00 : f32
    %207 = vector.broadcast %cst_61 : f32 to vector<8x128xf32>
    %208 = arith.addf %207, %206 : vector<8x128xf32>
    %209 = arith.divf %207, %208 : vector<8x128xf32>
    %210 = arith.mulf %201, %178 : vector<8x128xf32>
    %211 = arith.mulf %195, %203 : vector<8x128xf32>
    %212 = arith.addf %210, %211 : vector<8x128xf32>
    %213 = math.tanh %212 : vector<8x128xf32>
    %214 = arith.mulf %209, %213 : vector<8x128xf32>
    %215 = arith.index_cast %c5_i32 : i32 to index
    %c0_62 = arith.constant 0 : index
    %c0_63 = arith.constant 0 : index
    %216 = vector.load %arg9[%215, %c0_62, %c0_63] : memref<8x8x128xf32, #tpu.memory_space<vmem>>, vector<1x8x128xf32>
    %217 = vector.shape_cast %216 : vector<1x8x128xf32> to vector<8x128xf32>
    %218 = vector.shape_cast %214 : vector<8x128xf32> to vector<1x8x128xf32>
    tpu.vector_store %arg9[%215, %c0_62, %c0_63], %218 {strides = array<i32>} : memref<8x8x128xf32, #tpu.memory_space<vmem>>, vector<1x8x128xf32>,
    %c6_i32 = arith.constant 6 : i32
    %219 = arith.index_cast %c6_i32 : i32 to index
    %c0_64 = arith.constant 0 : index
    %c0_65 = arith.constant 0 : index
    %220 = vector.load %arg8[%219, %c0_64, %c0_65] : memref<8x8x512xf32, #tpu.memory_space<vmem>>, vector<1x8x512xf32>
    %221 = vector.shape_cast %220 : vector<1x8x512xf32> to vector<8x512xf32>
    %cst_66 = arith.constant dense<0.000000e+00> : vector<8x512xf32>
    %222 = tpu.matmul %214, %12, %cst_66 {dimension_numbers = #tpu.dot_dimension_numbers<[1], [0], [0], [1], [0, 0, 1, 1], [], []>} : vector<8x128xf32>, vector<128x512xf32>, vector<8x512xf32> -> vector<8x512xf32>
    %223 = arith.addf %221, %222 : vector<8x512xf32>
    %224 = vector.extract_strided_slice %223 {offsets = [0, 0], sizes = [8, 128], strides = [1, 1]} : vector<8x512xf32> to vector<8x128xf32>
    %225 = arith.negf %224 : vector<8x128xf32>
    %226 = math.exp %225 : vector<8x128xf32>
    %cst_67 = arith.constant 1.000000e+00 : f32
    %227 = vector.broadcast %cst_67 : f32 to vector<8x128xf32>
    %228 = arith.addf %227, %226 : vector<8x128xf32>
    %229 = arith.divf %227, %228 : vector<8x128xf32>
    %230 = vector.extract_strided_slice %223 {offsets = [0, 128], sizes = [8, 128], strides = [1, 1]} : vector<8x512xf32> to vector<8x128xf32>
    %231 = arith.negf %230 : vector<8x128xf32>
    %232 = math.exp %231 : vector<8x128xf32>
    %cst_68 = arith.constant 1.000000e+00 : f32
    %233 = vector.broadcast %cst_68 : f32 to vector<8x128xf32>
    %234 = arith.addf %233, %232 : vector<8x128xf32>
    %235 = arith.divf %233, %234 : vector<8x128xf32>
    %236 = vector.extract_strided_slice %223 {offsets = [0, 256], sizes = [8, 128], strides = [1, 1]} : vector<8x512xf32> to vector<8x128xf32>
    %237 = math.tanh %236 : vector<8x128xf32>
    %238 = vector.extract_strided_slice %223 {offsets = [0, 384], sizes = [8, 128], strides = [1, 1]} : vector<8x512xf32> to vector<8x128xf32>
    %239 = arith.negf %238 : vector<8x128xf32>
    %240 = math.exp %239 : vector<8x128xf32>
    %cst_69 = arith.constant 1.000000e+00 : f32
    %241 = vector.broadcast %cst_69 : f32 to vector<8x128xf32>
    %242 = arith.addf %241, %240 : vector<8x128xf32>
    %243 = arith.divf %241, %242 : vector<8x128xf32>
    %244 = arith.mulf %235, %212 : vector<8x128xf32>
    %245 = arith.mulf %229, %237 : vector<8x128xf32>
    %246 = arith.addf %244, %245 : vector<8x128xf32>
    %247 = math.tanh %246 : vector<8x128xf32>
    %248 = arith.mulf %243, %247 : vector<8x128xf32>
    %249 = arith.index_cast %c6_i32 : i32 to index
    %c0_70 = arith.constant 0 : index
    %c0_71 = arith.constant 0 : index
    %250 = vector.load %arg9[%249, %c0_70, %c0_71] : memref<8x8x128xf32, #tpu.memory_space<vmem>>, vector<1x8x128xf32>
    %251 = vector.shape_cast %250 : vector<1x8x128xf32> to vector<8x128xf32>
    %252 = vector.shape_cast %248 : vector<8x128xf32> to vector<1x8x128xf32>
    tpu.vector_store %arg9[%249, %c0_70, %c0_71], %252 {strides = array<i32>} : memref<8x8x128xf32, #tpu.memory_space<vmem>>, vector<1x8x128xf32>,
    %c7_i32 = arith.constant 7 : i32
    %253 = arith.index_cast %c7_i32 : i32 to index
    %c0_72 = arith.constant 0 : index
    %c0_73 = arith.constant 0 : index
    %254 = vector.load %arg8[%253, %c0_72, %c0_73] : memref<8x8x512xf32, #tpu.memory_space<vmem>>, vector<1x8x512xf32>
    %255 = vector.shape_cast %254 : vector<1x8x512xf32> to vector<8x512xf32>
    %cst_74 = arith.constant dense<0.000000e+00> : vector<8x512xf32>
    %256 = tpu.matmul %248, %12, %cst_74 {dimension_numbers = #tpu.dot_dimension_numbers<[1], [0], [0], [1], [0, 0, 1, 1], [], []>} : vector<8x128xf32>, vector<128x512xf32>, vector<8x512xf32> -> vector<8x512xf32>
    %257 = arith.addf %255, %256 : vector<8x512xf32>
    %258 = vector.extract_strided_slice %257 {offsets = [0, 0], sizes = [8, 128], strides = [1, 1]} : vector<8x512xf32> to vector<8x128xf32>
    %259 = arith.negf %258 : vector<8x128xf32>
    %260 = math.exp %259 : vector<8x128xf32>
    %cst_75 = arith.constant 1.000000e+00 : f32
    %261 = vector.broadcast %cst_75 : f32 to vector<8x128xf32>
    %262 = arith.addf %261, %260 : vector<8x128xf32>
    %263 = arith.divf %261, %262 : vector<8x128xf32>
    %264 = vector.extract_strided_slice %257 {offsets = [0, 128], sizes = [8, 128], strides = [1, 1]} : vector<8x512xf32> to vector<8x128xf32>
    %265 = arith.negf %264 : vector<8x128xf32>
    %266 = math.exp %265 : vector<8x128xf32>
    %cst_76 = arith.constant 1.000000e+00 : f32
    %267 = vector.broadcast %cst_76 : f32 to vector<8x128xf32>
    %268 = arith.addf %267, %266 : vector<8x128xf32>
    %269 = arith.divf %267, %268 : vector<8x128xf32>
    %270 = vector.extract_strided_slice %257 {offsets = [0, 256], sizes = [8, 128], strides = [1, 1]} : vector<8x512xf32> to vector<8x128xf32>
    %271 = math.tanh %270 : vector<8x128xf32>
    %272 = vector.extract_strided_slice %257 {offsets = [0, 384], sizes = [8, 128], strides = [1, 1]} : vector<8x512xf32> to vector<8x128xf32>
    %273 = arith.negf %272 : vector<8x128xf32>
    %274 = math.exp %273 : vector<8x128xf32>
    %cst_77 = arith.constant 1.000000e+00 : f32
    %275 = vector.broadcast %cst_77 : f32 to vector<8x128xf32>
    %276 = arith.addf %275, %274 : vector<8x128xf32>
    %277 = arith.divf %275, %276 : vector<8x128xf32>
    %278 = arith.mulf %269, %246 : vector<8x128xf32>
    %279 = arith.mulf %263, %271 : vector<8x128xf32>
    %280 = arith.addf %278, %279 : vector<8x128xf32>
    %281 = math.tanh %280 : vector<8x128xf32>
    %282 = arith.mulf %277, %281 : vector<8x128xf32>
    %283 = arith.index_cast %c7_i32 : i32 to index
    %c0_78 = arith.constant 0 : index
    %c0_79 = arith.constant 0 : index
    %284 = vector.load %arg9[%283, %c0_78, %c0_79] : memref<8x8x128xf32, #tpu.memory_space<vmem>>, vector<1x8x128xf32>
    %285 = vector.shape_cast %284 : vector<1x8x128xf32> to vector<8x128xf32>
    %286 = vector.shape_cast %282 : vector<8x128xf32> to vector<1x8x128xf32>
    tpu.vector_store %arg9[%283, %c0_78, %c0_79], %286 {strides = array<i32>} : memref<8x8x128xf32, #tpu.memory_space<vmem>>, vector<1x8x128xf32>,
    %c8_i32 = arith.constant 8 : i32
    %c0_80 = arith.constant 0 : index
    %c0_81 = arith.constant 0 : index
    %c0_82 = arith.constant 0 : index
    %287 = vector.load %arg9[%c0_80, %c0_81, %c0_82] : memref<8x8x128xf32, #tpu.memory_space<vmem>>, vector<8x8x128xf32>
    %288 = vector.shape_cast %287 : vector<8x8x128xf32> to vector<64x128xf32>
    %c1 = arith.constant 1 : index
    %c0_83 = arith.constant 0 : index
    %c0_84 = arith.constant 0 : index
    %289 = vector.load %arg2[%c1, %c0_83, %c0_84] : memref<2x128x512xf32, #tpu.memory_space<vmem>>, vector<1x128x512xf32>
    %290 = vector.shape_cast %289 : vector<1x128x512xf32> to vector<128x512xf32>
    %cst_85 = arith.constant dense<0.000000e+00> : vector<64x512xf32>
    %291 = tpu.matmul %288, %290, %cst_85 {dimension_numbers = #tpu.dot_dimension_numbers<[1], [0], [0], [1], [0, 0, 1, 1], [], []>} : vector<64x128xf32>, vector<128x512xf32>, vector<64x512xf32> -> vector<64x512xf32>
    %c1_86 = arith.constant 1 : index
    %c0_87 = arith.constant 0 : index
    %c0_88 = arith.constant 0 : index
    %292 = vector.load %arg4[%c1_86, %c0_87, %c0_88] : memref<2x1x512xf32, #tpu.memory_space<vmem>>, vector<1x1x512xf32>
    %293 = vector.shape_cast %292 : vector<1x1x512xf32> to vector<1x512xf32>
    %294 = vector.broadcast %293 : vector<1x512xf32> to vector<64x512xf32>
    %295 = arith.addf %291, %294 : vector<64x512xf32>
    %296 = vector.shape_cast %295 : vector<64x512xf32> to vector<8x8x512xf32>
    %c0_89 = arith.constant 0 : index
    %c0_90 = arith.constant 0 : index
    %c0_91 = arith.constant 0 : index
    %297 = vector.load %arg8[%c0_89, %c0_90, %c0_91] : memref<8x8x512xf32, #tpu.memory_space<vmem>>, vector<8x8x512xf32>
    tpu.vector_store %arg8[%c0_89, %c0_90, %c0_91], %296 {strides = array<i32>} : memref<8x8x512xf32, #tpu.memory_space<vmem>>, vector<8x8x512xf32>,
    %c1_92 = arith.constant 1 : index
    %c0_93 = arith.constant 0 : index
    %c0_94 = arith.constant 0 : index
    %298 = vector.load %arg3[%c1_92, %c0_93, %c0_94] : memref<2x128x512xf32, #tpu.memory_space<vmem>>, vector<1x128x512xf32>
    %299 = vector.shape_cast %298 : vector<1x128x512xf32> to vector<128x512xf32>
    %cst_95 = arith.constant 0.000000e+00 : f32
    %300 = vector.broadcast %cst_95 : f32 to vector<8x128xf32>
    %cst_96 = arith.constant 0.000000e+00 : f32
    %301 = vector.broadcast %cst_96 : f32 to vector<8x128xf32>
    %c0_i32_97 = arith.constant 0 : i32
    %302 = arith.index_cast %c0_i32_97 : i32 to index
    %c0_98 = arith.constant 0 : index
    %c0_99 = arith.constant 0 : index
    %303 = vector.load %arg8[%302, %c0_98, %c0_99] : memref<8x8x512xf32, #tpu.memory_space<vmem>>, vector<1x8x512xf32>
    %304 = vector.shape_cast %303 : vector<1x8x512xf32> to vector<8x512xf32>
    %cst_100 = arith.constant dense<0.000000e+00> : vector<8x512xf32>
    %305 = tpu.matmul %300, %299, %cst_100 {dimension_numbers = #tpu.dot_dimension_numbers<[1], [0], [0], [1], [0, 0, 1, 1], [], []>} : vector<8x128xf32>, vector<128x512xf32>, vector<8x512xf32> -> vector<8x512xf32>
    %306 = arith.addf %304, %305 : vector<8x512xf32>
    %307 = vector.extract_strided_slice %306 {offsets = [0, 0], sizes = [8, 128], strides = [1, 1]} : vector<8x512xf32> to vector<8x128xf32>
    %308 = arith.negf %307 : vector<8x128xf32>
    %309 = math.exp %308 : vector<8x128xf32>
    %cst_101 = arith.constant 1.000000e+00 : f32
    %310 = vector.broadcast %cst_101 : f32 to vector<8x128xf32>
    %311 = arith.addf %310, %309 : vector<8x128xf32>
    %312 = arith.divf %310, %311 : vector<8x128xf32>
    %313 = vector.extract_strided_slice %306 {offsets = [0, 128], sizes = [8, 128], strides = [1, 1]} : vector<8x512xf32> to vector<8x128xf32>
    %314 = arith.negf %313 : vector<8x128xf32>
    %315 = math.exp %314 : vector<8x128xf32>
    %cst_102 = arith.constant 1.000000e+00 : f32
    %316 = vector.broadcast %cst_102 : f32 to vector<8x128xf32>
    %317 = arith.addf %316, %315 : vector<8x128xf32>
    %318 = arith.divf %316, %317 : vector<8x128xf32>
    %319 = vector.extract_strided_slice %306 {offsets = [0, 256], sizes = [8, 128], strides = [1, 1]} : vector<8x512xf32> to vector<8x128xf32>
    %320 = math.tanh %319 : vector<8x128xf32>
    %321 = vector.extract_strided_slice %306 {offsets = [0, 384], sizes = [8, 128], strides = [1, 1]} : vector<8x512xf32> to vector<8x128xf32>
    %322 = arith.negf %321 : vector<8x128xf32>
    %323 = math.exp %322 : vector<8x128xf32>
    %cst_103 = arith.constant 1.000000e+00 : f32
    %324 = vector.broadcast %cst_103 : f32 to vector<8x128xf32>
    %325 = arith.addf %324, %323 : vector<8x128xf32>
    %326 = arith.divf %324, %325 : vector<8x128xf32>
    %327 = arith.mulf %318, %301 : vector<8x128xf32>
    %328 = arith.mulf %312, %320 : vector<8x128xf32>
    %329 = arith.addf %327, %328 : vector<8x128xf32>
    %330 = math.tanh %329 : vector<8x128xf32>
    %331 = arith.mulf %326, %330 : vector<8x128xf32>
    %c1_i32_104 = arith.constant 1 : i32
    %332 = arith.index_cast %c1_i32_104 : i32 to index
    %c0_105 = arith.constant 0 : index
    %c0_106 = arith.constant 0 : index
    %333 = vector.load %arg8[%332, %c0_105, %c0_106] : memref<8x8x512xf32, #tpu.memory_space<vmem>>, vector<1x8x512xf32>
    %334 = vector.shape_cast %333 : vector<1x8x512xf32> to vector<8x512xf32>
    %cst_107 = arith.constant dense<0.000000e+00> : vector<8x512xf32>
    %335 = tpu.matmul %331, %299, %cst_107 {dimension_numbers = #tpu.dot_dimension_numbers<[1], [0], [0], [1], [0, 0, 1, 1], [], []>} : vector<8x128xf32>, vector<128x512xf32>, vector<8x512xf32> -> vector<8x512xf32>
    %336 = arith.addf %334, %335 : vector<8x512xf32>
    %337 = vector.extract_strided_slice %336 {offsets = [0, 0], sizes = [8, 128], strides = [1, 1]} : vector<8x512xf32> to vector<8x128xf32>
    %338 = arith.negf %337 : vector<8x128xf32>
    %339 = math.exp %338 : vector<8x128xf32>
    %cst_108 = arith.constant 1.000000e+00 : f32
    %340 = vector.broadcast %cst_108 : f32 to vector<8x128xf32>
    %341 = arith.addf %340, %339 : vector<8x128xf32>
    %342 = arith.divf %340, %341 : vector<8x128xf32>
    %343 = vector.extract_strided_slice %336 {offsets = [0, 128], sizes = [8, 128], strides = [1, 1]} : vector<8x512xf32> to vector<8x128xf32>
    %344 = arith.negf %343 : vector<8x128xf32>
    %345 = math.exp %344 : vector<8x128xf32>
    %cst_109 = arith.constant 1.000000e+00 : f32
    %346 = vector.broadcast %cst_109 : f32 to vector<8x128xf32>
    %347 = arith.addf %346, %345 : vector<8x128xf32>
    %348 = arith.divf %346, %347 : vector<8x128xf32>
    %349 = vector.extract_strided_slice %336 {offsets = [0, 256], sizes = [8, 128], strides = [1, 1]} : vector<8x512xf32> to vector<8x128xf32>
    %350 = math.tanh %349 : vector<8x128xf32>
    %351 = vector.extract_strided_slice %336 {offsets = [0, 384], sizes = [8, 128], strides = [1, 1]} : vector<8x512xf32> to vector<8x128xf32>
    %352 = arith.negf %351 : vector<8x128xf32>
    %353 = math.exp %352 : vector<8x128xf32>
    %cst_110 = arith.constant 1.000000e+00 : f32
    %354 = vector.broadcast %cst_110 : f32 to vector<8x128xf32>
    %355 = arith.addf %354, %353 : vector<8x128xf32>
    %356 = arith.divf %354, %355 : vector<8x128xf32>
    %357 = arith.mulf %348, %329 : vector<8x128xf32>
    %358 = arith.mulf %342, %350 : vector<8x128xf32>
    %359 = arith.addf %357, %358 : vector<8x128xf32>
    %360 = math.tanh %359 : vector<8x128xf32>
    %361 = arith.mulf %356, %360 : vector<8x128xf32>
    %c2_i32_111 = arith.constant 2 : i32
    %362 = arith.index_cast %c2_i32_111 : i32 to index
    %c0_112 = arith.constant 0 : index
    %c0_113 = arith.constant 0 : index
    %363 = vector.load %arg8[%362, %c0_112, %c0_113] : memref<8x8x512xf32, #tpu.memory_space<vmem>>, vector<1x8x512xf32>
    %364 = vector.shape_cast %363 : vector<1x8x512xf32> to vector<8x512xf32>
    %cst_114 = arith.constant dense<0.000000e+00> : vector<8x512xf32>
    %365 = tpu.matmul %361, %299, %cst_114 {dimension_numbers = #tpu.dot_dimension_numbers<[1], [0], [0], [1], [0, 0, 1, 1], [], []>} : vector<8x128xf32>, vector<128x512xf32>, vector<8x512xf32> -> vector<8x512xf32>
    %366 = arith.addf %364, %365 : vector<8x512xf32>
    %367 = vector.extract_strided_slice %366 {offsets = [0, 0], sizes = [8, 128], strides = [1, 1]} : vector<8x512xf32> to vector<8x128xf32>
    %368 = arith.negf %367 : vector<8x128xf32>
    %369 = math.exp %368 : vector<8x128xf32>
    %cst_115 = arith.constant 1.000000e+00 : f32
    %370 = vector.broadcast %cst_115 : f32 to vector<8x128xf32>
    %371 = arith.addf %370, %369 : vector<8x128xf32>
    %372 = arith.divf %370, %371 : vector<8x128xf32>
    %373 = vector.extract_strided_slice %366 {offsets = [0, 128], sizes = [8, 128], strides = [1, 1]} : vector<8x512xf32> to vector<8x128xf32>
    %374 = arith.negf %373 : vector<8x128xf32>
    %375 = math.exp %374 : vector<8x128xf32>
    %cst_116 = arith.constant 1.000000e+00 : f32
    %376 = vector.broadcast %cst_116 : f32 to vector<8x128xf32>
    %377 = arith.addf %376, %375 : vector<8x128xf32>
    %378 = arith.divf %376, %377 : vector<8x128xf32>
    %379 = vector.extract_strided_slice %366 {offsets = [0, 256], sizes = [8, 128], strides = [1, 1]} : vector<8x512xf32> to vector<8x128xf32>
    %380 = math.tanh %379 : vector<8x128xf32>
    %381 = vector.extract_strided_slice %366 {offsets = [0, 384], sizes = [8, 128], strides = [1, 1]} : vector<8x512xf32> to vector<8x128xf32>
    %382 = arith.negf %381 : vector<8x128xf32>
    %383 = math.exp %382 : vector<8x128xf32>
    %cst_117 = arith.constant 1.000000e+00 : f32
    %384 = vector.broadcast %cst_117 : f32 to vector<8x128xf32>
    %385 = arith.addf %384, %383 : vector<8x128xf32>
    %386 = arith.divf %384, %385 : vector<8x128xf32>
    %387 = arith.mulf %378, %359 : vector<8x128xf32>
    %388 = arith.mulf %372, %380 : vector<8x128xf32>
    %389 = arith.addf %387, %388 : vector<8x128xf32>
    %390 = math.tanh %389 : vector<8x128xf32>
    %391 = arith.mulf %386, %390 : vector<8x128xf32>
    %c3_i32_118 = arith.constant 3 : i32
    %392 = arith.index_cast %c3_i32_118 : i32 to index
    %c0_119 = arith.constant 0 : index
    %c0_120 = arith.constant 0 : index
    %393 = vector.load %arg8[%392, %c0_119, %c0_120] : memref<8x8x512xf32, #tpu.memory_space<vmem>>, vector<1x8x512xf32>
    %394 = vector.shape_cast %393 : vector<1x8x512xf32> to vector<8x512xf32>
    %cst_121 = arith.constant dense<0.000000e+00> : vector<8x512xf32>
    %395 = tpu.matmul %391, %299, %cst_121 {dimension_numbers = #tpu.dot_dimension_numbers<[1], [0], [0], [1], [0, 0, 1, 1], [], []>} : vector<8x128xf32>, vector<128x512xf32>, vector<8x512xf32> -> vector<8x512xf32>
    %396 = arith.addf %394, %395 : vector<8x512xf32>
    %397 = vector.extract_strided_slice %396 {offsets = [0, 0], sizes = [8, 128], strides = [1, 1]} : vector<8x512xf32> to vector<8x128xf32>
    %398 = arith.negf %397 : vector<8x128xf32>
    %399 = math.exp %398 : vector<8x128xf32>
    %cst_122 = arith.constant 1.000000e+00 : f32
    %400 = vector.broadcast %cst_122 : f32 to vector<8x128xf32>
    %401 = arith.addf %400, %399 : vector<8x128xf32>
    %402 = arith.divf %400, %401 : vector<8x128xf32>
    %403 = vector.extract_strided_slice %396 {offsets = [0, 128], sizes = [8, 128], strides = [1, 1]} : vector<8x512xf32> to vector<8x128xf32>
    %404 = arith.negf %403 : vector<8x128xf32>
    %405 = math.exp %404 : vector<8x128xf32>
    %cst_123 = arith.constant 1.000000e+00 : f32
    %406 = vector.broadcast %cst_123 : f32 to vector<8x128xf32>
    %407 = arith.addf %406, %405 : vector<8x128xf32>
    %408 = arith.divf %406, %407 : vector<8x128xf32>
    %409 = vector.extract_strided_slice %396 {offsets = [0, 256], sizes = [8, 128], strides = [1, 1]} : vector<8x512xf32> to vector<8x128xf32>
    %410 = math.tanh %409 : vector<8x128xf32>
    %411 = vector.extract_strided_slice %396 {offsets = [0, 384], sizes = [8, 128], strides = [1, 1]} : vector<8x512xf32> to vector<8x128xf32>
    %412 = arith.negf %411 : vector<8x128xf32>
    %413 = math.exp %412 : vector<8x128xf32>
    %cst_124 = arith.constant 1.000000e+00 : f32
    %414 = vector.broadcast %cst_124 : f32 to vector<8x128xf32>
    %415 = arith.addf %414, %413 : vector<8x128xf32>
    %416 = arith.divf %414, %415 : vector<8x128xf32>
    %417 = arith.mulf %408, %389 : vector<8x128xf32>
    %418 = arith.mulf %402, %410 : vector<8x128xf32>
    %419 = arith.addf %417, %418 : vector<8x128xf32>
    %420 = math.tanh %419 : vector<8x128xf32>
    %421 = arith.mulf %416, %420 : vector<8x128xf32>
    %c4_i32_125 = arith.constant 4 : i32
    %422 = arith.index_cast %c4_i32_125 : i32 to index
    %c0_126 = arith.constant 0 : index
    %c0_127 = arith.constant 0 : index
    %423 = vector.load %arg8[%422, %c0_126, %c0_127] : memref<8x8x512xf32, #tpu.memory_space<vmem>>, vector<1x8x512xf32>
    %424 = vector.shape_cast %423 : vector<1x8x512xf32> to vector<8x512xf32>
    %cst_128 = arith.constant dense<0.000000e+00> : vector<8x512xf32>
    %425 = tpu.matmul %421, %299, %cst_128 {dimension_numbers = #tpu.dot_dimension_numbers<[1], [0], [0], [1], [0, 0, 1, 1], [], []>} : vector<8x128xf32>, vector<128x512xf32>, vector<8x512xf32> -> vector<8x512xf32>
    %426 = arith.addf %424, %425 : vector<8x512xf32>
    %427 = vector.extract_strided_slice %426 {offsets = [0, 0], sizes = [8, 128], strides = [1, 1]} : vector<8x512xf32> to vector<8x128xf32>
    %428 = arith.negf %427 : vector<8x128xf32>
    %429 = math.exp %428 : vector<8x128xf32>
    %cst_129 = arith.constant 1.000000e+00 : f32
    %430 = vector.broadcast %cst_129 : f32 to vector<8x128xf32>
    %431 = arith.addf %430, %429 : vector<8x128xf32>
    %432 = arith.divf %430, %431 : vector<8x128xf32>
    %433 = vector.extract_strided_slice %426 {offsets = [0, 128], sizes = [8, 128], strides = [1, 1]} : vector<8x512xf32> to vector<8x128xf32>
    %434 = arith.negf %433 : vector<8x128xf32>
    %435 = math.exp %434 : vector<8x128xf32>
    %cst_130 = arith.constant 1.000000e+00 : f32
    %436 = vector.broadcast %cst_130 : f32 to vector<8x128xf32>
    %437 = arith.addf %436, %435 : vector<8x128xf32>
    %438 = arith.divf %436, %437 : vector<8x128xf32>
    %439 = vector.extract_strided_slice %426 {offsets = [0, 256], sizes = [8, 128], strides = [1, 1]} : vector<8x512xf32> to vector<8x128xf32>
    %440 = math.tanh %439 : vector<8x128xf32>
    %441 = vector.extract_strided_slice %426 {offsets = [0, 384], sizes = [8, 128], strides = [1, 1]} : vector<8x512xf32> to vector<8x128xf32>
    %442 = arith.negf %441 : vector<8x128xf32>
    %443 = math.exp %442 : vector<8x128xf32>
    %cst_131 = arith.constant 1.000000e+00 : f32
    %444 = vector.broadcast %cst_131 : f32 to vector<8x128xf32>
    %445 = arith.addf %444, %443 : vector<8x128xf32>
    %446 = arith.divf %444, %445 : vector<8x128xf32>
    %447 = arith.mulf %438, %419 : vector<8x128xf32>
    %448 = arith.mulf %432, %440 : vector<8x128xf32>
    %449 = arith.addf %447, %448 : vector<8x128xf32>
    %450 = math.tanh %449 : vector<8x128xf32>
    %451 = arith.mulf %446, %450 : vector<8x128xf32>
    %c5_i32_132 = arith.constant 5 : i32
    %452 = arith.index_cast %c5_i32_132 : i32 to index
    %c0_133 = arith.constant 0 : index
    %c0_134 = arith.constant 0 : index
    %453 = vector.load %arg8[%452, %c0_133, %c0_134] : memref<8x8x512xf32, #tpu.memory_space<vmem>>, vector<1x8x512xf32>
    %454 = vector.shape_cast %453 : vector<1x8x512xf32> to vector<8x512xf32>
    %cst_135 = arith.constant dense<0.000000e+00> : vector<8x512xf32>
    %455 = tpu.matmul %451, %299, %cst_135 {dimension_numbers = #tpu.dot_dimension_numbers<[1], [0], [0], [1], [0, 0, 1, 1], [], []>} : vector<8x128xf32>, vector<128x512xf32>, vector<8x512xf32> -> vector<8x512xf32>
    %456 = arith.addf %454, %455 : vector<8x512xf32>
    %457 = vector.extract_strided_slice %456 {offsets = [0, 0], sizes = [8, 128], strides = [1, 1]} : vector<8x512xf32> to vector<8x128xf32>
    %458 = arith.negf %457 : vector<8x128xf32>
    %459 = math.exp %458 : vector<8x128xf32>
    %cst_136 = arith.constant 1.000000e+00 : f32
    %460 = vector.broadcast %cst_136 : f32 to vector<8x128xf32>
    %461 = arith.addf %460, %459 : vector<8x128xf32>
    %462 = arith.divf %460, %461 : vector<8x128xf32>
    %463 = vector.extract_strided_slice %456 {offsets = [0, 128], sizes = [8, 128], strides = [1, 1]} : vector<8x512xf32> to vector<8x128xf32>
    %464 = arith.negf %463 : vector<8x128xf32>
    %465 = math.exp %464 : vector<8x128xf32>
    %cst_137 = arith.constant 1.000000e+00 : f32
    %466 = vector.broadcast %cst_137 : f32 to vector<8x128xf32>
    %467 = arith.addf %466, %465 : vector<8x128xf32>
    %468 = arith.divf %466, %467 : vector<8x128xf32>
    %469 = vector.extract_strided_slice %456 {offsets = [0, 256], sizes = [8, 128], strides = [1, 1]} : vector<8x512xf32> to vector<8x128xf32>
    %470 = math.tanh %469 : vector<8x128xf32>
    %471 = vector.extract_strided_slice %456 {offsets = [0, 384], sizes = [8, 128], strides = [1, 1]} : vector<8x512xf32> to vector<8x128xf32>
    %472 = arith.negf %471 : vector<8x128xf32>
    %473 = math.exp %472 : vector<8x128xf32>
    %cst_138 = arith.constant 1.000000e+00 : f32
    %474 = vector.broadcast %cst_138 : f32 to vector<8x128xf32>
    %475 = arith.addf %474, %473 : vector<8x128xf32>
    %476 = arith.divf %474, %475 : vector<8x128xf32>
    %477 = arith.mulf %468, %449 : vector<8x128xf32>
    %478 = arith.mulf %462, %470 : vector<8x128xf32>
    %479 = arith.addf %477, %478 : vector<8x128xf32>
    %480 = math.tanh %479 : vector<8x128xf32>
    %481 = arith.mulf %476, %480 : vector<8x128xf32>
    %c6_i32_139 = arith.constant 6 : i32
    %482 = arith.index_cast %c6_i32_139 : i32 to index
    %c0_140 = arith.constant 0 : index
    %c0_141 = arith.constant 0 : index
    %483 = vector.load %arg8[%482, %c0_140, %c0_141] : memref<8x8x512xf32, #tpu.memory_space<vmem>>, vector<1x8x512xf32>
    %484 = vector.shape_cast %483 : vector<1x8x512xf32> to vector<8x512xf32>
    %cst_142 = arith.constant dense<0.000000e+00> : vector<8x512xf32>
    %485 = tpu.matmul %481, %299, %cst_142 {dimension_numbers = #tpu.dot_dimension_numbers<[1], [0], [0], [1], [0, 0, 1, 1], [], []>} : vector<8x128xf32>, vector<128x512xf32>, vector<8x512xf32> -> vector<8x512xf32>
    %486 = arith.addf %484, %485 : vector<8x512xf32>
    %487 = vector.extract_strided_slice %486 {offsets = [0, 0], sizes = [8, 128], strides = [1, 1]} : vector<8x512xf32> to vector<8x128xf32>
    %488 = arith.negf %487 : vector<8x128xf32>
    %489 = math.exp %488 : vector<8x128xf32>
    %cst_143 = arith.constant 1.000000e+00 : f32
    %490 = vector.broadcast %cst_143 : f32 to vector<8x128xf32>
    %491 = arith.addf %490, %489 : vector<8x128xf32>
    %492 = arith.divf %490, %491 : vector<8x128xf32>
    %493 = vector.extract_strided_slice %486 {offsets = [0, 128], sizes = [8, 128], strides = [1, 1]} : vector<8x512xf32> to vector<8x128xf32>
    %494 = arith.negf %493 : vector<8x128xf32>
    %495 = math.exp %494 : vector<8x128xf32>
    %cst_144 = arith.constant 1.000000e+00 : f32
    %496 = vector.broadcast %cst_144 : f32 to vector<8x128xf32>
    %497 = arith.addf %496, %495 : vector<8x128xf32>
    %498 = arith.divf %496, %497 : vector<8x128xf32>
    %499 = vector.extract_strided_slice %486 {offsets = [0, 256], sizes = [8, 128], strides = [1, 1]} : vector<8x512xf32> to vector<8x128xf32>
    %500 = math.tanh %499 : vector<8x128xf32>
    %501 = vector.extract_strided_slice %486 {offsets = [0, 384], sizes = [8, 128], strides = [1, 1]} : vector<8x512xf32> to vector<8x128xf32>
    %502 = arith.negf %501 : vector<8x128xf32>
    %503 = math.exp %502 : vector<8x128xf32>
    %cst_145 = arith.constant 1.000000e+00 : f32
    %504 = vector.broadcast %cst_145 : f32 to vector<8x128xf32>
    %505 = arith.addf %504, %503 : vector<8x128xf32>
    %506 = arith.divf %504, %505 : vector<8x128xf32>
    %507 = arith.mulf %498, %479 : vector<8x128xf32>
    %508 = arith.mulf %492, %500 : vector<8x128xf32>
    %509 = arith.addf %507, %508 : vector<8x128xf32>
    %510 = math.tanh %509 : vector<8x128xf32>
    %511 = arith.mulf %506, %510 : vector<8x128xf32>
    %c7_i32_146 = arith.constant 7 : i32
    %512 = arith.index_cast %c7_i32_146 : i32 to index
    %c0_147 = arith.constant 0 : index
    %c0_148 = arith.constant 0 : index
    %513 = vector.load %arg8[%512, %c0_147, %c0_148] : memref<8x8x512xf32, #tpu.memory_space<vmem>>, vector<1x8x512xf32>
    %514 = vector.shape_cast %513 : vector<1x8x512xf32> to vector<8x512xf32>
    %cst_149 = arith.constant dense<0.000000e+00> : vector<8x512xf32>
    %515 = tpu.matmul %511, %299, %cst_149 {dimension_numbers = #tpu.dot_dimension_numbers<[1], [0], [0], [1], [0, 0, 1, 1], [], []>} : vector<8x128xf32>, vector<128x512xf32>, vector<8x512xf32> -> vector<8x512xf32>
    %516 = arith.addf %514, %515 : vector<8x512xf32>
    %517 = vector.extract_strided_slice %516 {offsets = [0, 0], sizes = [8, 128], strides = [1, 1]} : vector<8x512xf32> to vector<8x128xf32>
    %518 = arith.negf %517 : vector<8x128xf32>
    %519 = math.exp %518 : vector<8x128xf32>
    %cst_150 = arith.constant 1.000000e+00 : f32
    %520 = vector.broadcast %cst_150 : f32 to vector<8x128xf32>
    %521 = arith.addf %520, %519 : vector<8x128xf32>
    %522 = arith.divf %520, %521 : vector<8x128xf32>
    %523 = vector.extract_strided_slice %516 {offsets = [0, 128], sizes = [8, 128], strides = [1, 1]} : vector<8x512xf32> to vector<8x128xf32>
    %524 = arith.negf %523 : vector<8x128xf32>
    %525 = math.exp %524 : vector<8x128xf32>
    %cst_151 = arith.constant 1.000000e+00 : f32
    %526 = vector.broadcast %cst_151 : f32 to vector<8x128xf32>
    %527 = arith.addf %526, %525 : vector<8x128xf32>
    %528 = arith.divf %526, %527 : vector<8x128xf32>
    %529 = vector.extract_strided_slice %516 {offsets = [0, 256], sizes = [8, 128], strides = [1, 1]} : vector<8x512xf32> to vector<8x128xf32>
    %530 = math.tanh %529 : vector<8x128xf32>
    %531 = vector.extract_strided_slice %516 {offsets = [0, 384], sizes = [8, 128], strides = [1, 1]} : vector<8x512xf32> to vector<8x128xf32>
    %532 = arith.negf %531 : vector<8x128xf32>
    %533 = math.exp %532 : vector<8x128xf32>
    %cst_152 = arith.constant 1.000000e+00 : f32
    %534 = vector.broadcast %cst_152 : f32 to vector<8x128xf32>
    %535 = arith.addf %534, %533 : vector<8x128xf32>
    %536 = arith.divf %534, %535 : vector<8x128xf32>
    %537 = arith.mulf %528, %509 : vector<8x128xf32>
    %538 = arith.mulf %522, %530 : vector<8x128xf32>
    %539 = arith.addf %537, %538 : vector<8x128xf32>
    %540 = math.tanh %539 : vector<8x128xf32>
    %541 = arith.mulf %536, %540 : vector<8x128xf32>
    %c8_i32_153 = arith.constant 8 : i32
    %c0_154 = arith.constant 0 : index
    %c0_155 = arith.constant 0 : index
    %542 = vector.load %arg5[%c0_154, %c0_155] : memref<128x128xf32, #tpu.memory_space<vmem>>, vector<128x128xf32>
    %cst_156 = arith.constant dense<0.000000e+00> : vector<8x128xf32>
    %543 = tpu.matmul %541, %542, %cst_156 {dimension_numbers = #tpu.dot_dimension_numbers<[1], [0], [0], [1], [0, 0, 1, 1], [], []>} : vector<8x128xf32>, vector<128x128xf32>, vector<8x128xf32> -> vector<8x128xf32>
    %c0_157 = arith.constant 0 : index
    %c0_158 = arith.constant 0 : index
    %544 = vector.load %arg6[%c0_157, %c0_158] : memref<1x128xf32, #tpu.memory_space<vmem>>, vector<1x128xf32>
    %545 = vector.broadcast %544 : vector<1x128xf32> to vector<8x128xf32>
    %546 = arith.addf %543, %545 : vector<8x128xf32>
    %c0_159 = arith.constant 0 : index
    %c0_160 = arith.constant 0 : index
    %547 = vector.load %arg7[%c0_159, %c0_160] : memref<8x128xf32, #tpu.memory_space<vmem>>, vector<8x128xf32>
    tpu.vector_store %arg7[%c0_159, %c0_160], %546 {strides = array<i32>} : memref<8x128xf32, #tpu.memory_space<vmem>>, vector<8x128xf32>,
    return
  }
  func.func @transform_0(%arg0: i32) -> (i32, i32, i32) {
    %c0_i32 = arith.constant 0 : i32
    %c0_i32_0 = arith.constant 0 : i32
    %c0_i32_1 = arith.constant 0 : i32
    return %c0_i32, %arg0, %c0_i32_0 : i32, i32, i32
  }
  func.func @transform_1(%arg0: i32) -> (i32, i32, i32) {
    %c0_i32 = arith.constant 0 : i32
    %c0_i32_0 = arith.constant 0 : i32
    %c0_i32_1 = arith.constant 0 : i32
    %c0_i32_2 = arith.constant 0 : i32
    return %c0_i32, %c0_i32_0, %c0_i32_1 : i32, i32, i32
  }
  func.func @transform_2(%arg0: i32) -> (i32, i32, i32) {
    %c0_i32 = arith.constant 0 : i32
    %c0_i32_0 = arith.constant 0 : i32
    %c0_i32_1 = arith.constant 0 : i32
    %c0_i32_2 = arith.constant 0 : i32
    return %c0_i32, %c0_i32_0, %c0_i32_1 : i32, i32, i32
  }
  func.func @transform_3(%arg0: i32) -> (i32, i32, i32) {
    %c0_i32 = arith.constant 0 : i32
    %c0_i32_0 = arith.constant 0 : i32
    %c0_i32_1 = arith.constant 0 : i32
    %c0_i32_2 = arith.constant 0 : i32
    return %c0_i32, %c0_i32_0, %c0_i32_1 : i32, i32, i32
  }
  func.func @transform_4(%arg0: i32) -> (i32, i32) {
    %c0_i32 = arith.constant 0 : i32
    %c0_i32_0 = arith.constant 0 : i32
    %c0_i32_1 = arith.constant 0 : i32
    return %c0_i32, %c0_i32_0 : i32, i32
  }
  func.func @transform_5(%arg0: i32) -> (i32, i32) {
    %c0_i32 = arith.constant 0 : i32
    %c0_i32_0 = arith.constant 0 : i32
    %c0_i32_1 = arith.constant 0 : i32
    return %c0_i32, %c0_i32_0 : i32, i32
  }
  func.func @transform_6(%arg0: i32) -> (i32, i32) {
    %c0_i32 = arith.constant 0 : i32
    %c0_i32_0 = arith.constant 0 : i32
    return %arg0, %c0_i32 : i32, i32
  }
}

</mosaic_0001>

<llo_original>
// kernel: tpu_custom_call.1
$region0: #{tpu_custom_call.1}
  #allocation0 [shape = 'u32[]', space=smem, size = 0x4, offset = 0x4, fixed_abs, tag = 'smem constant byte address 0x4 - core index']
  #allocation1 [shape = 'u32[144,128]{1,0:T(1,128)}', space=vmem, size = 0x12000, scoped, tag = 'internal scratch']
  #allocation2 [shape = 'f32[8,8,512]{2,1,0:T(8,128)}', space=vmem, size = 0x20000, scoped, tag = 'scratch operand']
  #allocation3 [shape = 'f32[8,8,128]{2,1,0:T(8,128)}', space=vmem, size = 0x8000, scoped, tag = 'scratch operand']
  #allocation4 [shape = 'f32[8,8,128]{2,1,0:T(8,128)}', space=vmem, size = 0x8000, scoped, tag = 'scratch operand']
  %s0 = inlined_call_operand.hbm [shape: f32[8,8,128], index: 0, kind: input, shape index: {}]
  %s1 = inlined_call_operand.hbm [shape: f32[2,128,512], index: 1, kind: input, shape index: {}]
  %s2 = inlined_call_operand.hbm [shape: f32[2,128,512], index: 2, kind: input, shape index: {}]
  %s3 = inlined_call_operand.vmem [shape: f32[2,1,512], index: 3, kind: input, shape index: {}]
  %s4 = inlined_call_operand.hbm [shape: f32[128,128], index: 4, kind: input, shape index: {}]
  %s5 = inlined_call_operand.vmem [shape: f32[1,128], index: 5, kind: input, shape index: {}]
  %s6 = inlined_call_operand.hbm [shape: f32[8,128], index: 6, kind: output, shape index: {}]
  %s7 = sld [smem:[#allocation0]]
  $region50: #{tpu_custom_call.1} parent=0
    _
  %s9 = ssub.s32 1, %s7
  %s10 = scalar_select 0, %s9, %s7
  $region1: #{tpu_custom_call.1} parent=0
    #allocation5 [shape = 'u8[32768]{0}', space=vmem, size = 0x8000, scoped, tag = 'input window, operand 0, single buffered']
    #allocation6 [shape = 's32[1]{0}', space=sflag, size = 0x4, scoped, tag = 'scoped memory for tpu_custom_call.1']
    #allocation7 [shape = 's32[1]{0}', space=sflag, size = 0x4, scoped, tag = 'scoped memory for tpu_custom_call.1']
    #allocation8 [shape = 'u8[524288]{0}', space=vmem, size = 0x80000, scoped, tag = 'input window, operand 1, single buffered']
    #allocation9 [shape = 's32[1]{0}', space=sflag, size = 0x4, scoped, tag = 'scoped memory for tpu_custom_call.1']
    #allocation10 [shape = 'u8[524288]{0}', space=vmem, size = 0x80000, scoped, tag = 'input window, operand 2, single buffered']
    #allocation11 [shape = 'u8[65536]{0}', space=vmem, size = 0x10000, scoped, tag = 'input window, operand 4, single buffered']
    #allocation12 [shape = 's32[1]{0}', space=sflag, size = 0x4, scoped, tag = 'scoped memory for tpu_custom_call.1']
    #allocation13 [shape = 'u8[4096]{0}', space=vmem, size = 0x1000, scoped, tag = 'output window, operand 0, single buffered']
    %11 = vsyncpa [#allocation6], 0
    %12 = vsyncpa [#allocation9], 0
    %13 = vsyncpa [#allocation12], 0
    %14 = vsyncpa [#allocation7], 0
    // Predicated region
    $region2: #{tpu_custom_call.1} parent=1 // pred_check
      _
    $region3: #{tpu_custom_call.1} parent=1 // pred_check_branch
      %16 = sbr.rel (0) target = $region5
    $region4: #{tpu_custom_call.1} parent=1 // pred_region
      %s18 = ssub.s32 1024, 1024
      %19 = vsyncadd [#allocation6], %s18
      %s20 = sshll.u32 [#allocation5], 4
      %s21 = int_to_ptr.vmem [resolvable:$true] %s20
      %26 = dma.hbm_to_vmem [thread:$0]  %s0, 1024, %s21, [#allocation6], 128, 128, 8
    $region5: #{tpu_custom_call.1} parent=1 // pred_fallthru
      _
    // Predicated region
    $region6: #{tpu_custom_call.1} parent=1 // pred_check
      _
    $region7: #{tpu_custom_call.1} parent=1 // pred_check_branch
      %28 = sbr.rel (0) target = $region9
    $region8: #{tpu_custom_call.1} parent=1 // pred_region
      %s30 = ssub.s32 16384, 16384
      %31 = vsyncadd [#allocation9], %s30
      %s32 = sshll.u32 [#allocation8], 4
      %s33 = int_to_ptr.vmem [resolvable:$true] %s32
      %38 = dma.hbm_to_vmem [thread:$0]  %s1, 16384, %s33, [#allocation9], 512, 512, 32
    $region9: #{tpu_custom_call.1} parent=1 // pred_fallthru
      _
    // Predicated region
    $region10: #{tpu_custom_call.1} parent=1 // pred_check
      _
    $region11: #{tpu_custom_call.1} parent=1 // pred_check_branch
      %40 = sbr.rel (0) target = $region13
    $region12: #{tpu_custom_call.1} parent=1 // pred_region
      %s42 = ssub.s32 16384, 16384
      %43 = vsyncadd [#allocation9], %s42
      %s44 = sshll.u32 [#allocation10], 4
      %s45 = int_to_ptr.vmem [resolvable:$true] %s44
      %50 = dma.hbm_to_vmem [thread:$0]  %s2, 16384, %s45, [#allocation9], 512, 512, 32
    $region13: #{tpu_custom_call.1} parent=1 // pred_fallthru
      _
    // Predicated region
    $region14: #{tpu_custom_call.1} parent=1 // pred_check
      _
    $region15: #{tpu_custom_call.1} parent=1 // pred_check_branch
      %52 = sbr.rel (0) target = $region17
    $region16: #{tpu_custom_call.1} parent=1 // pred_region
      _
    $region17: #{tpu_custom_call.1} parent=1 // pred_fallthru
      _
    // Predicated region
    $region18: #{tpu_custom_call.1} parent=1 // pred_check
      _
    $region19: #{tpu_custom_call.1} parent=1 // pred_check_branch
      %54 = sbr.rel (0) target = $region21
    $region20: #{tpu_custom_call.1} parent=1 // pred_region
      %s56 = ssub.s32 2048, 2048
      %57 = vsyncadd [#allocation12], %s56
      %s58 = sshll.u32 [#allocation11], 4
      %s59 = int_to_ptr.vmem [resolvable:$true] %s58
      %64 = dma.hbm_to_vmem [thread:$0]  %s4, 2048, %s59, [#allocation12], 128, 128, 8
    $region21: #{tpu_custom_call.1} parent=1 // pred_fallthru
      _
    // Predicated region
    $region22: #{tpu_custom_call.1} parent=1 // pred_check
      _
    $region23: #{tpu_custom_call.1} parent=1 // pred_check_branch
      %66 = sbr.rel (0) target = $region25
    $region24: #{tpu_custom_call.1} parent=1 // pred_region
      _
    $region25: #{tpu_custom_call.1} parent=1 // pred_fallthru
      _
    // Predicated region
    $region26: #{tpu_custom_call.1} parent=1 // pred_check
      _
    $region27: #{tpu_custom_call.1} parent=1 // pred_check_branch
      %68 = sbr.rel (0) target = $region29
    $region28: #{tpu_custom_call.1} parent=1 // pred_region
      %69 = dma.done [#allocation6], 1024
    $region29: #{tpu_custom_call.1} parent=1 // pred_fallthru
      _
    // Predicated region
    $region30: #{tpu_custom_call.1} parent=1 // pred_check
      _
    $region31: #{tpu_custom_call.1} parent=1 // pred_check_branch
      %71 = sbr.rel (0) target = $region33
    $region32: #{tpu_custom_call.1} parent=1 // pred_region
      %72 = dma.done [#allocation9], 16384
    $region33: #{tpu_custom_call.1} parent=1 // pred_fallthru
      _
    // Predicated region
    $region34: #{tpu_custom_call.1} parent=1 // pred_check
      _
    $region35: #{tpu_custom_call.1} parent=1 // pred_check_branch
      %74 = sbr.rel (0) target = $region37
    $region36: #{tpu_custom_call.1} parent=1 // pred_region
      %75 = dma.done [#allocation9], 16384
    $region37: #{tpu_custom_call.1} parent=1 // pred_fallthru
      _
    // Predicated region
    $region38: #{tpu_custom_call.1} parent=1 // pred_check
      _
    $region39: #{tpu_custom_call.1} parent=1 // pred_check_branch
      %77 = sbr.rel (0) target = $region41
    $region40: #{tpu_custom_call.1} parent=1 // pred_region
      %78 = dma.done [#allocation12], 2048
    $region41: #{tpu_custom_call.1} parent=1 // pred_fallthru
      _
    %v79 = vld [vmem:[#allocation5] sm:$0xff]
    %v80 = vld [vmem:[#allocation5 + $0x8] sm:$0xff]
    %v81 = vld [vmem:[#allocation5 + $0x10] sm:$0xff]
    %v82 = vld [vmem:[#allocation5 + $0x18] sm:$0xff]
    %v83 = vld [vmem:[#allocation5 + $0x20] sm:$0xff]
    %v84 = vld [vmem:[#allocation5 + $0x28] sm:$0xff]
    %v85 = vld [vmem:[#allocation5 + $0x30] sm:$0xff]
    %v86 = vld [vmem:[#allocation5 + $0x38] sm:$0xff]
    %v87 = vld [vmem:[#allocation8] sm:$0xff]
    %v88 = vld [vmem:[#allocation8 + $0x8] sm:$0xff]
    %v89 = vld [vmem:[#allocation8 + $0x10] sm:$0xff]
    %v90 = vld [vmem:[#allocation8 + $0x18] sm:$0xff]
    %v91 = vld [vmem:[#allocation8 + $0x20] sm:$0xff]
    %v92 = vld [vmem:[#allocation8 + $0x28] sm:$0xff]
    %v93 = vld [vmem:[#allocation8 + $0x30] sm:$0xff]
    %v94 = vld [vmem:[#allocation8 + $0x38] sm:$0xff]
    %v95 = vld [vmem:[#allocation8 + $0x40] sm:$0xff]
    %v96 = vld [vmem:[#allocation8 + $0x48] sm:$0xff]
    %v97 = vld [vmem:[#allocation8 + $0x50] sm:$0xff]
    %v98 = vld [vmem:[#allocation8 + $0x58] sm:$0xff]
    %v99 = vld [vmem:[#allocation8 + $0x60] sm:$0xff]
    %v100 = vld [vmem:[#allocation8 + $0x68] sm:$0xff]
    %v101 = vld [vmem:[#allocation8 + $0x70] sm:$0xff]
    %v102 = vld [vmem:[#allocation8 + $0x78] sm:$0xff]
    %v103 = vld [vmem:[#allocation8 + $0x80] sm:$0xff]
    %v104 = vld [vmem:[#allocation8 + $0x88] sm:$0xff]
    %v105 = vld [vmem:[#allocation8 + $0x90] sm:$0xff]
    %v106 = vld [vmem:[#allocation8 + $0x98] sm:$0xff]
    %v107 = vld [vmem:[#allocation8 + $0xa0] sm:$0xff]
    %v108 = vld [vmem:[#allocation8 + $0xa8] sm:$0xff]
    %v109 = vld [vmem:[#allocation8 + $0xb0] sm:$0xff]
    %v110 = vld [vmem:[#allocation8 + $0xb8] sm:$0xff]
    %v111 = vld [vmem:[#allocation8 + $0xc0] sm:$0xff]
    %v112 = vld [vmem:[#allocation8 + $0xc8] sm:$0xff]
    %v113 = vld [vmem:[#allocation8 + $0xd0] sm:$0xff]
    %v114 = vld [vmem:[#allocation8 + $0xd8] sm:$0xff]
    %v115 = vld [vmem:[#allocation8 + $0xe0] sm:$0xff]
    %v116 = vld [vmem:[#allocation8 + $0xe8] sm:$0xff]
    %v117 = vld [vmem:[#allocation8 + $0xf0] sm:$0xff]
    %v118 = vld [vmem:[#allocation8 + $0xf8] sm:$0xff]
    %v119 = vld [vmem:[#allocation8 + $0x100] sm:$0xff]
    %v120 = vld [vmem:[#allocation8 + $0x108] sm:$0xff]
    %v121 = vld [vmem:[#allocation8 + $0x110] sm:$0xff]
    %v122 = vld [vmem:[#allocation8 + $0x118] sm:$0xff]
    %v123 = vld [vmem:[#allocation8 + $0x120] sm:$0xff]
    %v124 = vld [vmem:[#allocation8 + $0x128] sm:$0xff]
    %v125 = vld [vmem:[#allocation8 + $0x130] sm:$0xff]
    %v126 = vld [vmem:[#allocation8 + $0x138] sm:$0xff]
    %v127 = vld [vmem:[#allocation8 + $0x140] sm:$0xff]
    %v128 = vld [vmem:[#allocation8 + $0x148] sm:$0xff]
    %v129 = vld [vmem:[#allocation8 + $0x150] sm:$0xff]
    %v130 = vld [vmem:[#allocation8 + $0x158] sm:$0xff]
    %v131 = vld [vmem:[#allocation8 + $0x160] sm:$0xff]
    %v132 = vld [vmem:[#allocation8 + $0x168] sm:$0xff]
    %v133 = vld [vmem:[#allocation8 + $0x170] sm:$0xff]
    %v134 = vld [vmem:[#allocation8 + $0x178] sm:$0xff]
    %v135 = vld [vmem:[#allocation8 + $0x180] sm:$0xff]
    %v136 = vld [vmem:[#allocation8 + $0x188] sm:$0xff]
    %v137 = vld [vmem:[#allocation8 + $0x190] sm:$0xff]
    %v138 = vld [vmem:[#allocation8 + $0x198] sm:$0xff]
    %v139 = vld [vmem:[#allocation8 + $0x1a0] sm:$0xff]
    %v140 = vld [vmem:[#allocation8 + $0x1a8] sm:$0xff]
    %v141 = vld [vmem:[#allocation8 + $0x1b0] sm:$0xff]
    %v142 = vld [vmem:[#allocation8 + $0x1b8] sm:$0xff]
    %v143 = vld [vmem:[#allocation8 + $0x1c0] sm:$0xff]
    %v144 = vld [vmem:[#allocation8 + $0x1c8] sm:$0xff]
    %v145 = vld [vmem:[#allocation8 + $0x1d0] sm:$0xff]
    %v146 = vld [vmem:[#allocation8 + $0x1d8] sm:$0xff]
    %v147 = vld [vmem:[#allocation8 + $0x1e0] sm:$0xff]
    %v148 = vld [vmem:[#allocation8 + $0x1e8] sm:$0xff]
    %v149 = vld [vmem:[#allocation8 + $0x1f0] sm:$0xff]
    %v150 = vld [vmem:[#allocation8 + $0x1f8] sm:$0xff]
    %v151 = vld [vmem:[%s3] sm:$0xf]
    %v153 = vlaneseq
    %v154 = vshrl.u32 %v153, 7
    %v155 = vsub.s32 0, %v154
    %v156 = vrot.slane %v151, %v155
    %v157 = vlaneseq
    %v158 = vshrl.u32 %v157, 7
    %v159 = vsub.s32 1, %v158
    %v160 = vrot.slane %v151, %v159
    %v161 = vlaneseq
    %v162 = vshrl.u32 %v161, 7
    %v163 = vsub.s32 2, %v162
    %v164 = vrot.slane %v151, %v163
    %v165 = vlaneseq
    %v166 = vshrl.u32 %v165, 7
    %v167 = vsub.s32 3, %v166
    %v168 = vrot.slane %v151, %v167
    %173 = vmatprep.subr.mxu0 %v88
    %174 = vmatpush1.msra.mxu0 %v87
    %175 = vmatprep.subr.mxu0 %v92
    %176 = vmatpush1.msra.mxu0 %v91
    %177 = vmatprep.subr.mxu0 %v96
    %178 = vmatpush1.msra.mxu0 %v95
    %179 = vmatprep.subr.mxu0 %v100
    %180 = vmatpush1.msra.mxu0 %v99
    %181 = vmatprep.subr.mxu0 %v104
    %182 = vmatpush1.msra.mxu0 %v103
    %183 = vmatprep.subr.mxu0 %v108
    %184 = vmatpush1.msra.mxu0 %v107
    %185 = vmatprep.subr.mxu0 %v112
    %186 = vmatpush1.msra.mxu0 %v111
    %187 = vmatprep.subr.mxu0 %v116
    %188 = vmatpush1.msra.mxu0 %v115
    %189 = vmatprep.subr.mxu0 %v120
    %190 = vmatpush1.msra.mxu0 %v119
    %191 = vmatprep.subr.mxu0 %v124
    %192 = vmatpush1.msra.mxu0 %v123
    %193 = vmatprep.subr.mxu0 %v128
    %194 = vmatpush1.msra.mxu0 %v127
    %195 = vmatprep.subr.mxu0 %v132
    %196 = vmatpush1.msra.mxu0 %v131
    %197 = vmatprep.subr.mxu0 %v136
    %198 = vmatpush1.msra.mxu0 %v135
    %199 = vmatprep.subr.mxu0 %v140
    %200 = vmatpush1.msra.mxu0 %v139
    %201 = vmatprep.subr.mxu0 %v144
    %202 = vmatpush1.msra.mxu0 %v143
    %203 = vmatprep.subr.mxu0 %v148
    %204 = vmatpush1.msra.mxu0 %v147
    %205 = vmatprep.subr.mxu0 0.0
    %206 = vmatpush1.msra.mxu0 0.0
    %207 = vmatprep.subr.mxu0 0.0
    %208 = vmatpush1.msra.mxu0 0.0
    %209 = vmatprep.subr.mxu0 0.0
    %210 = vmatpush1.msra.mxu0 0.0
    %211 = vmatprep.subr.mxu0 0.0
    %212 = vmatpush1.msra.mxu0 0.0
    %213 = vmatprep.subr.mxu0 0.0
    %214 = vmatpush1.msra.mxu0 0.0
    %215 = vmatprep.subr.mxu0 0.0
    %216 = vmatpush1.msra.mxu0 0.0
    %217 = vmatprep.subr.mxu0 0.0
    %218 = vmatpush1.msra.mxu0 0.0
    %219 = vmatprep.subr.mxu0 0.0
    %220 = vmatpush1.msra.mxu0 0.0
    %221 = vmatprep.subr.mxu0 0.0
    %222 = vmatpush1.msra.mxu0 0.0
    %223 = vmatprep.subr.mxu0 0.0
    %224 = vmatpush1.msra.mxu0 0.0
    %225 = vmatprep.subr.mxu0 0.0
    %226 = vmatpush1.msra.mxu0 0.0
    %227 = vmatprep.subr.mxu0 0.0
    %228 = vmatpush1.msra.mxu0 0.0
    %229 = vmatprep.subr.mxu0 0.0
    %230 = vmatpush1.msra.mxu0 0.0
    %231 = vmatprep.subr.mxu0 0.0
    %232 = vmatpush1.msra.mxu0 0.0
    %233 = vmatprep.subr.mxu0 0.0
    %234 = vmatpush1.msra.mxu0 0.0
    %235 = vmatprep.subr.mxu0 0.0
    %236 = vmatpush1.msra.mxu0 0.0
    %237 = vmatprep.mubr.f32.mxu0 0.0
    %238 = vmatmul.mubr.f32.gmra.mrb[0].mxu0 %v79
    %v239 = vpop.f32.mrb[0].mxu0
    %v240 = vadd.f32 %v156, %v239
    %v241 = vpop.f32.mrb[0].mxu0
    %v242 = vadd.f32 %v160, %v241
    %243 = vmatprep.mubr.f32.mxu0 0.0
    %244 = vmatmul.mubr.f32.gmra.mrb[0].mxu0 %v80
    %v245 = vpop.f32.mrb[0].mxu0
    %v246 = vadd.f32 %v156, %v245
    %v247 = vpop.f32.mrb[0].mxu0
    %v248 = vadd.f32 %v160, %v247
    %249 = vmatprep.mubr.f32.mxu0 0.0
    %250 = vmatmul.mubr.f32.gmra.mrb[0].mxu0 %v81
    %v251 = vpop.f32.mrb[0].mxu0
    %v252 = vadd.f32 %v156, %v251
    %v253 = vpop.f32.mrb[0].mxu0
    %v254 = vadd.f32 %v160, %v253
    %255 = vmatprep.mubr.f32.mxu0 0.0
    %256 = vmatmul.mubr.f32.gmra.mrb[0].mxu0 %v82
    %v257 = vpop.f32.mrb[0].mxu0
    %v258 = vadd.f32 %v156, %v257
    %v259 = vpop.f32.mrb[0].mxu0
    %v260 = vadd.f32 %v160, %v259
    %261 = vmatprep.mubr.f32.mxu0 0.0
    %262 = vmatmul.mubr.f32.gmra.mrb[0].mxu0 %v83
    %v263 = vpop.f32.mrb[0].mxu0
    %v264 = vadd.f32 %v156, %v263
    %v265 = vpop.f32.mrb[0].mxu0
    %v266 = vadd.f32 %v160, %v265
    %267 = vmatprep.mubr.f32.mxu0 0.0
    %268 = vmatmul.mubr.f32.gmra.mrb[0].mxu0 %v84
    %v269 = vpop.f32.mrb[0].mxu0
    %v270 = vadd.f32 %v156, %v269
    %v271 = vpop.f32.mrb[0].mxu0
    %v272 = vadd.f32 %v160, %v271
    %273 = vmatprep.mubr.f32.mxu0 0.0
    %274 = vmatmul.mubr.f32.gmra.mrb[0].mxu0 %v85
    %v275 = vpop.f32.mrb[0].mxu0
    %v276 = vadd.f32 %v156, %v275
    %v277 = vpop.f32.mrb[0].mxu0
    %v278 = vadd.f32 %v160, %v277
    %279 = vmatprep.mubr.f32.mxu0 0.0
    %280 = vmatmul.mubr.f32.gmra.mrb[0].mxu0 %v86
    %v281 = vpop.f32.mrb[0].mxu0
    %v282 = vadd.f32 %v156, %v281
    %v283 = vpop.f32.mrb[0].mxu0
    %v284 = vadd.f32 %v160, %v283
    %285 = vdwg.mxu0
    %286 = vmatprep.subr.mxu0 %v90
    %287 = vmatpush1.msra.mxu0 %v89
    %288 = vmatprep.subr.mxu0 %v94
    %289 = vmatpush1.msra.mxu0 %v93
    %290 = vmatprep.subr.mxu0 %v98
    %291 = vmatpush1.msra.mxu0 %v97
    %292 = vmatprep.subr.mxu0 %v102
    %293 = vmatpush1.msra.mxu0 %v101
    %294 = vmatprep.subr.mxu0 %v106
    %295 = vmatpush1.msra.mxu0 %v105
    %296 = vmatprep.subr.mxu0 %v110
    %297 = vmatpush1.msra.mxu0 %v109
    %298 = vmatprep.subr.mxu0 %v114
    %299 = vmatpush1.msra.mxu0 %v113
    %300 = vmatprep.subr.mxu0 %v118
    %301 = vmatpush1.msra.mxu0 %v117
    %302 = vmatprep.subr.mxu0 %v122
    %303 = vmatpush1.msra.mxu0 %v121
    %304 = vmatprep.subr.mxu0 %v126
    %305 = vmatpush1.msra.mxu0 %v125
    %306 = vmatprep.subr.mxu0 %v130
    %307 = vmatpush1.msra.mxu0 %v129
    %308 = vmatprep.subr.mxu0 %v134
    %309 = vmatpush1.msra.mxu0 %v133
    %310 = vmatprep.subr.mxu0 %v138
    %311 = vmatpush1.msra.mxu0 %v137
    %312 = vmatprep.subr.mxu0 %v142
    %313 = vmatpush1.msra.mxu0 %v141
    %314 = vmatprep.subr.mxu0 %v146
    %315 = vmatpush1.msra.mxu0 %v145
    %316 = vmatprep.subr.mxu0 %v150
    %317 = vmatpush1.msra.mxu0 %v149
    %318 = vmatprep.subr.mxu0 0.0
    %319 = vmatpush1.msra.mxu0 0.0
    %320 = vmatprep.subr.mxu0 0.0
    %321 = vmatpush1.msra.mxu0 0.0
    %322 = vmatprep.subr.mxu0 0.0
    %323 = vmatpush1.msra.mxu0 0.0
    %324 = vmatprep.subr.mxu0 0.0
    %325 = vmatpush1.msra.mxu0 0.0
    %326 = vmatprep.subr.mxu0 0.0
    %327 = vmatpush1.msra.mxu0 0.0
    %328 = vmatprep.subr.mxu0 0.0
    %329 = vmatpush1.msra.mxu0 0.0
    %330 = vmatprep.subr.mxu0 0.0
    %331 = vmatpush1.msra.mxu0 0.0
    %332 = vmatprep.subr.mxu0 0.0
    %333 = vmatpush1.msra.mxu0 0.0
    %334 = vmatprep.subr.mxu0 0.0
    %335 = vmatpush1.msra.mxu0 0.0
    %336 = vmatprep.subr.mxu0 0.0
    %337 = vmatpush1.msra.mxu0 0.0
    %338 = vmatprep.subr.mxu0 0.0
    %339 = vmatpush1.msra.mxu0 0.0
    %340 = vmatprep.subr.mxu0 0.0
    %341 = vmatpush1.msra.mxu0 0.0
    %342 = vmatprep.subr.mxu0 0.0
    %343 = vmatpush1.msra.mxu0 0.0
    %344 = vmatprep.subr.mxu0 0.0
    %345 = vmatpush1.msra.mxu0 0.0
    %346 = vmatprep.subr.mxu0 0.0
    %347 = vmatpush1.msra.mxu0 0.0
    %348 = vmatprep.subr.mxu0 0.0
    %349 = vmatpush1.msra.mxu0 0.0
    %350 = vmatprep.mubr.f32.mxu0 0.0
    %351 = vmatmul.mubr.f32.gmra.mrb[0].mxu0 %v79
    %v352 = vpop.f32.mrb[0].mxu0
    %v353 = vadd.f32 %v164, %v352
    %v354 = vpop.f32.mrb[0].mxu0
    %v355 = vadd.f32 %v168, %v354
    %356 = vmatprep.mubr.f32.mxu0 0.0
    %357 = vmatmul.mubr.f32.gmra.mrb[0].mxu0 %v80
    %v358 = vpop.f32.mrb[0].mxu0
    %v359 = vadd.f32 %v164, %v358
    %v360 = vpop.f32.mrb[0].mxu0
    %v361 = vadd.f32 %v168, %v360
    %362 = vmatprep.mubr.f32.mxu0 0.0
    %363 = vmatmul.mubr.f32.gmra.mrb[0].mxu0 %v81
    %v364 = vpop.f32.mrb[0].mxu0
    %v365 = vadd.f32 %v164, %v364
    %v366 = vpop.f32.mrb[0].mxu0
    %v367 = vadd.f32 %v168, %v366
    %368 = vmatprep.mubr.f32.mxu0 0.0
    %369 = vmatmul.mubr.f32.gmra.mrb[0].mxu0 %v82
    %v370 = vpop.f32.mrb[0].mxu0
    %v371 = vadd.f32 %v164, %v370
    %v372 = vpop.f32.mrb[0].mxu0
    %v373 = vadd.f32 %v168, %v372
    %374 = vmatprep.mubr.f32.mxu0 0.0
    %375 = vmatmul.mubr.f32.gmra.mrb[0].mxu0 %v83
    %v376 = vpop.f32.mrb[0].mxu0
    %v377 = vadd.f32 %v164, %v376
    %v378 = vpop.f32.mrb[0].mxu0
    %v379 = vadd.f32 %v168, %v378
    %380 = vmatprep.mubr.f32.mxu0 0.0
    %381 = vmatmul.mubr.f32.gmra.mrb[0].mxu0 %v84
    %v382 = vpop.f32.mrb[0].mxu0
    %v383 = vadd.f32 %v164, %v382
    %v384 = vpop.f32.mrb[0].mxu0
    %v385 = vadd.f32 %v168, %v384
    %386 = vmatprep.mubr.f32.mxu0 0.0
    %387 = vmatmul.mubr.f32.gmra.mrb[0].mxu0 %v85
    %v388 = vpop.f32.mrb[0].mxu0
    %v389 = vadd.f32 %v164, %v388
    %v390 = vpop.f32.mrb[0].mxu0
    %v391 = vadd.f32 %v168, %v390
    %392 = vmatprep.mubr.f32.mxu0 0.0
    %393 = vmatmul.mubr.f32.gmra.mrb[0].mxu0 %v86
    %v394 = vpop.f32.mrb[0].mxu0
    %v395 = vadd.f32 %v164, %v394
    %v396 = vpop.f32.mrb[0].mxu0
    %v397 = vadd.f32 %v168, %v396
    %398 = vdwg.mxu0
    %399 = vst [vmem:[#allocation2] sm:$0xff] %v240
    %400 = vst [vmem:[#allocation2 + $0x8] sm:$0xff] %v242
    %401 = vst [vmem:[#allocation2 + $0x10] sm:$0xff] %v353
    %402 = vst [vmem:[#allocation2 + $0x18] sm:$0xff] %v355
    %403 = vst [vmem:[#allocation2 + $0x20] sm:$0xff] %v246
    %404 = vst [vmem:[#allocation2 + $0x28] sm:$0xff] %v248
    %405 = vst [vmem:[#allocation2 + $0x30] sm:$0xff] %v359
    %406 = vst [vmem:[#allocation2 + $0x38] sm:$0xff] %v361
    %407 = vst [vmem:[#allocation2 + $0x40] sm:$0xff] %v252
    %408 = vst [vmem:[#allocation2 + $0x48] sm:$0xff] %v254
    %409 = vst [vmem:[#allocation2 + $0x50] sm:$0xff] %v365
    %410 = vst [vmem:[#allocation2 + $0x58] sm:$0xff] %v367
    %411 = vst [vmem:[#allocation2 + $0x60] sm:$0xff] %v258
    %412 = vst [vmem:[#allocation2 + $0x68] sm:$0xff] %v260
    %413 = vst [vmem:[#allocation2 + $0x70] sm:$0xff] %v371
    %414 = vst [vmem:[#allocation2 + $0x78] sm:$0xff] %v373
    %415 = vst [vmem:[#allocation2 + $0x80] sm:$0xff] %v264
    %416 = vst [vmem:[#allocation2 + $0x88] sm:$0xff] %v266
    %417 = vst [vmem:[#allocation2 + $0x90] sm:$0xff] %v377
    %418 = vst [vmem:[#allocation2 + $0x98] sm:$0xff] %v379
    %419 = vst [vmem:[#allocation2 + $0xa0] sm:$0xff] %v270
    %420 = vst [vmem:[#allocation2 + $0xa8] sm:$0xff] %v272
    %421 = vst [vmem:[#allocation2 + $0xb0] sm:$0xff] %v383
    %422 = vst [vmem:[#allocation2 + $0xb8] sm:$0xff] %v385
    %423 = vst [vmem:[#allocation2 + $0xc0] sm:$0xff] %v276
    %424 = vst [vmem:[#allocation2 + $0xc8] sm:$0xff] %v278
    %425 = vst [vmem:[#allocation2 + $0xd0] sm:$0xff] %v389
    %426 = vst [vmem:[#allocation2 + $0xd8] sm:$0xff] %v391
    %427 = vst [vmem:[#allocation2 + $0xe0] sm:$0xff] %v282
    %428 = vst [vmem:[#allocation2 + $0xe8] sm:$0xff] %v284
    %429 = vst [vmem:[#allocation2 + $0xf0] sm:$0xff] %v395
    %430 = vst [vmem:[#allocation2 + $0xf8] sm:$0xff] %v397
    %v431 = vld [vmem:[#allocation10] sm:$0xff]
    %v432 = vld [vmem:[#allocation10 + $0x8] sm:$0xff]
    %v433 = vld [vmem:[#allocation10 + $0x10] sm:$0xff]
    %v434 = vld [vmem:[#allocation10 + $0x18] sm:$0xff]
    %v435 = vld [vmem:[#allocation10 + $0x20] sm:$0xff]
    %v436 = vld [vmem:[#allocation10 + $0x28] sm:$0xff]
    %v437 = vld [vmem:[#allocation10 + $0x30] sm:$0xff]
    %v438 = vld [vmem:[#allocation10 + $0x38] sm:$0xff]
    %v439 = vld [vmem:[#allocation10 + $0x40] sm:$0xff]
    %v440 = vld [vmem:[#allocation10 + $0x48] sm:$0xff]
    %v441 = vld [vmem:[#allocation10 + $0x50] sm:$0xff]
    %v442 = vld [vmem:[#allocation10 + $0x58] sm:$0xff]
    %v443 = vld [vmem:[#allocation10 + $0x60] sm:$0xff]
    %v444 = vld [vmem:[#allocation10 + $0x68] sm:$0xff]
    %v445 = vld [vmem:[#allocation10 + $0x70] sm:$0xff]
    %v446 = vld [vmem:[#allocation10 + $0x78] sm:$0xff]
    %v447 = vld [vmem:[#allocation10 + $0x80] sm:$0xff]
    %v448 = vld [vmem:[#allocation10 + $0x88] sm:$0xff]
    %v449 = vld [vmem:[#allocation10 + $0x90] sm:$0xff]
    %v450 = vld [vmem:[#allocation10 + $0x98] sm:$0xff]
    %v451 = vld [vmem:[#allocation10 + $0xa0] sm:$0xff]
    %v452 = vld [vmem:[#allocation10 + $0xa8] sm:$0xff]
    %v453 = vld [vmem:[#allocation10 + $0xb0] sm:$0xff]
    %v454 = vld [vmem:[#allocation10 + $0xb8] sm:$0xff]
    %v455 = vld [vmem:[#allocation10 + $0xc0] sm:$0xff]
    %v456 = vld [vmem:[#allocation10 + $0xc8] sm:$0xff]
    %v457 = vld [vmem:[#allocation10 + $0xd0] sm:$0xff]
    %v458 = vld [vmem:[#allocation10 + $0xd8] sm:$0xff]
    %v459 = vld [vmem:[#allocation10 + $0xe0] sm:$0xff]
    %v460 = vld [vmem:[#allocation10 + $0xe8] sm:$0xff]
    %v461 = vld [vmem:[#allocation10 + $0xf0] sm:$0xff]
    %v462 = vld [vmem:[#allocation10 + $0xf8] sm:$0xff]
    %v463 = vld [vmem:[#allocation10 + $0x100] sm:$0xff]
    %v464 = vld [vmem:[#allocation10 + $0x108] sm:$0xff]
    %v465 = vld [vmem:[#allocation10 + $0x110] sm:$0xff]
    %v466 = vld [vmem:[#allocation10 + $0x118] sm:$0xff]
    %v467 = vld [vmem:[#allocation10 + $0x120] sm:$0xff]
    %v468 = vld [vmem:[#allocation10 + $0x128] sm:$0xff]
    %v469 = vld [vmem:[#allocation10 + $0x130] sm:$0xff]
    %v470 = vld [vmem:[#allocation10 + $0x138] sm:$0xff]
    %v471 = vld [vmem:[#allocation10 + $0x140] sm:$0xff]
    %v472 = vld [vmem:[#allocation10 + $0x148] sm:$0xff]
    %v473 = vld [vmem:[#allocation10 + $0x150] sm:$0xff]
    %v474 = vld [vmem:[#allocation10 + $0x158] sm:$0xff]
    %v475 = vld [vmem:[#allocation10 + $0x160] sm:$0xff]
    %v476 = vld [vmem:[#allocation10 + $0x168] sm:$0xff]
    %v477 = vld [vmem:[#allocation10 + $0x170] sm:$0xff]
    %v478 = vld [vmem:[#allocation10 + $0x178] sm:$0xff]
    %v479 = vld [vmem:[#allocation10 + $0x180] sm:$0xff]
    %v480 = vld [vmem:[#allocation10 + $0x188] sm:$0xff]
    %v481 = vld [vmem:[#allocation10 + $0x190] sm:$0xff]
    %v482 = vld [vmem:[#allocation10 + $0x198] sm:$0xff]
    %v483 = vld [vmem:[#allocation10 + $0x1a0] sm:$0xff]
    %v484 = vld [vmem:[#allocation10 + $0x1a8] sm:$0xff]
    %v485 = vld [vmem:[#allocation10 + $0x1b0] sm:$0xff]
    %v486 = vld [vmem:[#allocation10 + $0x1b8] sm:$0xff]
    %v487 = vld [vmem:[#allocation10 + $0x1c0] sm:$0xff]
    %v488 = vld [vmem:[#allocation10 + $0x1c8] sm:$0xff]
    %v489 = vld [vmem:[#allocation10 + $0x1d0] sm:$0xff]
    %v490 = vld [vmem:[#allocation10 + $0x1d8] sm:$0xff]
    %v491 = vld [vmem:[#allocation10 + $0x1e0] sm:$0xff]
    %v492 = vld [vmem:[#allocation10 + $0x1e8] sm:$0xff]
    %v493 = vld [vmem:[#allocation10 + $0x1f0] sm:$0xff]
    %v494 = vld [vmem:[#allocation10 + $0x1f8] sm:$0xff]
    %v495 = vld [vmem:[#allocation2] sm:$0xff]
    %v496 = vld [vmem:[#allocation2 + $0x8] sm:$0xff]
    %v497 = vld [vmem:[#allocation2 + $0x10] sm:$0xff]
    %v498 = vld [vmem:[#allocation2 + $0x18] sm:$0xff]
    %499 = vmatprep.subr.mxu0 %v432
    %500 = vmatpush1.msra.mxu0 %v431
    %501 = vmatprep.subr.mxu0 %v436
    %502 = vmatpush1.msra.mxu0 %v435
    %503 = vmatprep.subr.mxu0 %v440
    %504 = vmatpush1.msra.mxu0 %v439
    %505 = vmatprep.subr.mxu0 %v444
    %506 = vmatpush1.msra.mxu0 %v443
    %507 = vmatprep.subr.mxu0 %v448
    %508 = vmatpush1.msra.mxu0 %v447
    %509 = vmatprep.subr.mxu0 %v452
    %510 = vmatpush1.msra.mxu0 %v451
    %511 = vmatprep.subr.mxu0 %v456
    %512 = vmatpush1.msra.mxu0 %v455
    %513 = vmatprep.subr.mxu0 %v460
    %514 = vmatpush1.msra.mxu0 %v459
    %515 = vmatprep.subr.mxu0 %v464
    %516 = vmatpush1.msra.mxu0 %v463
    %517 = vmatprep.subr.mxu0 %v468
    %518 = vmatpush1.msra.mxu0 %v467
    %519 = vmatprep.subr.mxu0 %v472
    %520 = vmatpush1.msra.mxu0 %v471
    %521 = vmatprep.subr.mxu0 %v476
    %522 = vmatpush1.msra.mxu0 %v475
    %523 = vmatprep.subr.mxu0 %v480
    %524 = vmatpush1.msra.mxu0 %v479
    %525 = vmatprep.subr.mxu0 %v484
    %526 = vmatpush1.msra.mxu0 %v483
    %527 = vmatprep.subr.mxu0 %v488
    %528 = vmatpush1.msra.mxu0 %v487
    %529 = vmatprep.subr.mxu0 %v492
    %530 = vmatpush1.msra.mxu0 %v491
    %531 = vmatprep.subr.mxu0 0.0
    %532 = vmatpush1.msra.mxu0 0.0
    %533 = vmatprep.subr.mxu0 0.0
    %534 = vmatpush1.msra.mxu0 0.0
    %535 = vmatprep.subr.mxu0 0.0
    %536 = vmatpush1.msra.mxu0 0.0
    %537 = vmatprep.subr.mxu0 0.0
    %538 = vmatpush1.msra.mxu0 0.0
    %539 = vmatprep.subr.mxu0 0.0
    %540 = vmatpush1.msra.mxu0 0.0
    %541 = vmatprep.subr.mxu0 0.0
    %542 = vmatpush1.msra.mxu0 0.0
    %543 = vmatprep.subr.mxu0 0.0
    %544 = vmatpush1.msra.mxu0 0.0
    %545 = vmatprep.subr.mxu0 0.0
    %546 = vmatpush1.msra.mxu0 0.0
    %547 = vmatprep.subr.mxu0 0.0
    %548 = vmatpush1.msra.mxu0 0.0
    %549 = vmatprep.subr.mxu0 0.0
    %550 = vmatpush1.msra.mxu0 0.0
    %551 = vmatprep.subr.mxu0 0.0
    %552 = vmatpush1.msra.mxu0 0.0
    %553 = vmatprep.subr.mxu0 0.0
    %554 = vmatpush1.msra.mxu0 0.0
    %555 = vmatprep.subr.mxu0 0.0
    %556 = vmatpush1.msra.mxu0 0.0
    %557 = vmatprep.subr.mxu0 0.0
    %558 = vmatpush1.msra.mxu0 0.0
    %559 = vmatprep.subr.mxu0 0.0
    %560 = vmatpush1.msra.mxu0 0.0
    %561 = vmatprep.subr.mxu0 0.0
    %562 = vmatpush1.msra.mxu0 0.0
    %563 = vmatprep.mubr.f32.mxu0 0.0
    %564 = vmatmul.mubr.f32.gmra.mrb[0].mxu0 0.0
    %v565 = vpop.f32.mrb[0].mxu0
    %v566 = vadd.f32 0.0, %v565
    %v567 = vpop.f32.mrb[0].mxu0
    %v568 = vadd.f32 0.0, %v567
    %569 = vdwg.mxu0
    %570 = vmatprep.subr.mxu0 %v434
    %571 = vmatpush1.msra.mxu0 %v433
    %572 = vmatprep.subr.mxu0 %v438
    %573 = vmatpush1.msra.mxu0 %v437
    %574 = vmatprep.subr.mxu0 %v442
    %575 = vmatpush1.msra.mxu0 %v441
    %576 = vmatprep.subr.mxu0 %v446
    %577 = vmatpush1.msra.mxu0 %v445
    %578 = vmatprep.subr.mxu0 %v450
    %579 = vmatpush1.msra.mxu0 %v449
    %580 = vmatprep.subr.mxu0 %v454
    %581 = vmatpush1.msra.mxu0 %v453
    %582 = vmatprep.subr.mxu0 %v458
    %583 = vmatpush1.msra.mxu0 %v457
    %584 = vmatprep.subr.mxu0 %v462
    %585 = vmatpush1.msra.mxu0 %v461
    %586 = vmatprep.subr.mxu0 %v466
    %587 = vmatpush1.msra.mxu0 %v465
    %588 = vmatprep.subr.mxu0 %v470
    %589 = vmatpush1.msra.mxu0 %v469
    %590 = vmatprep.subr.mxu0 %v474
    %591 = vmatpush1.msra.mxu0 %v473
    %592 = vmatprep.subr.mxu0 %v478
    %593 = vmatpush1.msra.mxu0 %v477
    %594 = vmatprep.subr.mxu0 %v482
    %595 = vmatpush1.msra.mxu0 %v481
    %596 = vmatprep.subr.mxu0 %v486
    %597 = vmatpush1.msra.mxu0 %v485
    %598 = vmatprep.subr.mxu0 %v490
    %599 = vmatpush1.msra.mxu0 %v489
    %600 = vmatprep.subr.mxu0 %v494
    %601 = vmatpush1.msra.mxu0 %v493
    %602 = vmatprep.subr.mxu0 0.0
    %603 = vmatpush1.msra.mxu0 0.0
    %604 = vmatprep.subr.mxu0 0.0
    %605 = vmatpush1.msra.mxu0 0.0
    %606 = vmatprep.subr.mxu0 0.0
    %607 = vmatpush1.msra.mxu0 0.0
    %608 = vmatprep.subr.mxu0 0.0
    %609 = vmatpush1.msra.mxu0 0.0
    %610 = vmatprep.subr.mxu0 0.0
    %611 = vmatpush1.msra.mxu0 0.0
    %612 = vmatprep.subr.mxu0 0.0
    %613 = vmatpush1.msra.mxu0 0.0
    %614 = vmatprep.subr.mxu0 0.0
    %615 = vmatpush1.msra.mxu0 0.0
    %616 = vmatprep.subr.mxu0 0.0
    %617 = vmatpush1.msra.mxu0 0.0
    %618 = vmatprep.subr.mxu0 0.0
    %619 = vmatpush1.msra.mxu0 0.0
    %620 = vmatprep.subr.mxu0 0.0
    %621 = vmatpush1.msra.mxu0 0.0
    %622 = vmatprep.subr.mxu0 0.0
    %623 = vmatpush1.msra.mxu0 0.0
    %624 = vmatprep.subr.mxu0 0.0
    %625 = vmatpush1.msra.mxu0 0.0
    %626 = vmatprep.subr.mxu0 0.0
    %627 = vmatpush1.msra.mxu0 0.0
    %628 = vmatprep.subr.mxu0 0.0
    %629 = vmatpush1.msra.mxu0 0.0
    %630 = vmatprep.subr.mxu0 0.0
    %631 = vmatpush1.msra.mxu0 0.0
    %632 = vmatprep.subr.mxu0 0.0
    %633 = vmatpush1.msra.mxu0 0.0
    %634 = vmatprep.mubr.f32.mxu0 0.0
    %635 = vmatmul.mubr.f32.gmra.mrb[0].mxu0 0.0
    %v636 = vpop.f32.mrb[0].mxu0
    %v637 = vadd.f32 0.0, %v636
    %v638 = vpop.f32.mrb[0].mxu0
    %v639 = vadd.f32 0.0, %v638
    %640 = vdwg.mxu0
    %v641 = vadd.f32 %v495, %v566
    %v642 = vadd.f32 %v496, %v568
    %v643 = vadd.f32 %v497, %v637
    %v644 = vadd.f32 %v498, %v639
    %v645 = vxor.u32 %v641, 2147483648
    %v646 = vmul.f32 %v645, 1.442695
    %v647 = vpow.pop %v646
    %v648 = vadd.f32 %v647, 1.0
    %v649 = vrcp.pop %v648
    %v650 = vmul.f32 1.0, %v649
    %v651 = vxor.u32 %v642, 2147483648
    %v652 = vmul.f32 %v651, 1.442695
    %v653 = vpow.pop %v652
    %v654 = vadd.f32 %v653, 1.0
    %v655 = vrcp.pop %v654
    %v656 = vmul.f32 1.0, %v655
    %v657 = vtanh.pop %v643
    %v658 = vxor.u32 %v644, 2147483648
    %v659 = vmul.f32 %v658, 1.442695
    %v660 = vpow.pop %v659
    %v661 = vadd.f32 %v660, 1.0
    %v662 = vrcp.pop %v661
    %v663 = vmul.f32 1.0, %v662
    %v664 = vmul.f32 %v656, 0.0
    %v665 = vmul.f32 %v650, %v657
    %v666 = vadd.f32 %v664, %v665
    %v667 = vtanh.pop %v666
    %v668 = vmul.f32 %v663, %v667
    %669 = vst [vmem:[#allocation3] sm:$0xff] %v668
    %s670 = scalar_lea.vmem [#allocation2], 32
    %v671 = vld [vmem:[%s670] sm:$0xff]
    %v672 = vld [vmem:[%s670 + $0x8] sm:$0xff]
    %v673 = vld [vmem:[%s670 + $0x10] sm:$0xff]
    %v674 = vld [vmem:[%s670 + $0x18] sm:$0xff]
    %675 = vmatprep.subr.mxu0 %v432
    %676 = vmatpush1.msra.mxu0 %v431
    %677 = vmatprep.subr.mxu0 %v436
    %678 = vmatpush1.msra.mxu0 %v435
    %679 = vmatprep.subr.mxu0 %v440
    %680 = vmatpush1.msra.mxu0 %v439
    %681 = vmatprep.subr.mxu0 %v444
    %682 = vmatpush1.msra.mxu0 %v443
    %683 = vmatprep.subr.mxu0 %v448
    %684 = vmatpush1.msra.mxu0 %v447
    %685 = vmatprep.subr.mxu0 %v452
    %686 = vmatpush1.msra.mxu0 %v451
    %687 = vmatprep.subr.mxu0 %v456
    %688 = vmatpush1.msra.mxu0 %v455
    %689 = vmatprep.subr.mxu0 %v460
    %690 = vmatpush1.msra.mxu0 %v459
    %691 = vmatprep.subr.mxu0 %v464
    %692 = vmatpush1.msra.mxu0 %v463
    %693 = vmatprep.subr.mxu0 %v468
    %694 = vmatpush1.msra.mxu0 %v467
    %695 = vmatprep.subr.mxu0 %v472
    %696 = vmatpush1.msra.mxu0 %v471
    %697 = vmatprep.subr.mxu0 %v476
    %698 = vmatpush1.msra.mxu0 %v475
    %699 = vmatprep.subr.mxu0 %v480
    %700 = vmatpush1.msra.mxu0 %v479
    %701 = vmatprep.subr.mxu0 %v484
    %702 = vmatpush1.msra.mxu0 %v483
    %703 = vmatprep.subr.mxu0 %v488
    %704 = vmatpush1.msra.mxu0 %v487
    %705 = vmatprep.subr.mxu0 %v492
    %706 = vmatpush1.msra.mxu0 %v491
    %707 = vmatprep.subr.mxu0 0.0
    %708 = vmatpush1.msra.mxu0 0.0
    %709 = vmatprep.subr.mxu0 0.0
    %710 = vmatpush1.msra.mxu0 0.0
    %711 = vmatprep.subr.mxu0 0.0
    %712 = vmatpush1.msra.mxu0 0.0
    %713 = vmatprep.subr.mxu0 0.0
    %714 = vmatpush1.msra.mxu0 0.0
    %715 = vmatprep.subr.mxu0 0.0
    %716 = vmatpush1.msra.mxu0 0.0
    %717 = vmatprep.subr.mxu0 0.0
    %718 = vmatpush1.msra.mxu0 0.0
    %719 = vmatprep.subr.mxu0 0.0
    %720 = vmatpush1.msra.mxu0 0.0
    %721 = vmatprep.subr.mxu0 0.0
    %722 = vmatpush1.msra.mxu0 0.0
    %723 = vmatprep.subr.mxu0 0.0
    %724 = vmatpush1.msra.mxu0 0.0
    %725 = vmatprep.subr.mxu0 0.0
    %726 = vmatpush1.msra.mxu0 0.0
    %727 = vmatprep.subr.mxu0 0.0
    %728 = vmatpush1.msra.mxu0 0.0
    %729 = vmatprep.subr.mxu0 0.0
    %730 = vmatpush1.msra.mxu0 0.0
    %731 = vmatprep.subr.mxu0 0.0
    %732 = vmatpush1.msra.mxu0 0.0
    %733 = vmatprep.subr.mxu0 0.0
    %734 = vmatpush1.msra.mxu0 0.0
    %735 = vmatprep.subr.mxu0 0.0
    %736 = vmatpush1.msra.mxu0 0.0
    %737 = vmatprep.subr.mxu0 0.0
    %738 = vmatpush1.msra.mxu0 0.0
    %739 = vmatprep.mubr.f32.mxu0 0.0
    %740 = vmatmul.mubr.f32.gmra.mrb[0].mxu0 %v668
    %v741 = vpop.f32.mrb[0].mxu0
    %v742 = vadd.f32 0.0, %v741
    %v743 = vpop.f32.mrb[0].mxu0
    %v744 = vadd.f32 0.0, %v743
    %745 = vdwg.mxu0
    %746 = vmatprep.subr.mxu0 %v434
    %747 = vmatpush1.msra.mxu0 %v433
    %748 = vmatprep.subr.mxu0 %v438
    %749 = vmatpush1.msra.mxu0 %v437
    %750 = vmatprep.subr.mxu0 %v442
    %751 = vmatpush1.msra.mxu0 %v441
    %752 = vmatprep.subr.mxu0 %v446
    %753 = vmatpush1.msra.mxu0 %v445
    %754 = vmatprep.subr.mxu0 %v450
    %755 = vmatpush1.msra.mxu0 %v449
    %756 = vmatprep.subr.mxu0 %v454
    %757 = vmatpush1.msra.mxu0 %v453
    %758 = vmatprep.subr.mxu0 %v458
    %759 = vmatpush1.msra.mxu0 %v457
    %760 = vmatprep.subr.mxu0 %v462
    %761 = vmatpush1.msra.mxu0 %v461
    %762 = vmatprep.subr.mxu0 %v466
    %763 = vmatpush1.msra.mxu0 %v465
    %764 = vmatprep.subr.mxu0 %v470
    %765 = vmatpush1.msra.mxu0 %v469
    %766 = vmatprep.subr.mxu0 %v474
    %767 = vmatpush1.msra.mxu0 %v473
    %768 = vmatprep.subr.mxu0 %v478
    %769 = vmatpush1.msra.mxu0 %v477
    %770 = vmatprep.subr.mxu0 %v482
    %771 = vmatpush1.msra.mxu0 %v481
    %772 = vmatprep.subr.mxu0 %v486
    %773 = vmatpush1.msra.mxu0 %v485
    %774 = vmatprep.subr.mxu0 %v490
    %775 = vmatpush1.msra.mxu0 %v489
    %776 = vmatprep.subr.mxu0 %v494
    %777 = vmatpush1.msra.mxu0 %v493
    %778 = vmatprep.subr.mxu0 0.0
    %779 = vmatpush1.msra.mxu0 0.0
    %780 = vmatprep.subr.mxu0 0.0
    %781 = vmatpush1.msra.mxu0 0.0
    %782 = vmatprep.subr.mxu0 0.0
    %783 = vmatpush1.msra.mxu0 0.0
    %784 = vmatprep.subr.mxu0 0.0
    %785 = vmatpush1.msra.mxu0 0.0
    %786 = vmatprep.subr.mxu0 0.0
    %787 = vmatpush1.msra.mxu0 0.0
    %788 = vmatprep.subr.mxu0 0.0
    %789 = vmatpush1.msra.mxu0 0.0
    %790 = vmatprep.subr.mxu0 0.0
    %791 = vmatpush1.msra.mxu0 0.0
    %792 = vmatprep.subr.mxu0 0.0
    %793 = vmatpush1.msra.mxu0 0.0
    %794 = vmatprep.subr.mxu0 0.0
    %795 = vmatpush1.msra.mxu0 0.0
    %796 = vmatprep.subr.mxu0 0.0
    %797 = vmatpush1.msra.mxu0 0.0
    %798 = vmatprep.subr.mxu0 0.0
    %799 = vmatpush1.msra.mxu0 0.0
    %800 = vmatprep.subr.mxu0 0.0
    %801 = vmatpush1.msra.mxu0 0.0
    %802 = vmatprep.subr.mxu0 0.0
    %803 = vmatpush1.msra.mxu0 0.0
    %804 = vmatprep.subr.mxu0 0.0
    %805 = vmatpush1.msra.mxu0 0.0
    %806 = vmatprep.subr.mxu0 0.0
    %807 = vmatpush1.msra.mxu0 0.0
    %808 = vmatprep.subr.mxu0 0.0
    %809 = vmatpush1.msra.mxu0 0.0
    %810 = vmatprep.mubr.f32.mxu0 0.0
    %811 = vmatmul.mubr.f32.gmra.mrb[0].mxu0 %v668
    %v812 = vpop.f32.mrb[0].mxu0
    %v813 = vadd.f32 0.0, %v812
    %v814 = vpop.f32.mrb[0].mxu0
    %v815 = vadd.f32 0.0, %v814
    %816 = vdwg.mxu0
    %v817 = vadd.f32 %v671, %v742
    %v818 = vadd.f32 %v672, %v744
    %v819 = vadd.f32 %v673, %v813
    %v820 = vadd.f32 %v674, %v815
    %v821 = vxor.u32 %v817, 2147483648
    %v822 = vmul.f32 %v821, 1.442695
    %v823 = vpow.pop %v822
    %v824 = vadd.f32 %v823, 1.0
    %v825 = vrcp.pop %v824
    %v826 = vmul.f32 1.0, %v825
    %v827 = vxor.u32 %v818, 2147483648
    %v828 = vmul.f32 %v827, 1.442695
    %v829 = vpow.pop %v828
    %v830 = vadd.f32 %v829, 1.0
    %v831 = vrcp.pop %v830
    %v832 = vmul.f32 1.0, %v831
    %v833 = vtanh.pop %v819
    %v834 = vxor.u32 %v820, 2147483648
    %v835 = vmul.f32 %v834, 1.442695
    %v836 = vpow.pop %v835
    %v837 = vadd.f32 %v836, 1.0
    %v838 = vrcp.pop %v837
    %v839 = vmul.f32 1.0, %v838
    %v840 = vmul.f32 %v832, %v666
    %v841 = vmul.f32 %v826, %v833
    %v842 = vadd.f32 %v840, %v841
    %v843 = vtanh.pop %v842
    %v844 = vmul.f32 %v839, %v843
    %s845 = scalar_lea.vmem [#allocation3], 8
    %846 = vst [vmem:[%s845] sm:$0xff] %v844
    %s847 = scalar_lea.vmem [#allocation2], 64
    %v848 = vld [vmem:[%s847] sm:$0xff]
    %v849 = vld [vmem:[%s847 + $0x8] sm:$0xff]
    %v850 = vld [vmem:[%s847 + $0x10] sm:$0xff]
    %v851 = vld [vmem:[%s847 + $0x18] sm:$0xff]
    %852 = vmatprep.subr.mxu0 %v432
    %853 = vmatpush1.msra.mxu0 %v431
    %854 = vmatprep.subr.mxu0 %v436
    %855 = vmatpush1.msra.mxu0 %v435
    %856 = vmatprep.subr.mxu0 %v440
    %857 = vmatpush1.msra.mxu0 %v439
    %858 = vmatprep.subr.mxu0 %v444
    %859 = vmatpush1.msra.mxu0 %v443
    %860 = vmatprep.subr.mxu0 %v448
    %861 = vmatpush1.msra.mxu0 %v447
    %862 = vmatprep.subr.mxu0 %v452
    %863 = vmatpush1.msra.mxu0 %v451
    %864 = vmatprep.subr.mxu0 %v456
    %865 = vmatpush1.msra.mxu0 %v455
    %866 = vmatprep.subr.mxu0 %v460
    %867 = vmatpush1.msra.mxu0 %v459
    %868 = vmatprep.subr.mxu0 %v464
    %869 = vmatpush1.msra.mxu0 %v463
    %870 = vmatprep.subr.mxu0 %v468
    %871 = vmatpush1.msra.mxu0 %v467
    %872 = vmatprep.subr.mxu0 %v472
    %873 = vmatpush1.msra.mxu0 %v471
    %874 = vmatprep.subr.mxu0 %v476
    %875 = vmatpush1.msra.mxu0 %v475
    %876 = vmatprep.subr.mxu0 %v480
    %877 = vmatpush1.msra.mxu0 %v479
    %878 = vmatprep.subr.mxu0 %v484
    %879 = vmatpush1.msra.mxu0 %v483
    %880 = vmatprep.subr.mxu0 %v488
    %881 = vmatpush1.msra.mxu0 %v487
    %882 = vmatprep.subr.mxu0 %v492
    %883 = vmatpush1.msra.mxu0 %v491
    %884 = vmatprep.subr.mxu0 0.0
    %885 = vmatpush1.msra.mxu0 0.0
    %886 = vmatprep.subr.mxu0 0.0
    %887 = vmatpush1.msra.mxu0 0.0
    %888 = vmatprep.subr.mxu0 0.0
    %889 = vmatpush1.msra.mxu0 0.0
    %890 = vmatprep.subr.mxu0 0.0
    %891 = vmatpush1.msra.mxu0 0.0
    %892 = vmatprep.subr.mxu0 0.0
    %893 = vmatpush1.msra.mxu0 0.0
    %894 = vmatprep.subr.mxu0 0.0
    %895 = vmatpush1.msra.mxu0 0.0
    %896 = vmatprep.subr.mxu0 0.0
    %897 = vmatpush1.msra.mxu0 0.0
    %898 = vmatprep.subr.mxu0 0.0
    %899 = vmatpush1.msra.mxu0 0.0
    %900 = vmatprep.subr.mxu0 0.0
    %901 = vmatpush1.msra.mxu0 0.0
    %902 = vmatprep.subr.mxu0 0.0
    %903 = vmatpush1.msra.mxu0 0.0
    %904 = vmatprep.subr.mxu0 0.0
    %905 = vmatpush1.msra.mxu0 0.0
    %906 = vmatprep.subr.mxu0 0.0
    %907 = vmatpush1.msra.mxu0 0.0
    %908 = vmatprep.subr.mxu0 0.0
    %909 = vmatpush1.msra.mxu0 0.0
    %910 = vmatprep.subr.mxu0 0.0
    %911 = vmatpush1.msra.mxu0 0.0
    %912 = vmatprep.subr.mxu0 0.0
    %913 = vmatpush1.msra.mxu0 0.0
    %914 = vmatprep.subr.mxu0 0.0
    %915 = vmatpush1.msra.mxu0 0.0
    %916 = vmatprep.mubr.f32.mxu0 0.0
    %917 = vmatmul.mubr.f32.gmra.mrb[0].mxu0 %v844
    %v918 = vpop.f32.mrb[0].mxu0
    %v919 = vadd.f32 0.0, %v918
    %v920 = vpop.f32.mrb[0].mxu0
    %v921 = vadd.f32 0.0, %v920
    %922 = vdwg.mxu0
    %923 = vmatprep.subr.mxu0 %v434
    %924 = vmatpush1.msra.mxu0 %v433
    %925 = vmatprep.subr.mxu0 %v438
    %926 = vmatpush1.msra.mxu0 %v437
    %927 = vmatprep.subr.mxu0 %v442
    %928 = vmatpush1.msra.mxu0 %v441
    %929 = vmatprep.subr.mxu0 %v446
    %930 = vmatpush1.msra.mxu0 %v445
    %931 = vmatprep.subr.mxu0 %v450
    %932 = vmatpush1.msra.mxu0 %v449
    %933 = vmatprep.subr.mxu0 %v454
    %934 = vmatpush1.msra.mxu0 %v453
    %935 = vmatprep.subr.mxu0 %v458
    %936 = vmatpush1.msra.mxu0 %v457
    %937 = vmatprep.subr.mxu0 %v462
    %938 = vmatpush1.msra.mxu0 %v461
    %939 = vmatprep.subr.mxu0 %v466
    %940 = vmatpush1.msra.mxu0 %v465
    %941 = vmatprep.subr.mxu0 %v470
    %942 = vmatpush1.msra.mxu0 %v469
    %943 = vmatprep.subr.mxu0 %v474
    %944 = vmatpush1.msra.mxu0 %v473
    %945 = vmatprep.subr.mxu0 %v478
    %946 = vmatpush1.msra.mxu0 %v477
    %947 = vmatprep.subr.mxu0 %v482
    %948 = vmatpush1.msra.mxu0 %v481
    %949 = vmatprep.subr.mxu0 %v486
    %950 = vmatpush1.msra.mxu0 %v485
    %951 = vmatprep.subr.mxu0 %v490
    %952 = vmatpush1.msra.mxu0 %v489
    %953 = vmatprep.subr.mxu0 %v494
    %954 = vmatpush1.msra.mxu0 %v493
    %955 = vmatprep.subr.mxu0 0.0
    %956 = vmatpush1.msra.mxu0 0.0
    %957 = vmatprep.subr.mxu0 0.0
    %958 = vmatpush1.msra.mxu0 0.0
    %959 = vmatprep.subr.mxu0 0.0
    %960 = vmatpush1.msra.mxu0 0.0
    %961 = vmatprep.subr.mxu0 0.0
    %962 = vmatpush1.msra.mxu0 0.0
    %963 = vmatprep.subr.mxu0 0.0
    %964 = vmatpush1.msra.mxu0 0.0
    %965 = vmatprep.subr.mxu0 0.0
    %966 = vmatpush1.msra.mxu0 0.0
    %967 = vmatprep.subr.mxu0 0.0
    %968 = vmatpush1.msra.mxu0 0.0
    %969 = vmatprep.subr.mxu0 0.0
    %970 = vmatpush1.msra.mxu0 0.0
    %971 = vmatprep.subr.mxu0 0.0
    %972 = vmatpush1.msra.mxu0 0.0
    %973 = vmatprep.subr.mxu0 0.0
    %974 = vmatpush1.msra.mxu0 0.0
    %975 = vmatprep.subr.mxu0 0.0
    %976 = vmatpush1.msra.mxu0 0.0
    %977 = vmatprep.subr.mxu0 0.0
    %978 = vmatpush1.msra.mxu0 0.0
    %979 = vmatprep.subr.mxu0 0.0
    %980 = vmatpush1.msra.mxu0 0.0
    %981 = vmatprep.subr.mxu0 0.0
    %982 = vmatpush1.msra.mxu0 0.0
    %983 = vmatprep.subr.mxu0 0.0
    %984 = vmatpush1.msra.mxu0 0.0
    %985 = vmatprep.subr.mxu0 0.0
    %986 = vmatpush1.msra.mxu0 0.0
    %987 = vmatprep.mubr.f32.mxu0 0.0
    %988 = vmatmul.mubr.f32.gmra.mrb[0].mxu0 %v844
    %v989 = vpop.f32.mrb[0].mxu0
    %v990 = vadd.f32 0.0, %v989
    %v991 = vpop.f32.mrb[0].mxu0
    %v992 = vadd.f32 0.0, %v991
    %993 = vdwg.mxu0
    %v994 = vadd.f32 %v848, %v919
    %v995 = vadd.f32 %v849, %v921
    %v996 = vadd.f32 %v850, %v990
    %v997 = vadd.f32 %v851, %v992
    %v998 = vxor.u32 %v994, 2147483648
    %v999 = vmul.f32 %v998, 1.442695
    %v1000 = vpow.pop %v999
    %v1001 = vadd.f32 %v1000, 1.0
    %v1002 = vrcp.pop %v1001
    %v1003 = vmul.f32 1.0, %v1002
    %v1004 = vxor.u32 %v995, 2147483648
    %v1005 = vmul.f32 %v1004, 1.442695
    %v1006 = vpow.pop %v1005
    %v1007 = vadd.f32 %v1006, 1.0
    %v1008 = vrcp.pop %v1007
    %v1009 = vmul.f32 1.0, %v1008
    %v1010 = vtanh.pop %v996
    %v1011 = vxor.u32 %v997, 2147483648
    %v1012 = vmul.f32 %v1011, 1.442695
    %v1013 = vpow.pop %v1012
    %v1014 = vadd.f32 %v1013, 1.0
    %v1015 = vrcp.pop %v1014
    %v1016 = vmul.f32 1.0, %v1015
    %v1017 = vmul.f32 %v1009, %v842
    %v1018 = vmul.f32 %v1003, %v1010
    %v1019 = vadd.f32 %v1017, %v1018
    %v1020 = vtanh.pop %v1019
    %v1021 = vmul.f32 %v1016, %v1020
    %s1022 = scalar_lea.vmem [#allocation3], 16
    %1023 = vst [vmem:[%s1022] sm:$0xff] %v1021
    %s1024 = scalar_lea.vmem [#allocation2], 96
    %v1025 = vld [vmem:[%s1024] sm:$0xff]
    %v1026 = vld [vmem:[%s1024 + $0x8] sm:$0xff]
    %v1027 = vld [vmem:[%s1024 + $0x10] sm:$0xff]
    %v1028 = vld [vmem:[%s1024 + $0x18] sm:$0xff]
    %1029 = vmatprep.subr.mxu0 %v432
    %1030 = vmatpush1.msra.mxu0 %v431
    %1031 = vmatprep.subr.mxu0 %v436
    %1032 = vmatpush1.msra.mxu0 %v435
    %1033 = vmatprep.subr.mxu0 %v440
    %1034 = vmatpush1.msra.mxu0 %v439
    %1035 = vmatprep.subr.mxu0 %v444
    %1036 = vmatpush1.msra.mxu0 %v443
    %1037 = vmatprep.subr.mxu0 %v448
    %1038 = vmatpush1.msra.mxu0 %v447
    %1039 = vmatprep.subr.mxu0 %v452
    %1040 = vmatpush1.msra.mxu0 %v451
    %1041 = vmatprep.subr.mxu0 %v456
    %1042 = vmatpush1.msra.mxu0 %v455
    %1043 = vmatprep.subr.mxu0 %v460
    %1044 = vmatpush1.msra.mxu0 %v459
    %1045 = vmatprep.subr.mxu0 %v464
    %1046 = vmatpush1.msra.mxu0 %v463
    %1047 = vmatprep.subr.mxu0 %v468
    %1048 = vmatpush1.msra.mxu0 %v467
    %1049 = vmatprep.subr.mxu0 %v472
    %1050 = vmatpush1.msra.mxu0 %v471
    %1051 = vmatprep.subr.mxu0 %v476
    %1052 = vmatpush1.msra.mxu0 %v475
    %1053 = vmatprep.subr.mxu0 %v480
    %1054 = vmatpush1.msra.mxu0 %v479
    %1055 = vmatprep.subr.mxu0 %v484
    %1056 = vmatpush1.msra.mxu0 %v483
    %1057 = vmatprep.subr.mxu0 %v488
    %1058 = vmatpush1.msra.mxu0 %v487
    %1059 = vmatprep.subr.mxu0 %v492
    %1060 = vmatpush1.msra.mxu0 %v491
    %1061 = vmatprep.subr.mxu0 0.0
    %1062 = vmatpush1.msra.mxu0 0.0
    %1063 = vmatprep.subr.mxu0 0.0
    %1064 = vmatpush1.msra.mxu0 0.0
    %1065 = vmatprep.subr.mxu0 0.0
    %1066 = vmatpush1.msra.mxu0 0.0
    %1067 = vmatprep.subr.mxu0 0.0
    %1068 = vmatpush1.msra.mxu0 0.0
    %1069 = vmatprep.subr.mxu0 0.0
    %1070 = vmatpush1.msra.mxu0 0.0
    %1071 = vmatprep.subr.mxu0 0.0
    %1072 = vmatpush1.msra.mxu0 0.0
    %1073 = vmatprep.subr.mxu0 0.0
    %1074 = vmatpush1.msra.mxu0 0.0
    %1075 = vmatprep.subr.mxu0 0.0
    %1076 = vmatpush1.msra.mxu0 0.0
    %1077 = vmatprep.subr.mxu0 0.0
    %1078 = vmatpush1.msra.mxu0 0.0
    %1079 = vmatprep.subr.mxu0 0.0
    %1080 = vmatpush1.msra.mxu0 0.0
    %1081 = vmatprep.subr.mxu0 0.0
    %1082 = vmatpush1.msra.mxu0 0.0
    %1083 = vmatprep.subr.mxu0 0.0
    %1084 = vmatpush1.msra.mxu0 0.0
    %1085 = vmatprep.subr.mxu0 0.0
    %1086 = vmatpush1.msra.mxu0 0.0
    %1087 = vmatprep.subr.mxu0 0.0
    %1088 = vmatpush1.msra.mxu0 0.0
    %1089 = vmatprep.subr.mxu0 0.0
    %1090 = vmatpush1.msra.mxu0 0.0
    %1091 = vmatprep.subr.mxu0 0.0
    %1092 = vmatpush1.msra.mxu0 0.0
    %1093 = vmatprep.mubr.f32.mxu0 0.0
    %1094 = vmatmul.mubr.f32.gmra.mrb[0].mxu0 %v1021
    %v1095 = vpop.f32.mrb[0].mxu0
    %v1096 = vadd.f32 0.0, %v1095
    %v1097 = vpop.f32.mrb[0].mxu0
    %v1098 = vadd.f32 0.0, %v1097
    %1099 = vdwg.mxu0
    %1100 = vmatprep.subr.mxu0 %v434
    %1101 = vmatpush1.msra.mxu0 %v433
    %1102 = vmatprep.subr.mxu0 %v438
    %1103 = vmatpush1.msra.mxu0 %v437
    %1104 = vmatprep.subr.mxu0 %v442
    %1105 = vmatpush1.msra.mxu0 %v441
    %1106 = vmatprep.subr.mxu0 %v446
    %1107 = vmatpush1.msra.mxu0 %v445
    %1108 = vmatprep.subr.mxu0 %v450
    %1109 = vmatpush1.msra.mxu0 %v449
    %1110 = vmatprep.subr.mxu0 %v454
    %1111 = vmatpush1.msra.mxu0 %v453
    %1112 = vmatprep.subr.mxu0 %v458
    %1113 = vmatpush1.msra.mxu0 %v457
    %1114 = vmatprep.subr.mxu0 %v462
    %1115 = vmatpush1.msra.mxu0 %v461
    %1116 = vmatprep.subr.mxu0 %v466
    %1117 = vmatpush1.msra.mxu0 %v465
    %1118 = vmatprep.subr.mxu0 %v470
    %1119 = vmatpush1.msra.mxu0 %v469
    %1120 = vmatprep.subr.mxu0 %v474
    %1121 = vmatpush1.msra.mxu0 %v473
    %1122 = vmatprep.subr.mxu0 %v478
    %1123 = vmatpush1.msra.mxu0 %v477
    %1124 = vmatprep.subr.mxu0 %v482
    %1125 = vmatpush1.msra.mxu0 %v481
    %1126 = vmatprep.subr.mxu0 %v486
    %1127 = vmatpush1.msra.mxu0 %v485
    %1128 = vmatprep.subr.mxu0 %v490
    %1129 = vmatpush1.msra.mxu0 %v489
    %1130 = vmatprep.subr.mxu0 %v494
    %1131 = vmatpush1.msra.mxu0 %v493
    %1132 = vmatprep.subr.mxu0 0.0
    %1133 = vmatpush1.msra.mxu0 0.0
    %1134 = vmatprep.subr.mxu0 0.0
    %1135 = vmatpush1.msra.mxu0 0.0
    %1136 = vmatprep.subr.mxu0 0.0
    %1137 = vmatpush1.msra.mxu0 0.0
    %1138 = vmatprep.subr.mxu0 0.0
    %1139 = vmatpush1.msra.mxu0 0.0
    %1140 = vmatprep.subr.mxu0 0.0
    %1141 = vmatpush1.msra.mxu0 0.0
    %1142 = vmatprep.subr.mxu0 0.0
    %1143 = vmatpush1.msra.mxu0 0.0
    %1144 = vmatprep.subr.mxu0 0.0
    %1145 = vmatpush1.msra.mxu0 0.0
    %1146 = vmatprep.subr.mxu0 0.0
    %1147 = vmatpush1.msra.mxu0 0.0
    %1148 = vmatprep.subr.mxu0 0.0
    %1149 = vmatpush1.msra.mxu0 0.0
    %1150 = vmatprep.subr.mxu0 0.0
    %1151 = vmatpush1.msra.mxu0 0.0
    %1152 = vmatprep.subr.mxu0 0.0
    %1153 = vmatpush1.msra.mxu0 0.0
    %1154 = vmatprep.subr.mxu0 0.0
    %1155 = vmatpush1.msra.mxu0 0.0
    %1156 = vmatprep.subr.mxu0 0.0
    %1157 = vmatpush1.msra.mxu0 0.0
    %1158 = vmatprep.subr.mxu0 0.0
    %1159 = vmatpush1.msra.mxu0 0.0
    %1160 = vmatprep.subr.mxu0 0.0
    %1161 = vmatpush1.msra.mxu0 0.0
    %1162 = vmatprep.subr.mxu0 0.0
    %1163 = vmatpush1.msra.mxu0 0.0
    %1164 = vmatprep.mubr.f32.mxu0 0.0
    %1165 = vmatmul.mubr.f32.gmra.mrb[0].mxu0 %v1021
    %v1166 = vpop.f32.mrb[0].mxu0
    %v1167 = vadd.f32 0.0, %v1166
    %v1168 = vpop.f32.mrb[0].mxu0
    %v1169 = vadd.f32 0.0, %v1168
    %1170 = vdwg.mxu0
    %v1171 = vadd.f32 %v1025, %v1096
    %v1172 = vadd.f32 %v1026, %v1098
    %v1173 = vadd.f32 %v1027, %v1167
    %v1174 = vadd.f32 %v1028, %v1169
    %v1175 = vxor.u32 %v1171, 2147483648
    %v1176 = vmul.f32 %v1175, 1.442695
    %v1177 = vpow.pop %v1176
    %v1178 = vadd.f32 %v1177, 1.0
    %v1179 = vrcp.pop %v1178
    %v1180 = vmul.f32 1.0, %v1179
    %v1181 = vxor.u32 %v1172, 2147483648
    %v1182 = vmul.f32 %v1181, 1.442695
    %v1183 = vpow.pop %v1182
    %v1184 = vadd.f32 %v1183, 1.0
    %v1185 = vrcp.pop %v1184
    %v1186 = vmul.f32 1.0, %v1185
    %v1187 = vtanh.pop %v1173
    %v1188 = vxor.u32 %v1174, 2147483648
    %v1189 = vmul.f32 %v1188, 1.442695
    %v1190 = vpow.pop %v1189
    %v1191 = vadd.f32 %v1190, 1.0
    %v1192 = vrcp.pop %v1191
    %v1193 = vmul.f32 1.0, %v1192
    %v1194 = vmul.f32 %v1186, %v1019
    %v1195 = vmul.f32 %v1180, %v1187
    %v1196 = vadd.f32 %v1194, %v1195
    %v1197 = vtanh.pop %v1196
    %v1198 = vmul.f32 %v1193, %v1197
    %s1199 = scalar_lea.vmem [#allocation3], 24
    %1200 = vst [vmem:[%s1199] sm:$0xff] %v1198
    %s1201 = scalar_lea.vmem [#allocation2], 128
    %v1202 = vld [vmem:[%s1201] sm:$0xff]
    %v1203 = vld [vmem:[%s1201 + $0x8] sm:$0xff]
    %v1204 = vld [vmem:[%s1201 + $0x10] sm:$0xff]
    %v1205 = vld [vmem:[%s1201 + $0x18] sm:$0xff]
    %1206 = vmatprep.subr.mxu0 %v432
    %1207 = vmatpush1.msra.mxu0 %v431
    %1208 = vmatprep.subr.mxu0 %v436
    %1209 = vmatpush1.msra.mxu0 %v435
    %1210 = vmatprep.subr.mxu0 %v440
    %1211 = vmatpush1.msra.mxu0 %v439
    %1212 = vmatprep.subr.mxu0 %v444
    %1213 = vmatpush1.msra.mxu0 %v443
    %1214 = vmatprep.subr.mxu0 %v448
    %1215 = vmatpush1.msra.mxu0 %v447
    %1216 = vmatprep.subr.mxu0 %v452
    %1217 = vmatpush1.msra.mxu0 %v451
    %1218 = vmatprep.subr.mxu0 %v456
    %1219 = vmatpush1.msra.mxu0 %v455
    %1220 = vmatprep.subr.mxu0 %v460
    %1221 = vmatpush1.msra.mxu0 %v459
    %1222 = vmatprep.subr.mxu0 %v464
    %1223 = vmatpush1.msra.mxu0 %v463
    %1224 = vmatprep.subr.mxu0 %v468
    %1225 = vmatpush1.msra.mxu0 %v467
    %1226 = vmatprep.subr.mxu0 %v472
    %1227 = vmatpush1.msra.mxu0 %v471
    %1228 = vmatprep.subr.mxu0 %v476
    %1229 = vmatpush1.msra.mxu0 %v475
    %1230 = vmatprep.subr.mxu0 %v480
    %1231 = vmatpush1.msra.mxu0 %v479
    %1232 = vmatprep.subr.mxu0 %v484
    %1233 = vmatpush1.msra.mxu0 %v483
    %1234 = vmatprep.subr.mxu0 %v488
    %1235 = vmatpush1.msra.mxu0 %v487
    %1236 = vmatprep.subr.mxu0 %v492
    %1237 = vmatpush1.msra.mxu0 %v491
    %1238 = vmatprep.subr.mxu0 0.0
    %1239 = vmatpush1.msra.mxu0 0.0
    %1240 = vmatprep.subr.mxu0 0.0
    %1241 = vmatpush1.msra.mxu0 0.0
    %1242 = vmatprep.subr.mxu0 0.0
    %1243 = vmatpush1.msra.mxu0 0.0
    %1244 = vmatprep.subr.mxu0 0.0
    %1245 = vmatpush1.msra.mxu0 0.0
    %1246 = vmatprep.subr.mxu0 0.0
    %1247 = vmatpush1.msra.mxu0 0.0
    %1248 = vmatprep.subr.mxu0 0.0
    %1249 = vmatpush1.msra.mxu0 0.0
    %1250 = vmatprep.subr.mxu0 0.0
    %1251 = vmatpush1.msra.mxu0 0.0
    %1252 = vmatprep.subr.mxu0 0.0
    %1253 = vmatpush1.msra.mxu0 0.0
    %1254 = vmatprep.subr.mxu0 0.0
    %1255 = vmatpush1.msra.mxu0 0.0
    %1256 = vmatprep.subr.mxu0 0.0
    %1257 = vmatpush1.msra.mxu0 0.0
    %1258 = vmatprep.subr.mxu0 0.0
    %1259 = vmatpush1.msra.mxu0 0.0
    %1260 = vmatprep.subr.mxu0 0.0
    %1261 = vmatpush1.msra.mxu0 0.0
    %1262 = vmatprep.subr.mxu0 0.0
    %1263 = vmatpush1.msra.mxu0 0.0
    %1264 = vmatprep.subr.mxu0 0.0
    %1265 = vmatpush1.msra.mxu0 0.0
    %1266 = vmatprep.subr.mxu0 0.0
    %1267 = vmatpush1.msra.mxu0 0.0
    %1268 = vmatprep.subr.mxu0 0.0
    %1269 = vmatpush1.msra.mxu0 0.0
    %1270 = vmatprep.mubr.f32.mxu0 0.0
    %1271 = vmatmul.mubr.f32.gmra.mrb[0].mxu0 %v1198
    %v1272 = vpop.f32.mrb[0].mxu0
    %v1273 = vadd.f32 0.0, %v1272
    %v1274 = vpop.f32.mrb[0].mxu0
    %v1275 = vadd.f32 0.0, %v1274
    %1276 = vdwg.mxu0
    %1277 = vmatprep.subr.mxu0 %v434
    %1278 = vmatpush1.msra.mxu0 %v433
    %1279 = vmatprep.subr.mxu0 %v438
    %1280 = vmatpush1.msra.mxu0 %v437
    %1281 = vmatprep.subr.mxu0 %v442
    %1282 = vmatpush1.msra.mxu0 %v441
    %1283 = vmatprep.subr.mxu0 %v446
    %1284 = vmatpush1.msra.mxu0 %v445
    %1285 = vmatprep.subr.mxu0 %v450
    %1286 = vmatpush1.msra.mxu0 %v449
    %1287 = vmatprep.subr.mxu0 %v454
    %1288 = vmatpush1.msra.mxu0 %v453
    %1289 = vmatprep.subr.mxu0 %v458
    %1290 = vmatpush1.msra.mxu0 %v457
    %1291 = vmatprep.subr.mxu0 %v462
    %1292 = vmatpush1.msra.mxu0 %v461
    %1293 = vmatprep.subr.mxu0 %v466
    %1294 = vmatpush1.msra.mxu0 %v465
    %1295 = vmatprep.subr.mxu0 %v470
    %1296 = vmatpush1.msra.mxu0 %v469
    %1297 = vmatprep.subr.mxu0 %v474
    %1298 = vmatpush1.msra.mxu0 %v473
    %1299 = vmatprep.subr.mxu0 %v478
    %1300 = vmatpush1.msra.mxu0 %v477
    %1301 = vmatprep.subr.mxu0 %v482
    %1302 = vmatpush1.msra.mxu0 %v481
    %1303 = vmatprep.subr.mxu0 %v486
    %1304 = vmatpush1.msra.mxu0 %v485
    %1305 = vmatprep.subr.mxu0 %v490
    %1306 = vmatpush1.msra.mxu0 %v489
    %1307 = vmatprep.subr.mxu0 %v494
    %1308 = vmatpush1.msra.mxu0 %v493
    %1309 = vmatprep.subr.mxu0 0.0
    %1310 = vmatpush1.msra.mxu0 0.0
    %1311 = vmatprep.subr.mxu0 0.0
    %1312 = vmatpush1.msra.mxu0 0.0
    %1313 = vmatprep.subr.mxu0 0.0
    %1314 = vmatpush1.msra.mxu0 0.0
    %1315 = vmatprep.subr.mxu0 0.0
    %1316 = vmatpush1.msra.mxu0 0.0
    %1317 = vmatprep.subr.mxu0 0.0
    %1318 = vmatpush1.msra.mxu0 0.0
    %1319 = vmatprep.subr.mxu0 0.0
    %1320 = vmatpush1.msra.mxu0 0.0
    %1321 = vmatprep.subr.mxu0 0.0
    %1322 = vmatpush1.msra.mxu0 0.0
    %1323 = vmatprep.subr.mxu0 0.0
    %1324 = vmatpush1.msra.mxu0 0.0
    %1325 = vmatprep.subr.mxu0 0.0
    %1326 = vmatpush1.msra.mxu0 0.0
    %1327 = vmatprep.subr.mxu0 0.0
    %1328 = vmatpush1.msra.mxu0 0.0
    %1329 = vmatprep.subr.mxu0 0.0
    %1330 = vmatpush1.msra.mxu0 0.0
    %1331 = vmatprep.subr.mxu0 0.0
    %1332 = vmatpush1.msra.mxu0 0.0
    %1333 = vmatprep.subr.mxu0 0.0
    %1334 = vmatpush1.msra.mxu0 0.0
    %1335 = vmatprep.subr.mxu0 0.0
    %1336 = vmatpush1.msra.mxu0 0.0
    %1337 = vmatprep.subr.mxu0 0.0
    %1338 = vmatpush1.msra.mxu0 0.0
    %1339 = vmatprep.subr.mxu0 0.0
    %1340 = vmatpush1.msra.mxu0 0.0
    %1341 = vmatprep.mubr.f32.mxu0 0.0
    %1342 = vmatmul.mubr.f32.gmra.mrb[0].mxu0 %v1198
    %v1343 = vpop.f32.mrb[0].mxu0
    %v1344 = vadd.f32 0.0, %v1343
    %v1345 = vpop.f32.mrb[0].mxu0
    %v1346 = vadd.f32 0.0, %v1345
    %1347 = vdwg.mxu0
    %v1348 = vadd.f32 %v1202, %v1273
    %v1349 = vadd.f32 %v1203, %v1275
    %v1350 = vadd.f32 %v1204, %v1344
    %v1351 = vadd.f32 %v1205, %v1346
    %v1352 = vxor.u32 %v1348, 2147483648
    %v1353 = vmul.f32 %v1352, 1.442695
    %v1354 = vpow.pop %v1353
    %v1355 = vadd.f32 %v1354, 1.0
    %v1356 = vrcp.pop %v1355
    %v1357 = vmul.f32 1.0, %v1356
    %v1358 = vxor.u32 %v1349, 2147483648
    %v1359 = vmul.f32 %v1358, 1.442695
    %v1360 = vpow.pop %v1359
    %v1361 = vadd.f32 %v1360, 1.0
    %v1362 = vrcp.pop %v1361
    %v1363 = vmul.f32 1.0, %v1362
    %v1364 = vtanh.pop %v1350
    %v1365 = vxor.u32 %v1351, 2147483648
    %v1366 = vmul.f32 %v1365, 1.442695
    %v1367 = vpow.pop %v1366
    %v1368 = vadd.f32 %v1367, 1.0
    %v1369 = vrcp.pop %v1368
    %v1370 = vmul.f32 1.0, %v1369
    %v1371 = vmul.f32 %v1363, %v1196
    %v1372 = vmul.f32 %v1357, %v1364
    %v1373 = vadd.f32 %v1371, %v1372
    %v1374 = vtanh.pop %v1373
    %v1375 = vmul.f32 %v1370, %v1374
    %s1376 = scalar_lea.vmem [#allocation3], 32
    %1377 = vst [vmem:[%s1376] sm:$0xff] %v1375
    %s1378 = scalar_lea.vmem [#allocation2], 160
    %v1379 = vld [vmem:[%s1378] sm:$0xff]
    %v1380 = vld [vmem:[%s1378 + $0x8] sm:$0xff]
    %v1381 = vld [vmem:[%s1378 + $0x10] sm:$0xff]
    %v1382 = vld [vmem:[%s1378 + $0x18] sm:$0xff]
    %1383 = vmatprep.subr.mxu0 %v432
    %1384 = vmatpush1.msra.mxu0 %v431
    %1385 = vmatprep.subr.mxu0 %v436
    %1386 = vmatpush1.msra.mxu0 %v435
    %1387 = vmatprep.subr.mxu0 %v440
    %1388 = vmatpush1.msra.mxu0 %v439
    %1389 = vmatprep.subr.mxu0 %v444
    %1390 = vmatpush1.msra.mxu0 %v443
    %1391 = vmatprep.subr.mxu0 %v448
    %1392 = vmatpush1.msra.mxu0 %v447
    %1393 = vmatprep.subr.mxu0 %v452
    %1394 = vmatpush1.msra.mxu0 %v451
    %1395 = vmatprep.subr.mxu0 %v456
    %1396 = vmatpush1.msra.mxu0 %v455
    %1397 = vmatprep.subr.mxu0 %v460
    %1398 = vmatpush1.msra.mxu0 %v459
    %1399 = vmatprep.subr.mxu0 %v464
    %1400 = vmatpush1.msra.mxu0 %v463
    %1401 = vmatprep.subr.mxu0 %v468
    %1402 = vmatpush1.msra.mxu0 %v467
    %1403 = vmatprep.subr.mxu0 %v472
    %1404 = vmatpush1.msra.mxu0 %v471
    %1405 = vmatprep.subr.mxu0 %v476
    %1406 = vmatpush1.msra.mxu0 %v475
    %1407 = vmatprep.subr.mxu0 %v480
    %1408 = vmatpush1.msra.mxu0 %v479
    %1409 = vmatprep.subr.mxu0 %v484
    %1410 = vmatpush1.msra.mxu0 %v483
    %1411 = vmatprep.subr.mxu0 %v488
    %1412 = vmatpush1.msra.mxu0 %v487
    %1413 = vmatprep.subr.mxu0 %v492
    %1414 = vmatpush1.msra.mxu0 %v491
    %1415 = vmatprep.subr.mxu0 0.0
    %1416 = vmatpush1.msra.mxu0 0.0
    %1417 = vmatprep.subr.mxu0 0.0
    %1418 = vmatpush1.msra.mxu0 0.0
    %1419 = vmatprep.subr.mxu0 0.0
    %1420 = vmatpush1.msra.mxu0 0.0
    %1421 = vmatprep.subr.mxu0 0.0
    %1422 = vmatpush1.msra.mxu0 0.0
    %1423 = vmatprep.subr.mxu0 0.0
    %1424 = vmatpush1.msra.mxu0 0.0
    %1425 = vmatprep.subr.mxu0 0.0
    %1426 = vmatpush1.msra.mxu0 0.0
    %1427 = vmatprep.subr.mxu0 0.0
    %1428 = vmatpush1.msra.mxu0 0.0
    %1429 = vmatprep.subr.mxu0 0.0
    %1430 = vmatpush1.msra.mxu0 0.0
    %1431 = vmatprep.subr.mxu0 0.0
    %1432 = vmatpush1.msra.mxu0 0.0
    %1433 = vmatprep.subr.mxu0 0.0
    %1434 = vmatpush1.msra.mxu0 0.0
    %1435 = vmatprep.subr.mxu0 0.0
    %1436 = vmatpush1.msra.mxu0 0.0
    %1437 = vmatprep.subr.mxu0 0.0
    %1438 = vmatpush1.msra.mxu0 0.0
    %1439 = vmatprep.subr.mxu0 0.0
    %1440 = vmatpush1.msra.mxu0 0.0
    %1441 = vmatprep.subr.mxu0 0.0
    %1442 = vmatpush1.msra.mxu0 0.0
    %1443 = vmatprep.subr.mxu0 0.0
    %1444 = vmatpush1.msra.mxu0 0.0
    %1445 = vmatprep.subr.mxu0 0.0
    %1446 = vmatpush1.msra.mxu0 0.0
    %1447 = vmatprep.mubr.f32.mxu0 0.0
    %1448 = vmatmul.mubr.f32.gmra.mrb[0].mxu0 %v1375
    %v1449 = vpop.f32.mrb[0].mxu0
    %v1450 = vadd.f32 0.0, %v1449
    %v1451 = vpop.f32.mrb[0].mxu0
    %v1452 = vadd.f32 0.0, %v1451
    %1453 = vdwg.mxu0
    %1454 = vmatprep.subr.mxu0 %v434
    %1455 = vmatpush1.msra.mxu0 %v433
    %1456 = vmatprep.subr.mxu0 %v438
    %1457 = vmatpush1.msra.mxu0 %v437
    %1458 = vmatprep.subr.mxu0 %v442
    %1459 = vmatpush1.msra.mxu0 %v441
    %1460 = vmatprep.subr.mxu0 %v446
    %1461 = vmatpush1.msra.mxu0 %v445
    %1462 = vmatprep.subr.mxu0 %v450
    %1463 = vmatpush1.msra.mxu0 %v449
    %1464 = vmatprep.subr.mxu0 %v454
    %1465 = vmatpush1.msra.mxu0 %v453
    %1466 = vmatprep.subr.mxu0 %v458
    %1467 = vmatpush1.msra.mxu0 %v457
    %1468 = vmatprep.subr.mxu0 %v462
    %1469 = vmatpush1.msra.mxu0 %v461
    %1470 = vmatprep.subr.mxu0 %v466
    %1471 = vmatpush1.msra.mxu0 %v465
    %1472 = vmatprep.subr.mxu0 %v470
    %1473 = vmatpush1.msra.mxu0 %v469
    %1474 = vmatprep.subr.mxu0 %v474
    %1475 = vmatpush1.msra.mxu0 %v473
    %1476 = vmatprep.subr.mxu0 %v478
    %1477 = vmatpush1.msra.mxu0 %v477
    %1478 = vmatprep.subr.mxu0 %v482
    %1479 = vmatpush1.msra.mxu0 %v481
    %1480 = vmatprep.subr.mxu0 %v486
    %1481 = vmatpush1.msra.mxu0 %v485
    %1482 = vmatprep.subr.mxu0 %v490
    %1483 = vmatpush1.msra.mxu0 %v489
    %1484 = vmatprep.subr.mxu0 %v494
    %1485 = vmatpush1.msra.mxu0 %v493
    %1486 = vmatprep.subr.mxu0 0.0
    %1487 = vmatpush1.msra.mxu0 0.0
    %1488 = vmatprep.subr.mxu0 0.0
    %1489 = vmatpush1.msra.mxu0 0.0
    %1490 = vmatprep.subr.mxu0 0.0
    %1491 = vmatpush1.msra.mxu0 0.0
    %1492 = vmatprep.subr.mxu0 0.0
    %1493 = vmatpush1.msra.mxu0 0.0
    %1494 = vmatprep.subr.mxu0 0.0
    %1495 = vmatpush1.msra.mxu0 0.0
    %1496 = vmatprep.subr.mxu0 0.0
    %1497 = vmatpush1.msra.mxu0 0.0
    %1498 = vmatprep.subr.mxu0 0.0
    %1499 = vmatpush1.msra.mxu0 0.0
    %1500 = vmatprep.subr.mxu0 0.0
    %1501 = vmatpush1.msra.mxu0 0.0
    %1502 = vmatprep.subr.mxu0 0.0
    %1503 = vmatpush1.msra.mxu0 0.0
    %1504 = vmatprep.subr.mxu0 0.0
    %1505 = vmatpush1.msra.mxu0 0.0
    %1506 = vmatprep.subr.mxu0 0.0
    %1507 = vmatpush1.msra.mxu0 0.0
    %1508 = vmatprep.subr.mxu0 0.0
    %1509 = vmatpush1.msra.mxu0 0.0
    %1510 = vmatprep.subr.mxu0 0.0
    %1511 = vmatpush1.msra.mxu0 0.0
    %1512 = vmatprep.subr.mxu0 0.0
    %1513 = vmatpush1.msra.mxu0 0.0
    %1514 = vmatprep.subr.mxu0 0.0
    %1515 = vmatpush1.msra.mxu0 0.0
    %1516 = vmatprep.subr.mxu0 0.0
    %1517 = vmatpush1.msra.mxu0 0.0
    %1518 = vmatprep.mubr.f32.mxu0 0.0
    %1519 = vmatmul.mubr.f32.gmra.mrb[0].mxu0 %v1375
    %v1520 = vpop.f32.mrb[0].mxu0
    %v1521 = vadd.f32 0.0, %v1520
    %v1522 = vpop.f32.mrb[0].mxu0
    %v1523 = vadd.f32 0.0, %v1522
    %1524 = vdwg.mxu0
    %v1525 = vadd.f32 %v1379, %v1450
    %v1526 = vadd.f32 %v1380, %v1452
    %v1527 = vadd.f32 %v1381, %v1521
    %v1528 = vadd.f32 %v1382, %v1523
    %v1529 = vxor.u32 %v1525, 2147483648
    %v1530 = vmul.f32 %v1529, 1.442695
    %v1531 = vpow.pop %v1530
    %v1532 = vadd.f32 %v1531, 1.0
    %v1533 = vrcp.pop %v1532
    %v1534 = vmul.f32 1.0, %v1533
    %v1535 = vxor.u32 %v1526, 2147483648
    %v1536 = vmul.f32 %v1535, 1.442695
    %v1537 = vpow.pop %v1536
    %v1538 = vadd.f32 %v1537, 1.0
    %v1539 = vrcp.pop %v1538
    %v1540 = vmul.f32 1.0, %v1539
    %v1541 = vtanh.pop %v1527
    %v1542 = vxor.u32 %v1528, 2147483648
    %v1543 = vmul.f32 %v1542, 1.442695
    %v1544 = vpow.pop %v1543
    %v1545 = vadd.f32 %v1544, 1.0
    %v1546 = vrcp.pop %v1545
    %v1547 = vmul.f32 1.0, %v1546
    %v1548 = vmul.f32 %v1540, %v1373
    %v1549 = vmul.f32 %v1534, %v1541
    %v1550 = vadd.f32 %v1548, %v1549
    %v1551 = vtanh.pop %v1550
    %v1552 = vmul.f32 %v1547, %v1551
    %s1553 = scalar_lea.vmem [#allocation3], 40
    %1554 = vst [vmem:[%s1553] sm:$0xff] %v1552
    %s1555 = scalar_lea.vmem [#allocation2], 192
    %v1556 = vld [vmem:[%s1555] sm:$0xff]
    %v1557 = vld [vmem:[%s1555 + $0x8] sm:$0xff]
    %v1558 = vld [vmem:[%s1555 + $0x10] sm:$0xff]
    %v1559 = vld [vmem:[%s1555 + $0x18] sm:$0xff]
    %1560 = vmatprep.subr.mxu0 %v432
    %1561 = vmatpush1.msra.mxu0 %v431
    %1562 = vmatprep.subr.mxu0 %v436
    %1563 = vmatpush1.msra.mxu0 %v435
    %1564 = vmatprep.subr.mxu0 %v440
    %1565 = vmatpush1.msra.mxu0 %v439
    %1566 = vmatprep.subr.mxu0 %v444
    %1567 = vmatpush1.msra.mxu0 %v443
    %1568 = vmatprep.subr.mxu0 %v448
    %1569 = vmatpush1.msra.mxu0 %v447
    %1570 = vmatprep.subr.mxu0 %v452
    %1571 = vmatpush1.msra.mxu0 %v451
    %1572 = vmatprep.subr.mxu0 %v456
    %1573 = vmatpush1.msra.mxu0 %v455
    %1574 = vmatprep.subr.mxu0 %v460
    %1575 = vmatpush1.msra.mxu0 %v459
    %1576 = vmatprep.subr.mxu0 %v464
    %1577 = vmatpush1.msra.mxu0 %v463
    %1578 = vmatprep.subr.mxu0 %v468
    %1579 = vmatpush1.msra.mxu0 %v467
    %1580 = vmatprep.subr.mxu0 %v472
    %1581 = vmatpush1.msra.mxu0 %v471
    %1582 = vmatprep.subr.mxu0 %v476
    %1583 = vmatpush1.msra.mxu0 %v475
    %1584 = vmatprep.subr.mxu0 %v480
    %1585 = vmatpush1.msra.mxu0 %v479
    %1586 = vmatprep.subr.mxu0 %v484
    %1587 = vmatpush1.msra.mxu0 %v483
    %1588 = vmatprep.subr.mxu0 %v488
    %1589 = vmatpush1.msra.mxu0 %v487
    %1590 = vmatprep.subr.mxu0 %v492
    %1591 = vmatpush1.msra.mxu0 %v491
    %1592 = vmatprep.subr.mxu0 0.0
    %1593 = vmatpush1.msra.mxu0 0.0
    %1594 = vmatprep.subr.mxu0 0.0
    %1595 = vmatpush1.msra.mxu0 0.0
    %1596 = vmatprep.subr.mxu0 0.0
    %1597 = vmatpush1.msra.mxu0 0.0
    %1598 = vmatprep.subr.mxu0 0.0
    %1599 = vmatpush1.msra.mxu0 0.0
    %1600 = vmatprep.subr.mxu0 0.0
    %1601 = vmatpush1.msra.mxu0 0.0
    %1602 = vmatprep.subr.mxu0 0.0
    %1603 = vmatpush1.msra.mxu0 0.0
    %1604 = vmatprep.subr.mxu0 0.0
    %1605 = vmatpush1.msra.mxu0 0.0
    %1606 = vmatprep.subr.mxu0 0.0
    %1607 = vmatpush1.msra.mxu0 0.0
    %1608 = vmatprep.subr.mxu0 0.0
    %1609 = vmatpush1.msra.mxu0 0.0
    %1610 = vmatprep.subr.mxu0 0.0
    %1611 = vmatpush1.msra.mxu0 0.0
    %1612 = vmatprep.subr.mxu0 0.0
    %1613 = vmatpush1.msra.mxu0 0.0
    %1614 = vmatprep.subr.mxu0 0.0
    %1615 = vmatpush1.msra.mxu0 0.0
    %1616 = vmatprep.subr.mxu0 0.0
    %1617 = vmatpush1.msra.mxu0 0.0
    %1618 = vmatprep.subr.mxu0 0.0
    %1619 = vmatpush1.msra.mxu0 0.0
    %1620 = vmatprep.subr.mxu0 0.0
    %1621 = vmatpush1.msra.mxu0 0.0
    %1622 = vmatprep.subr.mxu0 0.0
    %1623 = vmatpush1.msra.mxu0 0.0
    %1624 = vmatprep.mubr.f32.mxu0 0.0
    %1625 = vmatmul.mubr.f32.gmra.mrb[0].mxu0 %v1552
    %v1626 = vpop.f32.mrb[0].mxu0
    %v1627 = vadd.f32 0.0, %v1626
    %v1628 = vpop.f32.mrb[0].mxu0
    %v1629 = vadd.f32 0.0, %v1628
    %1630 = vdwg.mxu0
    %1631 = vmatprep.subr.mxu0 %v434
    %1632 = vmatpush1.msra.mxu0 %v433
    %1633 = vmatprep.subr.mxu0 %v438
    %1634 = vmatpush1.msra.mxu0 %v437
    %1635 = vmatprep.subr.mxu0 %v442
    %1636 = vmatpush1.msra.mxu0 %v441
    %1637 = vmatprep.subr.mxu0 %v446
    %1638 = vmatpush1.msra.mxu0 %v445
    %1639 = vmatprep.subr.mxu0 %v450
    %1640 = vmatpush1.msra.mxu0 %v449
    %1641 = vmatprep.subr.mxu0 %v454
    %1642 = vmatpush1.msra.mxu0 %v453
    %1643 = vmatprep.subr.mxu0 %v458
    %1644 = vmatpush1.msra.mxu0 %v457
    %1645 = vmatprep.subr.mxu0 %v462
    %1646 = vmatpush1.msra.mxu0 %v461
    %1647 = vmatprep.subr.mxu0 %v466
    %1648 = vmatpush1.msra.mxu0 %v465
    %1649 = vmatprep.subr.mxu0 %v470
    %1650 = vmatpush1.msra.mxu0 %v469
    %1651 = vmatprep.subr.mxu0 %v474
    %1652 = vmatpush1.msra.mxu0 %v473
    %1653 = vmatprep.subr.mxu0 %v478
    %1654 = vmatpush1.msra.mxu0 %v477
    %1655 = vmatprep.subr.mxu0 %v482
    %1656 = vmatpush1.msra.mxu0 %v481
    %1657 = vmatprep.subr.mxu0 %v486
    %1658 = vmatpush1.msra.mxu0 %v485
    %1659 = vmatprep.subr.mxu0 %v490
    %1660 = vmatpush1.msra.mxu0 %v489
    %1661 = vmatprep.subr.mxu0 %v494
    %1662 = vmatpush1.msra.mxu0 %v493
    %1663 = vmatprep.subr.mxu0 0.0
    %1664 = vmatpush1.msra.mxu0 0.0
    %1665 = vmatprep.subr.mxu0 0.0
    %1666 = vmatpush1.msra.mxu0 0.0
    %1667 = vmatprep.subr.mxu0 0.0
    %1668 = vmatpush1.msra.mxu0 0.0
    %1669 = vmatprep.subr.mxu0 0.0
    %1670 = vmatpush1.msra.mxu0 0.0
    %1671 = vmatprep.subr.mxu0 0.0
    %1672 = vmatpush1.msra.mxu0 0.0
    %1673 = vmatprep.subr.mxu0 0.0
    %1674 = vmatpush1.msra.mxu0 0.0
    %1675 = vmatprep.subr.mxu0 0.0
    %1676 = vmatpush1.msra.mxu0 0.0
    %1677 = vmatprep.subr.mxu0 0.0
    %1678 = vmatpush1.msra.mxu0 0.0
    %1679 = vmatprep.subr.mxu0 0.0
    %1680 = vmatpush1.msra.mxu0 0.0
    %1681 = vmatprep.subr.mxu0 0.0
    %1682 = vmatpush1.msra.mxu0 0.0
    %1683 = vmatprep.subr.mxu0 0.0
    %1684 = vmatpush1.msra.mxu0 0.0
    %1685 = vmatprep.subr.mxu0 0.0
    %1686 = vmatpush1.msra.mxu0 0.0
    %1687 = vmatprep.subr.mxu0 0.0
    %1688 = vmatpush1.msra.mxu0 0.0
    %1689 = vmatprep.subr.mxu0 0.0
    %1690 = vmatpush1.msra.mxu0 0.0
    %1691 = vmatprep.subr.mxu0 0.0
    %1692 = vmatpush1.msra.mxu0 0.0
    %1693 = vmatprep.subr.mxu0 0.0
    %1694 = vmatpush1.msra.mxu0 0.0
    %1695 = vmatprep.mubr.f32.mxu0 0.0
    %1696 = vmatmul.mubr.f32.gmra.mrb[0].mxu0 %v1552
    %v1697 = vpop.f32.mrb[0].mxu0
    %v1698 = vadd.f32 0.0, %v1697
    %v1699 = vpop.f32.mrb[0].mxu0
    %v1700 = vadd.f32 0.0, %v1699
    %1701 = vdwg.mxu0
    %v1702 = vadd.f32 %v1556, %v1627
    %v1703 = vadd.f32 %v1557, %v1629
    %v1704 = vadd.f32 %v1558, %v1698
    %v1705 = vadd.f32 %v1559, %v1700
    %v1706 = vxor.u32 %v1702, 2147483648
    %v1707 = vmul.f32 %v1706, 1.442695
    %v1708 = vpow.pop %v1707
    %v1709 = vadd.f32 %v1708, 1.0
    %v1710 = vrcp.pop %v1709
    %v1711 = vmul.f32 1.0, %v1710
    %v1712 = vxor.u32 %v1703, 2147483648
    %v1713 = vmul.f32 %v1712, 1.442695
    %v1714 = vpow.pop %v1713
    %v1715 = vadd.f32 %v1714, 1.0
    %v1716 = vrcp.pop %v1715
    %v1717 = vmul.f32 1.0, %v1716
    %v1718 = vtanh.pop %v1704
    %v1719 = vxor.u32 %v1705, 2147483648
    %v1720 = vmul.f32 %v1719, 1.442695
    %v1721 = vpow.pop %v1720
    %v1722 = vadd.f32 %v1721, 1.0
    %v1723 = vrcp.pop %v1722
    %v1724 = vmul.f32 1.0, %v1723
    %v1725 = vmul.f32 %v1717, %v1550
    %v1726 = vmul.f32 %v1711, %v1718
    %v1727 = vadd.f32 %v1725, %v1726
    %v1728 = vtanh.pop %v1727
    %v1729 = vmul.f32 %v1724, %v1728
    %s1730 = scalar_lea.vmem [#allocation3], 48
    %1731 = vst [vmem:[%s1730] sm:$0xff] %v1729
    %s1732 = scalar_lea.vmem [#allocation2], 224
    %v1733 = vld [vmem:[%s1732] sm:$0xff]
    %v1734 = vld [vmem:[%s1732 + $0x8] sm:$0xff]
    %v1735 = vld [vmem:[%s1732 + $0x10] sm:$0xff]
    %v1736 = vld [vmem:[%s1732 + $0x18] sm:$0xff]
    %1737 = vmatprep.subr.mxu0 %v432
    %1738 = vmatpush1.msra.mxu0 %v431
    %1739 = vmatprep.subr.mxu0 %v436
    %1740 = vmatpush1.msra.mxu0 %v435
    %1741 = vmatprep.subr.mxu0 %v440
    %1742 = vmatpush1.msra.mxu0 %v439
    %1743 = vmatprep.subr.mxu0 %v444
    %1744 = vmatpush1.msra.mxu0 %v443
    %1745 = vmatprep.subr.mxu0 %v448
    %1746 = vmatpush1.msra.mxu0 %v447
    %1747 = vmatprep.subr.mxu0 %v452
    %1748 = vmatpush1.msra.mxu0 %v451
    %1749 = vmatprep.subr.mxu0 %v456
    %1750 = vmatpush1.msra.mxu0 %v455
    %1751 = vmatprep.subr.mxu0 %v460
    %1752 = vmatpush1.msra.mxu0 %v459
    %1753 = vmatprep.subr.mxu0 %v464
    %1754 = vmatpush1.msra.mxu0 %v463
    %1755 = vmatprep.subr.mxu0 %v468
    %1756 = vmatpush1.msra.mxu0 %v467
    %1757 = vmatprep.subr.mxu0 %v472
    %1758 = vmatpush1.msra.mxu0 %v471
    %1759 = vmatprep.subr.mxu0 %v476
    %1760 = vmatpush1.msra.mxu0 %v475
    %1761 = vmatprep.subr.mxu0 %v480
    %1762 = vmatpush1.msra.mxu0 %v479
    %1763 = vmatprep.subr.mxu0 %v484
    %1764 = vmatpush1.msra.mxu0 %v483
    %1765 = vmatprep.subr.mxu0 %v488
    %1766 = vmatpush1.msra.mxu0 %v487
    %1767 = vmatprep.subr.mxu0 %v492
    %1768 = vmatpush1.msra.mxu0 %v491
    %1769 = vmatprep.subr.mxu0 0.0
    %1770 = vmatpush1.msra.mxu0 0.0
    %1771 = vmatprep.subr.mxu0 0.0
    %1772 = vmatpush1.msra.mxu0 0.0
    %1773 = vmatprep.subr.mxu0 0.0
    %1774 = vmatpush1.msra.mxu0 0.0
    %1775 = vmatprep.subr.mxu0 0.0
    %1776 = vmatpush1.msra.mxu0 0.0
    %1777 = vmatprep.subr.mxu0 0.0
    %1778 = vmatpush1.msra.mxu0 0.0
    %1779 = vmatprep.subr.mxu0 0.0
    %1780 = vmatpush1.msra.mxu0 0.0
    %1781 = vmatprep.subr.mxu0 0.0
    %1782 = vmatpush1.msra.mxu0 0.0
    %1783 = vmatprep.subr.mxu0 0.0
    %1784 = vmatpush1.msra.mxu0 0.0
    %1785 = vmatprep.subr.mxu0 0.0
    %1786 = vmatpush1.msra.mxu0 0.0
    %1787 = vmatprep.subr.mxu0 0.0
    %1788 = vmatpush1.msra.mxu0 0.0
    %1789 = vmatprep.subr.mxu0 0.0
    %1790 = vmatpush1.msra.mxu0 0.0
    %1791 = vmatprep.subr.mxu0 0.0
    %1792 = vmatpush1.msra.mxu0 0.0
    %1793 = vmatprep.subr.mxu0 0.0
    %1794 = vmatpush1.msra.mxu0 0.0
    %1795 = vmatprep.subr.mxu0 0.0
    %1796 = vmatpush1.msra.mxu0 0.0
    %1797 = vmatprep.subr.mxu0 0.0
    %1798 = vmatpush1.msra.mxu0 0.0
    %1799 = vmatprep.subr.mxu0 0.0
    %1800 = vmatpush1.msra.mxu0 0.0
    %1801 = vmatprep.mubr.f32.mxu0 0.0
    %1802 = vmatmul.mubr.f32.gmra.mrb[0].mxu0 %v1729
    %v1803 = vpop.f32.mrb[0].mxu0
    %v1804 = vadd.f32 0.0, %v1803
    %v1805 = vpop.f32.mrb[0].mxu0
    %v1806 = vadd.f32 0.0, %v1805
    %1807 = vdwg.mxu0
    %1808 = vmatprep.subr.mxu0 %v434
    %1809 = vmatpush1.msra.mxu0 %v433
    %1810 = vmatprep.subr.mxu0 %v438
    %1811 = vmatpush1.msra.mxu0 %v437
    %1812 = vmatprep.subr.mxu0 %v442
    %1813 = vmatpush1.msra.mxu0 %v441
    %1814 = vmatprep.subr.mxu0 %v446
    %1815 = vmatpush1.msra.mxu0 %v445
    %1816 = vmatprep.subr.mxu0 %v450
    %1817 = vmatpush1.msra.mxu0 %v449
    %1818 = vmatprep.subr.mxu0 %v454
    %1819 = vmatpush1.msra.mxu0 %v453
    %1820 = vmatprep.subr.mxu0 %v458
    %1821 = vmatpush1.msra.mxu0 %v457
    %1822 = vmatprep.subr.mxu0 %v462
    %1823 = vmatpush1.msra.mxu0 %v461
    %1824 = vmatprep.subr.mxu0 %v466
    %1825 = vmatpush1.msra.mxu0 %v465
    %1826 = vmatprep.subr.mxu0 %v470
    %1827 = vmatpush1.msra.mxu0 %v469
    %1828 = vmatprep.subr.mxu0 %v474
    %1829 = vmatpush1.msra.mxu0 %v473
    %1830 = vmatprep.subr.mxu0 %v478
    %1831 = vmatpush1.msra.mxu0 %v477
    %1832 = vmatprep.subr.mxu0 %v482
    %1833 = vmatpush1.msra.mxu0 %v481
    %1834 = vmatprep.subr.mxu0 %v486
    %1835 = vmatpush1.msra.mxu0 %v485
    %1836 = vmatprep.subr.mxu0 %v490
    %1837 = vmatpush1.msra.mxu0 %v489
    %1838 = vmatprep.subr.mxu0 %v494
    %1839 = vmatpush1.msra.mxu0 %v493
    %1840 = vmatprep.subr.mxu0 0.0
    %1841 = vmatpush1.msra.mxu0 0.0
    %1842 = vmatprep.subr.mxu0 0.0
    %1843 = vmatpush1.msra.mxu0 0.0
    %1844 = vmatprep.subr.mxu0 0.0
    %1845 = vmatpush1.msra.mxu0 0.0
    %1846 = vmatprep.subr.mxu0 0.0
    %1847 = vmatpush1.msra.mxu0 0.0
    %1848 = vmatprep.subr.mxu0 0.0
    %1849 = vmatpush1.msra.mxu0 0.0
    %1850 = vmatprep.subr.mxu0 0.0
    %1851 = vmatpush1.msra.mxu0 0.0
    %1852 = vmatprep.subr.mxu0 0.0
    %1853 = vmatpush1.msra.mxu0 0.0
    %1854 = vmatprep.subr.mxu0 0.0
    %1855 = vmatpush1.msra.mxu0 0.0
    %1856 = vmatprep.subr.mxu0 0.0
    %1857 = vmatpush1.msra.mxu0 0.0
    %1858 = vmatprep.subr.mxu0 0.0
    %1859 = vmatpush1.msra.mxu0 0.0
    %1860 = vmatprep.subr.mxu0 0.0
    %1861 = vmatpush1.msra.mxu0 0.0
    %1862 = vmatprep.subr.mxu0 0.0
    %1863 = vmatpush1.msra.mxu0 0.0
    %1864 = vmatprep.subr.mxu0 0.0
    %1865 = vmatpush1.msra.mxu0 0.0
    %1866 = vmatprep.subr.mxu0 0.0
    %1867 = vmatpush1.msra.mxu0 0.0
    %1868 = vmatprep.subr.mxu0 0.0
    %1869 = vmatpush1.msra.mxu0 0.0
    %1870 = vmatprep.subr.mxu0 0.0
    %1871 = vmatpush1.msra.mxu0 0.0
    %1872 = vmatprep.mubr.f32.mxu0 0.0
    %1873 = vmatmul.mubr.f32.gmra.mrb[0].mxu0 %v1729
    %v1874 = vpop.f32.mrb[0].mxu0
    %v1875 = vadd.f32 0.0, %v1874
    %v1876 = vpop.f32.mrb[0].mxu0
    %v1877 = vadd.f32 0.0, %v1876
    %1878 = vdwg.mxu0
    %v1879 = vadd.f32 %v1733, %v1804
    %v1880 = vadd.f32 %v1734, %v1806
    %v1881 = vadd.f32 %v1735, %v1875
    %v1882 = vadd.f32 %v1736, %v1877
    %v1883 = vxor.u32 %v1879, 2147483648
    %v1884 = vmul.f32 %v1883, 1.442695
    %v1885 = vpow.pop %v1884
    %v1886 = vadd.f32 %v1885, 1.0
    %v1887 = vrcp.pop %v1886
    %v1888 = vmul.f32 1.0, %v1887
    %v1889 = vxor.u32 %v1880, 2147483648
    %v1890 = vmul.f32 %v1889, 1.442695
    %v1891 = vpow.pop %v1890
    %v1892 = vadd.f32 %v1891, 1.0
    %v1893 = vrcp.pop %v1892
    %v1894 = vmul.f32 1.0, %v1893
    %v1895 = vtanh.pop %v1881
    %v1896 = vxor.u32 %v1882, 2147483648
    %v1897 = vmul.f32 %v1896, 1.442695
    %v1898 = vpow.pop %v1897
    %v1899 = vadd.f32 %v1898, 1.0
    %v1900 = vrcp.pop %v1899
    %v1901 = vmul.f32 1.0, %v1900
    %v1902 = vmul.f32 %v1894, %v1727
    %v1903 = vmul.f32 %v1888, %v1895
    %v1904 = vadd.f32 %v1902, %v1903
    %v1905 = vtanh.pop %v1904
    %v1906 = vmul.f32 %v1901, %v1905
    %s1907 = scalar_lea.vmem [#allocation3], 56
    %1908 = vst [vmem:[%s1907] sm:$0xff] %v1906
    %v1909 = vld [vmem:[#allocation3] sm:$0xff]
    %v1910 = vld [vmem:[#allocation3 + $0x8] sm:$0xff]
    %v1911 = vld [vmem:[#allocation3 + $0x10] sm:$0xff]
    %v1912 = vld [vmem:[#allocation3 + $0x18] sm:$0xff]
    %v1913 = vld [vmem:[#allocation3 + $0x20] sm:$0xff]
    %v1914 = vld [vmem:[#allocation3 + $0x28] sm:$0xff]
    %v1915 = vld [vmem:[#allocation3 + $0x30] sm:$0xff]
    %v1916 = vld [vmem:[#allocation3 + $0x38] sm:$0xff]
    %s1917 = scalar_lea.vmem [#allocation8], 512
    %v1918 = vld [vmem:[%s1917] sm:$0xff]
    %v1919 = vld [vmem:[%s1917 + $0x8] sm:$0xff]
    %v1920 = vld [vmem:[%s1917 + $0x10] sm:$0xff]
    %v1921 = vld [vmem:[%s1917 + $0x18] sm:$0xff]
    %v1922 = vld [vmem:[%s1917 + $0x20] sm:$0xff]
    %v1923 = vld [vmem:[%s1917 + $0x28] sm:$0xff]
    %v1924 = vld [vmem:[%s1917 + $0x30] sm:$0xff]
    %v1925 = vld [vmem:[%s1917 + $0x38] sm:$0xff]
    %v1926 = vld [vmem:[%s1917 + $0x40] sm:$0xff]
    %v1927 = vld [vmem:[%s1917 + $0x48] sm:$0xff]
    %v1928 = vld [vmem:[%s1917 + $0x50] sm:$0xff]
    %v1929 = vld [vmem:[%s1917 + $0x58] sm:$0xff]
    %v1930 = vld [vmem:[%s1917 + $0x60] sm:$0xff]
    %v1931 = vld [vmem:[%s1917 + $0x68] sm:$0xff]
    %v1932 = vld [vmem:[%s1917 + $0x70] sm:$0xff]
    %v1933 = vld [vmem:[%s1917 + $0x78] sm:$0xff]
    %v1934 = vld [vmem:[%s1917 + $0x80] sm:$0xff]
    %v1935 = vld [vmem:[%s1917 + $0x88] sm:$0xff]
    %v1936 = vld [vmem:[%s1917 + $0x90] sm:$0xff]
    %v1937 = vld [vmem:[%s1917 + $0x98] sm:$0xff]
    %v1938 = vld [vmem:[%s1917 + $0xa0] sm:$0xff]
    %v1939 = vld [vmem:[%s1917 + $0xa8] sm:$0xff]
    %v1940 = vld [vmem:[%s1917 + $0xb0] sm:$0xff]
    %v1941 = vld [vmem:[%s1917 + $0xb8] sm:$0xff]
    %v1942 = vld [vmem:[%s1917 + $0xc0] sm:$0xff]
    %v1943 = vld [vmem:[%s1917 + $0xc8] sm:$0xff]
    %v1944 = vld [vmem:[%s1917 + $0xd0] sm:$0xff]
    %v1945 = vld [vmem:[%s1917 + $0xd8] sm:$0xff]
    %v1946 = vld [vmem:[%s1917 + $0xe0] sm:$0xff]
    %v1947 = vld [vmem:[%s1917 + $0xe8] sm:$0xff]
    %v1948 = vld [vmem:[%s1917 + $0xf0] sm:$0xff]
    %v1949 = vld [vmem:[%s1917 + $0xf8] sm:$0xff]
    %v1950 = vld [vmem:[%s1917 + $0x100] sm:$0xff]
    %v1951 = vld [vmem:[%s1917 + $0x108] sm:$0xff]
    %v1952 = vld [vmem:[%s1917 + $0x110] sm:$0xff]
    %v1953 = vld [vmem:[%s1917 + $0x118] sm:$0xff]
    %v1954 = vld [vmem:[%s1917 + $0x120] sm:$0xff]
    %v1955 = vld [vmem:[%s1917 + $0x128] sm:$0xff]
    %v1956 = vld [vmem:[%s1917 + $0x130] sm:$0xff]
    %v1957 = vld [vmem:[%s1917 + $0x138] sm:$0xff]
    %v1958 = vld [vmem:[%s1917 + $0x140] sm:$0xff]
    %v1959 = vld [vmem:[%s1917 + $0x148] sm:$0xff]
    %v1960 = vld [vmem:[%s1917 + $0x150] sm:$0xff]
    %v1961 = vld [vmem:[%s1917 + $0x158] sm:$0xff]
    %v1962 = vld [vmem:[%s1917 + $0x160] sm:$0xff]
    %v1963 = vld [vmem:[%s1917 + $0x168] sm:$0xff]
    %v1964 = vld [vmem:[%s1917 + $0x170] sm:$0xff]
    %v1965 = vld [vmem:[%s1917 + $0x178] sm:$0xff]
    %v1966 = vld [vmem:[%s1917 + $0x180] sm:$0xff]
    %v1967 = vld [vmem:[%s1917 + $0x188] sm:$0xff]
    %v1968 = vld [vmem:[%s1917 + $0x190] sm:$0xff]
    %v1969 = vld [vmem:[%s1917 + $0x198] sm:$0xff]
    %v1970 = vld [vmem:[%s1917 + $0x1a0] sm:$0xff]
    %v1971 = vld [vmem:[%s1917 + $0x1a8] sm:$0xff]
    %v1972 = vld [vmem:[%s1917 + $0x1b0] sm:$0xff]
    %v1973 = vld [vmem:[%s1917 + $0x1b8] sm:$0xff]
    %v1974 = vld [vmem:[%s1917 + $0x1c0] sm:$0xff]
    %v1975 = vld [vmem:[%s1917 + $0x1c8] sm:$0xff]
    %v1976 = vld [vmem:[%s1917 + $0x1d0] sm:$0xff]
    %v1977 = vld [vmem:[%s1917 + $0x1d8] sm:$0xff]
    %v1978 = vld [vmem:[%s1917 + $0x1e0] sm:$0xff]
    %v1979 = vld [vmem:[%s1917 + $0x1e8] sm:$0xff]
    %v1980 = vld [vmem:[%s1917 + $0x1f0] sm:$0xff]
    %v1981 = vld [vmem:[%s1917 + $0x1f8] sm:$0xff]
    %s1982 = scalar_lea.vmem %s3, 4
    %v1983 = vld [vmem:[%s1982] sm:$0xf]
    %v1985 = vlaneseq
    %v1986 = vshrl.u32 %v1985, 7
    %v1987 = vsub.s32 0, %v1986
    %v1988 = vrot.slane %v1983, %v1987
    %v1989 = vlaneseq
    %v1990 = vshrl.u32 %v1989, 7
    %v1991 = vsub.s32 1, %v1990
    %v1992 = vrot.slane %v1983, %v1991
    %v1993 = vlaneseq
    %v1994 = vshrl.u32 %v1993, 7
    %v1995 = vsub.s32 2, %v1994
    %v1996 = vrot.slane %v1983, %v1995
    %v1997 = vlaneseq
    %v1998 = vshrl.u32 %v1997, 7
    %v1999 = vsub.s32 3, %v1998
    %v2000 = vrot.slane %v1983, %v1999
    %2005 = vmatprep.subr.mxu0 %v1919
    %2006 = vmatpush1.msra.mxu0 %v1918
    %2007 = vmatprep.subr.mxu0 %v1923
    %2008 = vmatpush1.msra.mxu0 %v1922
    %2009 = vmatprep.subr.mxu0 %v1927
    %2010 = vmatpush1.msra.mxu0 %v1926
    %2011 = vmatprep.subr.mxu0 %v1931
    %2012 = vmatpush1.msra.mxu0 %v1930
    %2013 = vmatprep.subr.mxu0 %v1935
    %2014 = vmatpush1.msra.mxu0 %v1934
    %2015 = vmatprep.subr.mxu0 %v1939
    %2016 = vmatpush1.msra.mxu0 %v1938
    %2017 = vmatprep.subr.mxu0 %v1943
    %2018 = vmatpush1.msra.mxu0 %v1942
    %2019 = vmatprep.subr.mxu0 %v1947
    %2020 = vmatpush1.msra.mxu0 %v1946
    %2021 = vmatprep.subr.mxu0 %v1951
    %2022 = vmatpush1.msra.mxu0 %v1950
    %2023 = vmatprep.subr.mxu0 %v1955
    %2024 = vmatpush1.msra.mxu0 %v1954
    %2025 = vmatprep.subr.mxu0 %v1959
    %2026 = vmatpush1.msra.mxu0 %v1958
    %2027 = vmatprep.subr.mxu0 %v1963
    %2028 = vmatpush1.msra.mxu0 %v1962
    %2029 = vmatprep.subr.mxu0 %v1967
    %2030 = vmatpush1.msra.mxu0 %v1966
    %2031 = vmatprep.subr.mxu0 %v1971
    %2032 = vmatpush1.msra.mxu0 %v1970
    %2033 = vmatprep.subr.mxu0 %v1975
    %2034 = vmatpush1.msra.mxu0 %v1974
    %2035 = vmatprep.subr.mxu0 %v1979
    %2036 = vmatpush1.msra.mxu0 %v1978
    %2037 = vmatprep.subr.mxu0 0.0
    %2038 = vmatpush1.msra.mxu0 0.0
    %2039 = vmatprep.subr.mxu0 0.0
    %2040 = vmatpush1.msra.mxu0 0.0
    %2041 = vmatprep.subr.mxu0 0.0
    %2042 = vmatpush1.msra.mxu0 0.0
    %2043 = vmatprep.subr.mxu0 0.0
    %2044 = vmatpush1.msra.mxu0 0.0
    %2045 = vmatprep.subr.mxu0 0.0
    %2046 = vmatpush1.msra.mxu0 0.0
    %2047 = vmatprep.subr.mxu0 0.0
    %2048 = vmatpush1.msra.mxu0 0.0
    %2049 = vmatprep.subr.mxu0 0.0
    %2050 = vmatpush1.msra.mxu0 0.0
    %2051 = vmatprep.subr.mxu0 0.0
    %2052 = vmatpush1.msra.mxu0 0.0
    %2053 = vmatprep.subr.mxu0 0.0
    %2054 = vmatpush1.msra.mxu0 0.0
    %2055 = vmatprep.subr.mxu0 0.0
    %2056 = vmatpush1.msra.mxu0 0.0
    %2057 = vmatprep.subr.mxu0 0.0
    %2058 = vmatpush1.msra.mxu0 0.0
    %2059 = vmatprep.subr.mxu0 0.0
    %2060 = vmatpush1.msra.mxu0 0.0
    %2061 = vmatprep.subr.mxu0 0.0
    %2062 = vmatpush1.msra.mxu0 0.0
    %2063 = vmatprep.subr.mxu0 0.0
    %2064 = vmatpush1.msra.mxu0 0.0
    %2065 = vmatprep.subr.mxu0 0.0
    %2066 = vmatpush1.msra.mxu0 0.0
    %2067 = vmatprep.subr.mxu0 0.0
    %2068 = vmatpush1.msra.mxu0 0.0
    %2069 = vmatprep.mubr.f32.mxu0 0.0
    %2070 = vmatmul.mubr.f32.gmra.mrb[0].mxu0 %v1909
    %v2071 = vpop.f32.mrb[0].mxu0
    %v2072 = vadd.f32 %v1988, %v2071
    %v2073 = vpop.f32.mrb[0].mxu0
    %v2074 = vadd.f32 %v1992, %v2073
    %2075 = vmatprep.mubr.f32.mxu0 0.0
    %2076 = vmatmul.mubr.f32.gmra.mrb[0].mxu0 %v1910
    %v2077 = vpop.f32.mrb[0].mxu0
    %v2078 = vadd.f32 %v1988, %v2077
    %v2079 = vpop.f32.mrb[0].mxu0
    %v2080 = vadd.f32 %v1992, %v2079
    %2081 = vmatprep.mubr.f32.mxu0 0.0
    %2082 = vmatmul.mubr.f32.gmra.mrb[0].mxu0 %v1911
    %v2083 = vpop.f32.mrb[0].mxu0
    %v2084 = vadd.f32 %v1988, %v2083
    %v2085 = vpop.f32.mrb[0].mxu0
    %v2086 = vadd.f32 %v1992, %v2085
    %2087 = vmatprep.mubr.f32.mxu0 0.0
    %2088 = vmatmul.mubr.f32.gmra.mrb[0].mxu0 %v1912
    %v2089 = vpop.f32.mrb[0].mxu0
    %v2090 = vadd.f32 %v1988, %v2089
    %v2091 = vpop.f32.mrb[0].mxu0
    %v2092 = vadd.f32 %v1992, %v2091
    %2093 = vmatprep.mubr.f32.mxu0 0.0
    %2094 = vmatmul.mubr.f32.gmra.mrb[0].mxu0 %v1913
    %v2095 = vpop.f32.mrb[0].mxu0
    %v2096 = vadd.f32 %v1988, %v2095
    %v2097 = vpop.f32.mrb[0].mxu0
    %v2098 = vadd.f32 %v1992, %v2097
    %2099 = vmatprep.mubr.f32.mxu0 0.0
    %2100 = vmatmul.mubr.f32.gmra.mrb[0].mxu0 %v1914
    %v2101 = vpop.f32.mrb[0].mxu0
    %v2102 = vadd.f32 %v1988, %v2101
    %v2103 = vpop.f32.mrb[0].mxu0
    %v2104 = vadd.f32 %v1992, %v2103
    %2105 = vmatprep.mubr.f32.mxu0 0.0
    %2106 = vmatmul.mubr.f32.gmra.mrb[0].mxu0 %v1915
    %v2107 = vpop.f32.mrb[0].mxu0
    %v2108 = vadd.f32 %v1988, %v2107
    %v2109 = vpop.f32.mrb[0].mxu0
    %v2110 = vadd.f32 %v1992, %v2109
    %2111 = vmatprep.mubr.f32.mxu0 0.0
    %2112 = vmatmul.mubr.f32.gmra.mrb[0].mxu0 %v1916
    %v2113 = vpop.f32.mrb[0].mxu0
    %v2114 = vadd.f32 %v1988, %v2113
    %v2115 = vpop.f32.mrb[0].mxu0
    %v2116 = vadd.f32 %v1992, %v2115
    %2117 = vdwg.mxu0
    %2118 = vmatprep.subr.mxu0 %v1921
    %2119 = vmatpush1.msra.mxu0 %v1920
    %2120 = vmatprep.subr.mxu0 %v1925
    %2121 = vmatpush1.msra.mxu0 %v1924
    %2122 = vmatprep.subr.mxu0 %v1929
    %2123 = vmatpush1.msra.mxu0 %v1928
    %2124 = vmatprep.subr.mxu0 %v1933
    %2125 = vmatpush1.msra.mxu0 %v1932
    %2126 = vmatprep.subr.mxu0 %v1937
    %2127 = vmatpush1.msra.mxu0 %v1936
    %2128 = vmatprep.subr.mxu0 %v1941
    %2129 = vmatpush1.msra.mxu0 %v1940
    %2130 = vmatprep.subr.mxu0 %v1945
    %2131 = vmatpush1.msra.mxu0 %v1944
    %2132 = vmatprep.subr.mxu0 %v1949
    %2133 = vmatpush1.msra.mxu0 %v1948
    %2134 = vmatprep.subr.mxu0 %v1953
    %2135 = vmatpush1.msra.mxu0 %v1952
    %2136 = vmatprep.subr.mxu0 %v1957
    %2137 = vmatpush1.msra.mxu0 %v1956
    %2138 = vmatprep.subr.mxu0 %v1961
    %2139 = vmatpush1.msra.mxu0 %v1960
    %2140 = vmatprep.subr.mxu0 %v1965
    %2141 = vmatpush1.msra.mxu0 %v1964
    %2142 = vmatprep.subr.mxu0 %v1969
    %2143 = vmatpush1.msra.mxu0 %v1968
    %2144 = vmatprep.subr.mxu0 %v1973
    %2145 = vmatpush1.msra.mxu0 %v1972
    %2146 = vmatprep.subr.mxu0 %v1977
    %2147 = vmatpush1.msra.mxu0 %v1976
    %2148 = vmatprep.subr.mxu0 %v1981
    %2149 = vmatpush1.msra.mxu0 %v1980
    %2150 = vmatprep.subr.mxu0 0.0
    %2151 = vmatpush1.msra.mxu0 0.0
    %2152 = vmatprep.subr.mxu0 0.0
    %2153 = vmatpush1.msra.mxu0 0.0
    %2154 = vmatprep.subr.mxu0 0.0
    %2155 = vmatpush1.msra.mxu0 0.0
    %2156 = vmatprep.subr.mxu0 0.0
    %2157 = vmatpush1.msra.mxu0 0.0
    %2158 = vmatprep.subr.mxu0 0.0
    %2159 = vmatpush1.msra.mxu0 0.0
    %2160 = vmatprep.subr.mxu0 0.0
    %2161 = vmatpush1.msra.mxu0 0.0
    %2162 = vmatprep.subr.mxu0 0.0
    %2163 = vmatpush1.msra.mxu0 0.0
    %2164 = vmatprep.subr.mxu0 0.0
    %2165 = vmatpush1.msra.mxu0 0.0
    %2166 = vmatprep.subr.mxu0 0.0
    %2167 = vmatpush1.msra.mxu0 0.0
    %2168 = vmatprep.subr.mxu0 0.0
    %2169 = vmatpush1.msra.mxu0 0.0
    %2170 = vmatprep.subr.mxu0 0.0
    %2171 = vmatpush1.msra.mxu0 0.0
    %2172 = vmatprep.subr.mxu0 0.0
    %2173 = vmatpush1.msra.mxu0 0.0
    %2174 = vmatprep.subr.mxu0 0.0
    %2175 = vmatpush1.msra.mxu0 0.0
    %2176 = vmatprep.subr.mxu0 0.0
    %2177 = vmatpush1.msra.mxu0 0.0
    %2178 = vmatprep.subr.mxu0 0.0
    %2179 = vmatpush1.msra.mxu0 0.0
    %2180 = vmatprep.subr.mxu0 0.0
    %2181 = vmatpush1.msra.mxu0 0.0
    %2182 = vmatprep.mubr.f32.mxu0 0.0
    %2183 = vmatmul.mubr.f32.gmra.mrb[0].mxu0 %v1909
    %v2184 = vpop.f32.mrb[0].mxu0
    %v2185 = vadd.f32 %v1996, %v2184
    %v2186 = vpop.f32.mrb[0].mxu0
    %v2187 = vadd.f32 %v2000, %v2186
    %2188 = vmatprep.mubr.f32.mxu0 0.0
    %2189 = vmatmul.mubr.f32.gmra.mrb[0].mxu0 %v1910
    %v2190 = vpop.f32.mrb[0].mxu0
    %v2191 = vadd.f32 %v1996, %v2190
    %v2192 = vpop.f32.mrb[0].mxu0
    %v2193 = vadd.f32 %v2000, %v2192
    %2194 = vmatprep.mubr.f32.mxu0 0.0
    %2195 = vmatmul.mubr.f32.gmra.mrb[0].mxu0 %v1911
    %v2196 = vpop.f32.mrb[0].mxu0
    %v2197 = vadd.f32 %v1996, %v2196
    %v2198 = vpop.f32.mrb[0].mxu0
    %v2199 = vadd.f32 %v2000, %v2198
    %2200 = vmatprep.mubr.f32.mxu0 0.0
    %2201 = vmatmul.mubr.f32.gmra.mrb[0].mxu0 %v1912
    %v2202 = vpop.f32.mrb[0].mxu0
    %v2203 = vadd.f32 %v1996, %v2202
    %v2204 = vpop.f32.mrb[0].mxu0
    %v2205 = vadd.f32 %v2000, %v2204
    %2206 = vmatprep.mubr.f32.mxu0 0.0
    %2207 = vmatmul.mubr.f32.gmra.mrb[0].mxu0 %v1913
    %v2208 = vpop.f32.mrb[0].mxu0
    %v2209 = vadd.f32 %v1996, %v2208
    %v2210 = vpop.f32.mrb[0].mxu0
    %v2211 = vadd.f32 %v2000, %v2210
    %2212 = vmatprep.mubr.f32.mxu0 0.0
    %2213 = vmatmul.mubr.f32.gmra.mrb[0].mxu0 %v1914
    %v2214 = vpop.f32.mrb[0].mxu0
    %v2215 = vadd.f32 %v1996, %v2214
    %v2216 = vpop.f32.mrb[0].mxu0
    %v2217 = vadd.f32 %v2000, %v2216
    %2218 = vmatprep.mubr.f32.mxu0 0.0
    %2219 = vmatmul.mubr.f32.gmra.mrb[0].mxu0 %v1915
    %v2220 = vpop.f32.mrb[0].mxu0
    %v2221 = vadd.f32 %v1996, %v2220
    %v2222 = vpop.f32.mrb[0].mxu0
    %v2223 = vadd.f32 %v2000, %v2222
    %2224 = vmatprep.mubr.f32.mxu0 0.0
    %2225 = vmatmul.mubr.f32.gmra.mrb[0].mxu0 %v1916
    %v2226 = vpop.f32.mrb[0].mxu0
    %v2227 = vadd.f32 %v1996, %v2226
    %v2228 = vpop.f32.mrb[0].mxu0
    %v2229 = vadd.f32 %v2000, %v2228
    %2230 = vdwg.mxu0
    %2231 = vst [vmem:[#allocation2] sm:$0xff] %v2072
    %2232 = vst [vmem:[#allocation2 + $0x8] sm:$0xff] %v2074
    %2233 = vst [vmem:[#allocation2 + $0x10] sm:$0xff] %v2185
    %2234 = vst [vmem:[#allocation2 + $0x18] sm:$0xff] %v2187
    %2235 = vst [vmem:[#allocation2 + $0x20] sm:$0xff] %v2078
    %2236 = vst [vmem:[#allocation2 + $0x28] sm:$0xff] %v2080
    %2237 = vst [vmem:[#allocation2 + $0x30] sm:$0xff] %v2191
    %2238 = vst [vmem:[#allocation2 + $0x38] sm:$0xff] %v2193
    %2239 = vst [vmem:[#allocation2 + $0x40] sm:$0xff] %v2084
    %2240 = vst [vmem:[#allocation2 + $0x48] sm:$0xff] %v2086
    %2241 = vst [vmem:[#allocation2 + $0x50] sm:$0xff] %v2197
    %2242 = vst [vmem:[#allocation2 + $0x58] sm:$0xff] %v2199
    %2243 = vst [vmem:[#allocation2 + $0x60] sm:$0xff] %v2090
    %2244 = vst [vmem:[#allocation2 + $0x68] sm:$0xff] %v2092
    %2245 = vst [vmem:[#allocation2 + $0x70] sm:$0xff] %v2203
    %2246 = vst [vmem:[#allocation2 + $0x78] sm:$0xff] %v2205
    %2247 = vst [vmem:[#allocation2 + $0x80] sm:$0xff] %v2096
    %2248 = vst [vmem:[#allocation2 + $0x88] sm:$0xff] %v2098
    %2249 = vst [vmem:[#allocation2 + $0x90] sm:$0xff] %v2209
    %2250 = vst [vmem:[#allocation2 + $0x98] sm:$0xff] %v2211
    %2251 = vst [vmem:[#allocation2 + $0xa0] sm:$0xff] %v2102
    %2252 = vst [vmem:[#allocation2 + $0xa8] sm:$0xff] %v2104
    %2253 = vst [vmem:[#allocation2 + $0xb0] sm:$0xff] %v2215
    %2254 = vst [vmem:[#allocation2 + $0xb8] sm:$0xff] %v2217
    %2255 = vst [vmem:[#allocation2 + $0xc0] sm:$0xff] %v2108
    %2256 = vst [vmem:[#allocation2 + $0xc8] sm:$0xff] %v2110
    %2257 = vst [vmem:[#allocation2 + $0xd0] sm:$0xff] %v2221
    %2258 = vst [vmem:[#allocation2 + $0xd8] sm:$0xff] %v2223
    %2259 = vst [vmem:[#allocation2 + $0xe0] sm:$0xff] %v2114
    %2260 = vst [vmem:[#allocation2 + $0xe8] sm:$0xff] %v2116
    %2261 = vst [vmem:[#allocation2 + $0xf0] sm:$0xff] %v2227
    %2262 = vst [vmem:[#allocation2 + $0xf8] sm:$0xff] %v2229
    %s2263 = scalar_lea.vmem [#allocation10], 512
    %v2264 = vld [vmem:[%s2263] sm:$0xff]
    %v2265 = vld [vmem:[%s2263 + $0x8] sm:$0xff]
    %v2266 = vld [vmem:[%s2263 + $0x10] sm:$0xff]
    %v2267 = vld [vmem:[%s2263 + $0x18] sm:$0xff]
    %v2268 = vld [vmem:[%s2263 + $0x20] sm:$0xff]
    %v2269 = vld [vmem:[%s2263 + $0x28] sm:$0xff]
    %v2270 = vld [vmem:[%s2263 + $0x30] sm:$0xff]
    %v2271 = vld [vmem:[%s2263 + $0x38] sm:$0xff]
    %v2272 = vld [vmem:[%s2263 + $0x40] sm:$0xff]
    %v2273 = vld [vmem:[%s2263 + $0x48] sm:$0xff]
    %v2274 = vld [vmem:[%s2263 + $0x50] sm:$0xff]
    %v2275 = vld [vmem:[%s2263 + $0x58] sm:$0xff]
    %v2276 = vld [vmem:[%s2263 + $0x60] sm:$0xff]
    %v2277 = vld [vmem:[%s2263 + $0x68] sm:$0xff]
    %v2278 = vld [vmem:[%s2263 + $0x70] sm:$0xff]
    %v2279 = vld [vmem:[%s2263 + $0x78] sm:$0xff]
    %v2280 = vld [vmem:[%s2263 + $0x80] sm:$0xff]
    %v2281 = vld [vmem:[%s2263 + $0x88] sm:$0xff]
    %v2282 = vld [vmem:[%s2263 + $0x90] sm:$0xff]
    %v2283 = vld [vmem:[%s2263 + $0x98] sm:$0xff]
    %v2284 = vld [vmem:[%s2263 + $0xa0] sm:$0xff]
    %v2285 = vld [vmem:[%s2263 + $0xa8] sm:$0xff]
    %v2286 = vld [vmem:[%s2263 + $0xb0] sm:$0xff]
    %v2287 = vld [vmem:[%s2263 + $0xb8] sm:$0xff]
    %v2288 = vld [vmem:[%s2263 + $0xc0] sm:$0xff]
    %v2289 = vld [vmem:[%s2263 + $0xc8] sm:$0xff]
    %v2290 = vld [vmem:[%s2263 + $0xd0] sm:$0xff]
    %v2291 = vld [vmem:[%s2263 + $0xd8] sm:$0xff]
    %v2292 = vld [vmem:[%s2263 + $0xe0] sm:$0xff]
    %v2293 = vld [vmem:[%s2263 + $0xe8] sm:$0xff]
    %v2294 = vld [vmem:[%s2263 + $0xf0] sm:$0xff]
    %v2295 = vld [vmem:[%s2263 + $0xf8] sm:$0xff]
    %v2296 = vld [vmem:[%s2263 + $0x100] sm:$0xff]
    %v2297 = vld [vmem:[%s2263 + $0x108] sm:$0xff]
    %v2298 = vld [vmem:[%s2263 + $0x110] sm:$0xff]
    %v2299 = vld [vmem:[%s2263 + $0x118] sm:$0xff]
    %v2300 = vld [vmem:[%s2263 + $0x120] sm:$0xff]
    %v2301 = vld [vmem:[%s2263 + $0x128] sm:$0xff]
    %v2302 = vld [vmem:[%s2263 + $0x130] sm:$0xff]
    %v2303 = vld [vmem:[%s2263 + $0x138] sm:$0xff]
    %v2304 = vld [vmem:[%s2263 + $0x140] sm:$0xff]
    %v2305 = vld [vmem:[%s2263 + $0x148] sm:$0xff]
    %v2306 = vld [vmem:[%s2263 + $0x150] sm:$0xff]
    %v2307 = vld [vmem:[%s2263 + $0x158] sm:$0xff]
    %v2308 = vld [vmem:[%s2263 + $0x160] sm:$0xff]
    %v2309 = vld [vmem:[%s2263 + $0x168] sm:$0xff]
    %v2310 = vld [vmem:[%s2263 + $0x170] sm:$0xff]
    %v2311 = vld [vmem:[%s2263 + $0x178] sm:$0xff]
    %v2312 = vld [vmem:[%s2263 + $0x180] sm:$0xff]
    %v2313 = vld [vmem:[%s2263 + $0x188] sm:$0xff]
    %v2314 = vld [vmem:[%s2263 + $0x190] sm:$0xff]
    %v2315 = vld [vmem:[%s2263 + $0x198] sm:$0xff]
    %v2316 = vld [vmem:[%s2263 + $0x1a0] sm:$0xff]
    %v2317 = vld [vmem:[%s2263 + $0x1a8] sm:$0xff]
    %v2318 = vld [vmem:[%s2263 + $0x1b0] sm:$0xff]
    %v2319 = vld [vmem:[%s2263 + $0x1b8] sm:$0xff]
    %v2320 = vld [vmem:[%s2263 + $0x1c0] sm:$0xff]
    %v2321 = vld [vmem:[%s2263 + $0x1c8] sm:$0xff]
    %v2322 = vld [vmem:[%s2263 + $0x1d0] sm:$0xff]
    %v2323 = vld [vmem:[%s2263 + $0x1d8] sm:$0xff]
    %v2324 = vld [vmem:[%s2263 + $0x1e0] sm:$0xff]
    %v2325 = vld [vmem:[%s2263 + $0x1e8] sm:$0xff]
    %v2326 = vld [vmem:[%s2263 + $0x1f0] sm:$0xff]
    %v2327 = vld [vmem:[%s2263 + $0x1f8] sm:$0xff]
    %v2328 = vld [vmem:[#allocation2] sm:$0xff]
    %v2329 = vld [vmem:[#allocation2 + $0x8] sm:$0xff]
    %v2330 = vld [vmem:[#allocation2 + $0x10] sm:$0xff]
    %v2331 = vld [vmem:[#allocation2 + $0x18] sm:$0xff]
    %2332 = vmatprep.subr.mxu0 %v2265
    %2333 = vmatpush1.msra.mxu0 %v2264
    %2334 = vmatprep.subr.mxu0 %v2269
    %2335 = vmatpush1.msra.mxu0 %v2268
    %2336 = vmatprep.subr.mxu0 %v2273
    %2337 = vmatpush1.msra.mxu0 %v2272
    %2338 = vmatprep.subr.mxu0 %v2277
    %2339 = vmatpush1.msra.mxu0 %v2276
    %2340 = vmatprep.subr.mxu0 %v2281
    %2341 = vmatpush1.msra.mxu0 %v2280
    %2342 = vmatprep.subr.mxu0 %v2285
    %2343 = vmatpush1.msra.mxu0 %v2284
    %2344 = vmatprep.subr.mxu0 %v2289
    %2345 = vmatpush1.msra.mxu0 %v2288
    %2346 = vmatprep.subr.mxu0 %v2293
    %2347 = vmatpush1.msra.mxu0 %v2292
    %2348 = vmatprep.subr.mxu0 %v2297
    %2349 = vmatpush1.msra.mxu0 %v2296
    %2350 = vmatprep.subr.mxu0 %v2301
    %2351 = vmatpush1.msra.mxu0 %v2300
    %2352 = vmatprep.subr.mxu0 %v2305
    %2353 = vmatpush1.msra.mxu0 %v2304
    %2354 = vmatprep.subr.mxu0 %v2309
    %2355 = vmatpush1.msra.mxu0 %v2308
    %2356 = vmatprep.subr.mxu0 %v2313
    %2357 = vmatpush1.msra.mxu0 %v2312
    %2358 = vmatprep.subr.mxu0 %v2317
    %2359 = vmatpush1.msra.mxu0 %v2316
    %2360 = vmatprep.subr.mxu0 %v2321
    %2361 = vmatpush1.msra.mxu0 %v2320
    %2362 = vmatprep.subr.mxu0 %v2325
    %2363 = vmatpush1.msra.mxu0 %v2324
    %2364 = vmatprep.subr.mxu0 0.0
    %2365 = vmatpush1.msra.mxu0 0.0
    %2366 = vmatprep.subr.mxu0 0.0
    %2367 = vmatpush1.msra.mxu0 0.0
    %2368 = vmatprep.subr.mxu0 0.0
    %2369 = vmatpush1.msra.mxu0 0.0
    %2370 = vmatprep.subr.mxu0 0.0
    %2371 = vmatpush1.msra.mxu0 0.0
    %2372 = vmatprep.subr.mxu0 0.0
    %2373 = vmatpush1.msra.mxu0 0.0
    %2374 = vmatprep.subr.mxu0 0.0
    %2375 = vmatpush1.msra.mxu0 0.0
    %2376 = vmatprep.subr.mxu0 0.0
    %2377 = vmatpush1.msra.mxu0 0.0
    %2378 = vmatprep.subr.mxu0 0.0
    %2379 = vmatpush1.msra.mxu0 0.0
    %2380 = vmatprep.subr.mxu0 0.0
    %2381 = vmatpush1.msra.mxu0 0.0
    %2382 = vmatprep.subr.mxu0 0.0
    %2383 = vmatpush1.msra.mxu0 0.0
    %2384 = vmatprep.subr.mxu0 0.0
    %2385 = vmatpush1.msra.mxu0 0.0
    %2386 = vmatprep.subr.mxu0 0.0
    %2387 = vmatpush1.msra.mxu0 0.0
    %2388 = vmatprep.subr.mxu0 0.0
    %2389 = vmatpush1.msra.mxu0 0.0
    %2390 = vmatprep.subr.mxu0 0.0
    %2391 = vmatpush1.msra.mxu0 0.0
    %2392 = vmatprep.subr.mxu0 0.0
    %2393 = vmatpush1.msra.mxu0 0.0
    %2394 = vmatprep.subr.mxu0 0.0
    %2395 = vmatpush1.msra.mxu0 0.0
    %2396 = vmatprep.mubr.f32.mxu0 0.0
    %2397 = vmatmul.mubr.f32.gmra.mrb[0].mxu0 0.0
    %v2398 = vpop.f32.mrb[0].mxu0
    %v2399 = vadd.f32 0.0, %v2398
    %v2400 = vpop.f32.mrb[0].mxu0
    %v2401 = vadd.f32 0.0, %v2400
    %2402 = vdwg.mxu0
    %2403 = vmatprep.subr.mxu0 %v2267
    %2404 = vmatpush1.msra.mxu0 %v2266
    %2405 = vmatprep.subr.mxu0 %v2271
    %2406 = vmatpush1.msra.mxu0 %v2270
    %2407 = vmatprep.subr.mxu0 %v2275
    %2408 = vmatpush1.msra.mxu0 %v2274
    %2409 = vmatprep.subr.mxu0 %v2279
    %2410 = vmatpush1.msra.mxu0 %v2278
    %2411 = vmatprep.subr.mxu0 %v2283
    %2412 = vmatpush1.msra.mxu0 %v2282
    %2413 = vmatprep.subr.mxu0 %v2287
    %2414 = vmatpush1.msra.mxu0 %v2286
    %2415 = vmatprep.subr.mxu0 %v2291
    %2416 = vmatpush1.msra.mxu0 %v2290
    %2417 = vmatprep.subr.mxu0 %v2295
    %2418 = vmatpush1.msra.mxu0 %v2294
    %2419 = vmatprep.subr.mxu0 %v2299
    %2420 = vmatpush1.msra.mxu0 %v2298
    %2421 = vmatprep.subr.mxu0 %v2303
    %2422 = vmatpush1.msra.mxu0 %v2302
    %2423 = vmatprep.subr.mxu0 %v2307
    %2424 = vmatpush1.msra.mxu0 %v2306
    %2425 = vmatprep.subr.mxu0 %v2311
    %2426 = vmatpush1.msra.mxu0 %v2310
    %2427 = vmatprep.subr.mxu0 %v2315
    %2428 = vmatpush1.msra.mxu0 %v2314
    %2429 = vmatprep.subr.mxu0 %v2319
    %2430 = vmatpush1.msra.mxu0 %v2318
    %2431 = vmatprep.subr.mxu0 %v2323
    %2432 = vmatpush1.msra.mxu0 %v2322
    %2433 = vmatprep.subr.mxu0 %v2327
    %2434 = vmatpush1.msra.mxu0 %v2326
    %2435 = vmatprep.subr.mxu0 0.0
    %2436 = vmatpush1.msra.mxu0 0.0
    %2437 = vmatprep.subr.mxu0 0.0
    %2438 = vmatpush1.msra.mxu0 0.0
    %2439 = vmatprep.subr.mxu0 0.0
    %2440 = vmatpush1.msra.mxu0 0.0
    %2441 = vmatprep.subr.mxu0 0.0
    %2442 = vmatpush1.msra.mxu0 0.0
    %2443 = vmatprep.subr.mxu0 0.0
    %2444 = vmatpush1.msra.mxu0 0.0
    %2445 = vmatprep.subr.mxu0 0.0
    %2446 = vmatpush1.msra.mxu0 0.0
    %2447 = vmatprep.subr.mxu0 0.0
    %2448 = vmatpush1.msra.mxu0 0.0
    %2449 = vmatprep.subr.mxu0 0.0
    %2450 = vmatpush1.msra.mxu0 0.0
    %2451 = vmatprep.subr.mxu0 0.0
    %2452 = vmatpush1.msra.mxu0 0.0
    %2453 = vmatprep.subr.mxu0 0.0
    %2454 = vmatpush1.msra.mxu0 0.0
    %2455 = vmatprep.subr.mxu0 0.0
    %2456 = vmatpush1.msra.mxu0 0.0
    %2457 = vmatprep.subr.mxu0 0.0
    %2458 = vmatpush1.msra.mxu0 0.0
    %2459 = vmatprep.subr.mxu0 0.0
    %2460 = vmatpush1.msra.mxu0 0.0
    %2461 = vmatprep.subr.mxu0 0.0
    %2462 = vmatpush1.msra.mxu0 0.0
    %2463 = vmatprep.subr.mxu0 0.0
    %2464 = vmatpush1.msra.mxu0 0.0
    %2465 = vmatprep.subr.mxu0 0.0
    %2466 = vmatpush1.msra.mxu0 0.0
    %2467 = vmatprep.mubr.f32.mxu0 0.0
    %2468 = vmatmul.mubr.f32.gmra.mrb[0].mxu0 0.0
    %v2469 = vpop.f32.mrb[0].mxu0
    %v2470 = vadd.f32 0.0, %v2469
    %v2471 = vpop.f32.mrb[0].mxu0
    %v2472 = vadd.f32 0.0, %v2471
    %2473 = vdwg.mxu0
    %v2474 = vadd.f32 %v2328, %v2399
    %v2475 = vadd.f32 %v2329, %v2401
    %v2476 = vadd.f32 %v2330, %v2470
    %v2477 = vadd.f32 %v2331, %v2472
    %v2478 = vxor.u32 %v2474, 2147483648
    %v2479 = vmul.f32 %v2478, 1.442695
    %v2480 = vpow.pop %v2479
    %v2481 = vadd.f32 %v2480, 1.0
    %v2482 = vrcp.pop %v2481
    %v2483 = vmul.f32 1.0, %v2482
    %v2484 = vxor.u32 %v2475, 2147483648
    %v2485 = vmul.f32 %v2484, 1.442695
    %v2486 = vpow.pop %v2485
    %v2487 = vadd.f32 %v2486, 1.0
    %v2488 = vrcp.pop %v2487
    %v2489 = vmul.f32 1.0, %v2488
    %v2490 = vtanh.pop %v2476
    %v2491 = vxor.u32 %v2477, 2147483648
    %v2492 = vmul.f32 %v2491, 1.442695
    %v2493 = vpow.pop %v2492
    %v2494 = vadd.f32 %v2493, 1.0
    %v2495 = vrcp.pop %v2494
    %v2496 = vmul.f32 1.0, %v2495
    %v2497 = vmul.f32 %v2489, 0.0
    %v2498 = vmul.f32 %v2483, %v2490
    %v2499 = vadd.f32 %v2497, %v2498
    %v2500 = vtanh.pop %v2499
    %v2501 = vmul.f32 %v2496, %v2500
    %v2502 = vld [vmem:[%s670] sm:$0xff]
    %v2503 = vld [vmem:[%s670 + $0x8] sm:$0xff]
    %v2504 = vld [vmem:[%s670 + $0x10] sm:$0xff]
    %v2505 = vld [vmem:[%s670 + $0x18] sm:$0xff]
    %2506 = vmatprep.subr.mxu0 %v2265
    %2507 = vmatpush1.msra.mxu0 %v2264
    %2508 = vmatprep.subr.mxu0 %v2269
    %2509 = vmatpush1.msra.mxu0 %v2268
    %2510 = vmatprep.subr.mxu0 %v2273
    %2511 = vmatpush1.msra.mxu0 %v2272
    %2512 = vmatprep.subr.mxu0 %v2277
    %2513 = vmatpush1.msra.mxu0 %v2276
    %2514 = vmatprep.subr.mxu0 %v2281
    %2515 = vmatpush1.msra.mxu0 %v2280
    %2516 = vmatprep.subr.mxu0 %v2285
    %2517 = vmatpush1.msra.mxu0 %v2284
    %2518 = vmatprep.subr.mxu0 %v2289
    %2519 = vmatpush1.msra.mxu0 %v2288
    %2520 = vmatprep.subr.mxu0 %v2293
    %2521 = vmatpush1.msra.mxu0 %v2292
    %2522 = vmatprep.subr.mxu0 %v2297
    %2523 = vmatpush1.msra.mxu0 %v2296
    %2524 = vmatprep.subr.mxu0 %v2301
    %2525 = vmatpush1.msra.mxu0 %v2300
    %2526 = vmatprep.subr.mxu0 %v2305
    %2527 = vmatpush1.msra.mxu0 %v2304
    %2528 = vmatprep.subr.mxu0 %v2309
    %2529 = vmatpush1.msra.mxu0 %v2308
    %2530 = vmatprep.subr.mxu0 %v2313
    %2531 = vmatpush1.msra.mxu0 %v2312
    %2532 = vmatprep.subr.mxu0 %v2317
    %2533 = vmatpush1.msra.mxu0 %v2316
    %2534 = vmatprep.subr.mxu0 %v2321
    %2535 = vmatpush1.msra.mxu0 %v2320
    %2536 = vmatprep.subr.mxu0 %v2325
    %2537 = vmatpush1.msra.mxu0 %v2324
    %2538 = vmatprep.subr.mxu0 0.0
    %2539 = vmatpush1.msra.mxu0 0.0
    %2540 = vmatprep.subr.mxu0 0.0
    %2541 = vmatpush1.msra.mxu0 0.0
    %2542 = vmatprep.subr.mxu0 0.0
    %2543 = vmatpush1.msra.mxu0 0.0
    %2544 = vmatprep.subr.mxu0 0.0
    %2545 = vmatpush1.msra.mxu0 0.0
    %2546 = vmatprep.subr.mxu0 0.0
    %2547 = vmatpush1.msra.mxu0 0.0
    %2548 = vmatprep.subr.mxu0 0.0
    %2549 = vmatpush1.msra.mxu0 0.0
    %2550 = vmatprep.subr.mxu0 0.0
    %2551 = vmatpush1.msra.mxu0 0.0
    %2552 = vmatprep.subr.mxu0 0.0
    %2553 = vmatpush1.msra.mxu0 0.0
    %2554 = vmatprep.subr.mxu0 0.0
    %2555 = vmatpush1.msra.mxu0 0.0
    %2556 = vmatprep.subr.mxu0 0.0
    %2557 = vmatpush1.msra.mxu0 0.0
    %2558 = vmatprep.subr.mxu0 0.0
    %2559 = vmatpush1.msra.mxu0 0.0
    %2560 = vmatprep.subr.mxu0 0.0
    %2561 = vmatpush1.msra.mxu0 0.0
    %2562 = vmatprep.subr.mxu0 0.0
    %2563 = vmatpush1.msra.mxu0 0.0
    %2564 = vmatprep.subr.mxu0 0.0
    %2565 = vmatpush1.msra.mxu0 0.0
    %2566 = vmatprep.subr.mxu0 0.0
    %2567 = vmatpush1.msra.mxu0 0.0
    %2568 = vmatprep.subr.mxu0 0.0
    %2569 = vmatpush1.msra.mxu0 0.0
    %2570 = vmatprep.mubr.f32.mxu0 0.0
    %2571 = vmatmul.mubr.f32.gmra.mrb[0].mxu0 %v2501
    %v2572 = vpop.f32.mrb[0].mxu0
    %v2573 = vadd.f32 0.0, %v2572
    %v2574 = vpop.f32.mrb[0].mxu0
    %v2575 = vadd.f32 0.0, %v2574
    %2576 = vdwg.mxu0
    %2577 = vmatprep.subr.mxu0 %v2267
    %2578 = vmatpush1.msra.mxu0 %v2266
    %2579 = vmatprep.subr.mxu0 %v2271
    %2580 = vmatpush1.msra.mxu0 %v2270
    %2581 = vmatprep.subr.mxu0 %v2275
    %2582 = vmatpush1.msra.mxu0 %v2274
    %2583 = vmatprep.subr.mxu0 %v2279
    %2584 = vmatpush1.msra.mxu0 %v2278
    %2585 = vmatprep.subr.mxu0 %v2283
    %2586 = vmatpush1.msra.mxu0 %v2282
    %2587 = vmatprep.subr.mxu0 %v2287
    %2588 = vmatpush1.msra.mxu0 %v2286
    %2589 = vmatprep.subr.mxu0 %v2291
    %2590 = vmatpush1.msra.mxu0 %v2290
    %2591 = vmatprep.subr.mxu0 %v2295
    %2592 = vmatpush1.msra.mxu0 %v2294
    %2593 = vmatprep.subr.mxu0 %v2299
    %2594 = vmatpush1.msra.mxu0 %v2298
    %2595 = vmatprep.subr.mxu0 %v2303
    %2596 = vmatpush1.msra.mxu0 %v2302
    %2597 = vmatprep.subr.mxu0 %v2307
    %2598 = vmatpush1.msra.mxu0 %v2306
    %2599 = vmatprep.subr.mxu0 %v2311
    %2600 = vmatpush1.msra.mxu0 %v2310
    %2601 = vmatprep.subr.mxu0 %v2315
    %2602 = vmatpush1.msra.mxu0 %v2314
    %2603 = vmatprep.subr.mxu0 %v2319
    %2604 = vmatpush1.msra.mxu0 %v2318
    %2605 = vmatprep.subr.mxu0 %v2323
    %2606 = vmatpush1.msra.mxu0 %v2322
    %2607 = vmatprep.subr.mxu0 %v2327
    %2608 = vmatpush1.msra.mxu0 %v2326
    %2609 = vmatprep.subr.mxu0 0.0
    %2610 = vmatpush1.msra.mxu0 0.0
    %2611 = vmatprep.subr.mxu0 0.0
    %2612 = vmatpush1.msra.mxu0 0.0
    %2613 = vmatprep.subr.mxu0 0.0
    %2614 = vmatpush1.msra.mxu0 0.0
    %2615 = vmatprep.subr.mxu0 0.0
    %2616 = vmatpush1.msra.mxu0 0.0
    %2617 = vmatprep.subr.mxu0 0.0
    %2618 = vmatpush1.msra.mxu0 0.0
    %2619 = vmatprep.subr.mxu0 0.0
    %2620 = vmatpush1.msra.mxu0 0.0
    %2621 = vmatprep.subr.mxu0 0.0
    %2622 = vmatpush1.msra.mxu0 0.0
    %2623 = vmatprep.subr.mxu0 0.0
    %2624 = vmatpush1.msra.mxu0 0.0
    %2625 = vmatprep.subr.mxu0 0.0
    %2626 = vmatpush1.msra.mxu0 0.0
    %2627 = vmatprep.subr.mxu0 0.0
    %2628 = vmatpush1.msra.mxu0 0.0
    %2629 = vmatprep.subr.mxu0 0.0
    %2630 = vmatpush1.msra.mxu0 0.0
    %2631 = vmatprep.subr.mxu0 0.0
    %2632 = vmatpush1.msra.mxu0 0.0
    %2633 = vmatprep.subr.mxu0 0.0
    %2634 = vmatpush1.msra.mxu0 0.0
    %2635 = vmatprep.subr.mxu0 0.0
    %2636 = vmatpush1.msra.mxu0 0.0
    %2637 = vmatprep.subr.mxu0 0.0
    %2638 = vmatpush1.msra.mxu0 0.0
    %2639 = vmatprep.subr.mxu0 0.0
    %2640 = vmatpush1.msra.mxu0 0.0
    %2641 = vmatprep.mubr.f32.mxu0 0.0
    %2642 = vmatmul.mubr.f32.gmra.mrb[0].mxu0 %v2501
    %v2643 = vpop.f32.mrb[0].mxu0
    %v2644 = vadd.f32 0.0, %v2643
    %v2645 = vpop.f32.mrb[0].mxu0
    %v2646 = vadd.f32 0.0, %v2645
    %2647 = vdwg.mxu0
    %v2648 = vadd.f32 %v2502, %v2573
    %v2649 = vadd.f32 %v2503, %v2575
    %v2650 = vadd.f32 %v2504, %v2644
    %v2651 = vadd.f32 %v2505, %v2646
    %v2652 = vxor.u32 %v2648, 2147483648
    %v2653 = vmul.f32 %v2652, 1.442695
    %v2654 = vpow.pop %v2653
    %v2655 = vadd.f32 %v2654, 1.0
    %v2656 = vrcp.pop %v2655
    %v2657 = vmul.f32 1.0, %v2656
    %v2658 = vxor.u32 %v2649, 2147483648
    %v2659 = vmul.f32 %v2658, 1.442695
    %v2660 = vpow.pop %v2659
    %v2661 = vadd.f32 %v2660, 1.0
    %v2662 = vrcp.pop %v2661
    %v2663 = vmul.f32 1.0, %v2662
    %v2664 = vtanh.pop %v2650
    %v2665 = vxor.u32 %v2651, 2147483648
    %v2666 = vmul.f32 %v2665, 1.442695
    %v2667 = vpow.pop %v2666
    %v2668 = vadd.f32 %v2667, 1.0
    %v2669 = vrcp.pop %v2668
    %v2670 = vmul.f32 1.0, %v2669
    %v2671 = vmul.f32 %v2663, %v2499
    %v2672 = vmul.f32 %v2657, %v2664
    %v2673 = vadd.f32 %v2671, %v2672
    %v2674 = vtanh.pop %v2673
    %v2675 = vmul.f32 %v2670, %v2674
    %v2676 = vld [vmem:[%s847] sm:$0xff]
    %v2677 = vld [vmem:[%s847 + $0x8] sm:$0xff]
    %v2678 = vld [vmem:[%s847 + $0x10] sm:$0xff]
    %v2679 = vld [vmem:[%s847 + $0x18] sm:$0xff]
    %2680 = vmatprep.subr.mxu0 %v2265
    %2681 = vmatpush1.msra.mxu0 %v2264
    %2682 = vmatprep.subr.mxu0 %v2269
    %2683 = vmatpush1.msra.mxu0 %v2268
    %2684 = vmatprep.subr.mxu0 %v2273
    %2685 = vmatpush1.msra.mxu0 %v2272
    %2686 = vmatprep.subr.mxu0 %v2277
    %2687 = vmatpush1.msra.mxu0 %v2276
    %2688 = vmatprep.subr.mxu0 %v2281
    %2689 = vmatpush1.msra.mxu0 %v2280
    %2690 = vmatprep.subr.mxu0 %v2285
    %2691 = vmatpush1.msra.mxu0 %v2284
    %2692 = vmatprep.subr.mxu0 %v2289
    %2693 = vmatpush1.msra.mxu0 %v2288
    %2694 = vmatprep.subr.mxu0 %v2293
    %2695 = vmatpush1.msra.mxu0 %v2292
    %2696 = vmatprep.subr.mxu0 %v2297
    %2697 = vmatpush1.msra.mxu0 %v2296
    %2698 = vmatprep.subr.mxu0 %v2301
    %2699 = vmatpush1.msra.mxu0 %v2300
    %2700 = vmatprep.subr.mxu0 %v2305
    %2701 = vmatpush1.msra.mxu0 %v2304
    %2702 = vmatprep.subr.mxu0 %v2309
    %2703 = vmatpush1.msra.mxu0 %v2308
    %2704 = vmatprep.subr.mxu0 %v2313
    %2705 = vmatpush1.msra.mxu0 %v2312
    %2706 = vmatprep.subr.mxu0 %v2317
    %2707 = vmatpush1.msra.mxu0 %v2316
    %2708 = vmatprep.subr.mxu0 %v2321
    %2709 = vmatpush1.msra.mxu0 %v2320
    %2710 = vmatprep.subr.mxu0 %v2325
    %2711 = vmatpush1.msra.mxu0 %v2324
    %2712 = vmatprep.subr.mxu0 0.0
    %2713 = vmatpush1.msra.mxu0 0.0
    %2714 = vmatprep.subr.mxu0 0.0
    %2715 = vmatpush1.msra.mxu0 0.0
    %2716 = vmatprep.subr.mxu0 0.0
    %2717 = vmatpush1.msra.mxu0 0.0
    %2718 = vmatprep.subr.mxu0 0.0
    %2719 = vmatpush1.msra.mxu0 0.0
    %2720 = vmatprep.subr.mxu0 0.0
    %2721 = vmatpush1.msra.mxu0 0.0
    %2722 = vmatprep.subr.mxu0 0.0
    %2723 = vmatpush1.msra.mxu0 0.0
    %2724 = vmatprep.subr.mxu0 0.0
    %2725 = vmatpush1.msra.mxu0 0.0
    %2726 = vmatprep.subr.mxu0 0.0
    %2727 = vmatpush1.msra.mxu0 0.0
    %2728 = vmatprep.subr.mxu0 0.0
    %2729 = vmatpush1.msra.mxu0 0.0
    %2730 = vmatprep.subr.mxu0 0.0
    %2731 = vmatpush1.msra.mxu0 0.0
    %2732 = vmatprep.subr.mxu0 0.0
    %2733 = vmatpush1.msra.mxu0 0.0
    %2734 = vmatprep.subr.mxu0 0.0
    %2735 = vmatpush1.msra.mxu0 0.0
    %2736 = vmatprep.subr.mxu0 0.0
    %2737 = vmatpush1.msra.mxu0 0.0
    %2738 = vmatprep.subr.mxu0 0.0
    %2739 = vmatpush1.msra.mxu0 0.0
    %2740 = vmatprep.subr.mxu0 0.0
    %2741 = vmatpush1.msra.mxu0 0.0
    %2742 = vmatprep.subr.mxu0 0.0
    %2743 = vmatpush1.msra.mxu0 0.0
    %2744 = vmatprep.mubr.f32.mxu0 0.0
    %2745 = vmatmul.mubr.f32.gmra.mrb[0].mxu0 %v2675
    %v2746 = vpop.f32.mrb[0].mxu0
    %v2747 = vadd.f32 0.0, %v2746
    %v2748 = vpop.f32.mrb[0].mxu0
    %v2749 = vadd.f32 0.0, %v2748
    %2750 = vdwg.mxu0
    %2751 = vmatprep.subr.mxu0 %v2267
    %2752 = vmatpush1.msra.mxu0 %v2266
    %2753 = vmatprep.subr.mxu0 %v2271
    %2754 = vmatpush1.msra.mxu0 %v2270
    %2755 = vmatprep.subr.mxu0 %v2275
    %2756 = vmatpush1.msra.mxu0 %v2274
    %2757 = vmatprep.subr.mxu0 %v2279
    %2758 = vmatpush1.msra.mxu0 %v2278
    %2759 = vmatprep.subr.mxu0 %v2283
    %2760 = vmatpush1.msra.mxu0 %v2282
    %2761 = vmatprep.subr.mxu0 %v2287
    %2762 = vmatpush1.msra.mxu0 %v2286
    %2763 = vmatprep.subr.mxu0 %v2291
    %2764 = vmatpush1.msra.mxu0 %v2290
    %2765 = vmatprep.subr.mxu0 %v2295
    %2766 = vmatpush1.msra.mxu0 %v2294
    %2767 = vmatprep.subr.mxu0 %v2299
    %2768 = vmatpush1.msra.mxu0 %v2298
    %2769 = vmatprep.subr.mxu0 %v2303
    %2770 = vmatpush1.msra.mxu0 %v2302
    %2771 = vmatprep.subr.mxu0 %v2307
    %2772 = vmatpush1.msra.mxu0 %v2306
    %2773 = vmatprep.subr.mxu0 %v2311
    %2774 = vmatpush1.msra.mxu0 %v2310
    %2775 = vmatprep.subr.mxu0 %v2315
    %2776 = vmatpush1.msra.mxu0 %v2314
    %2777 = vmatprep.subr.mxu0 %v2319
    %2778 = vmatpush1.msra.mxu0 %v2318
    %2779 = vmatprep.subr.mxu0 %v2323
    %2780 = vmatpush1.msra.mxu0 %v2322
    %2781 = vmatprep.subr.mxu0 %v2327
    %2782 = vmatpush1.msra.mxu0 %v2326
    %2783 = vmatprep.subr.mxu0 0.0
    %2784 = vmatpush1.msra.mxu0 0.0
    %2785 = vmatprep.subr.mxu0 0.0
    %2786 = vmatpush1.msra.mxu0 0.0
    %2787 = vmatprep.subr.mxu0 0.0
    %2788 = vmatpush1.msra.mxu0 0.0
    %2789 = vmatprep.subr.mxu0 0.0
    %2790 = vmatpush1.msra.mxu0 0.0
    %2791 = vmatprep.subr.mxu0 0.0
    %2792 = vmatpush1.msra.mxu0 0.0
    %2793 = vmatprep.subr.mxu0 0.0
    %2794 = vmatpush1.msra.mxu0 0.0
    %2795 = vmatprep.subr.mxu0 0.0
    %2796 = vmatpush1.msra.mxu0 0.0
    %2797 = vmatprep.subr.mxu0 0.0
    %2798 = vmatpush1.msra.mxu0 0.0
    %2799 = vmatprep.subr.mxu0 0.0
    %2800 = vmatpush1.msra.mxu0 0.0
    %2801 = vmatprep.subr.mxu0 0.0
    %2802 = vmatpush1.msra.mxu0 0.0
    %2803 = vmatprep.subr.mxu0 0.0
    %2804 = vmatpush1.msra.mxu0 0.0
    %2805 = vmatprep.subr.mxu0 0.0
    %2806 = vmatpush1.msra.mxu0 0.0
    %2807 = vmatprep.subr.mxu0 0.0
    %2808 = vmatpush1.msra.mxu0 0.0
    %2809 = vmatprep.subr.mxu0 0.0
    %2810 = vmatpush1.msra.mxu0 0.0
    %2811 = vmatprep.subr.mxu0 0.0
    %2812 = vmatpush1.msra.mxu0 0.0
    %2813 = vmatprep.subr.mxu0 0.0
    %2814 = vmatpush1.msra.mxu0 0.0
    %2815 = vmatprep.mubr.f32.mxu0 0.0
    %2816 = vmatmul.mubr.f32.gmra.mrb[0].mxu0 %v2675
    %v2817 = vpop.f32.mrb[0].mxu0
    %v2818 = vadd.f32 0.0, %v2817
    %v2819 = vpop.f32.mrb[0].mxu0
    %v2820 = vadd.f32 0.0, %v2819
    %2821 = vdwg.mxu0
    %v2822 = vadd.f32 %v2676, %v2747
    %v2823 = vadd.f32 %v2677, %v2749
    %v2824 = vadd.f32 %v2678, %v2818
    %v2825 = vadd.f32 %v2679, %v2820
    %v2826 = vxor.u32 %v2822, 2147483648
    %v2827 = vmul.f32 %v2826, 1.442695
    %v2828 = vpow.pop %v2827
    %v2829 = vadd.f32 %v2828, 1.0
    %v2830 = vrcp.pop %v2829
    %v2831 = vmul.f32 1.0, %v2830
    %v2832 = vxor.u32 %v2823, 2147483648
    %v2833 = vmul.f32 %v2832, 1.442695
    %v2834 = vpow.pop %v2833
    %v2835 = vadd.f32 %v2834, 1.0
    %v2836 = vrcp.pop %v2835
    %v2837 = vmul.f32 1.0, %v2836
    %v2838 = vtanh.pop %v2824
    %v2839 = vxor.u32 %v2825, 2147483648
    %v2840 = vmul.f32 %v2839, 1.442695
    %v2841 = vpow.pop %v2840
    %v2842 = vadd.f32 %v2841, 1.0
    %v2843 = vrcp.pop %v2842
    %v2844 = vmul.f32 1.0, %v2843
    %v2845 = vmul.f32 %v2837, %v2673
    %v2846 = vmul.f32 %v2831, %v2838
    %v2847 = vadd.f32 %v2845, %v2846
    %v2848 = vtanh.pop %v2847
    %v2849 = vmul.f32 %v2844, %v2848
    %v2850 = vld [vmem:[%s1024] sm:$0xff]
    %v2851 = vld [vmem:[%s1024 + $0x8] sm:$0xff]
    %v2852 = vld [vmem:[%s1024 + $0x10] sm:$0xff]
    %v2853 = vld [vmem:[%s1024 + $0x18] sm:$0xff]
    %2854 = vmatprep.subr.mxu0 %v2265
    %2855 = vmatpush1.msra.mxu0 %v2264
    %2856 = vmatprep.subr.mxu0 %v2269
    %2857 = vmatpush1.msra.mxu0 %v2268
    %2858 = vmatprep.subr.mxu0 %v2273
    %2859 = vmatpush1.msra.mxu0 %v2272
    %2860 = vmatprep.subr.mxu0 %v2277
    %2861 = vmatpush1.msra.mxu0 %v2276
    %2862 = vmatprep.subr.mxu0 %v2281
    %2863 = vmatpush1.msra.mxu0 %v2280
    %2864 = vmatprep.subr.mxu0 %v2285
    %2865 = vmatpush1.msra.mxu0 %v2284
    %2866 = vmatprep.subr.mxu0 %v2289
    %2867 = vmatpush1.msra.mxu0 %v2288
    %2868 = vmatprep.subr.mxu0 %v2293
    %2869 = vmatpush1.msra.mxu0 %v2292
    %2870 = vmatprep.subr.mxu0 %v2297
    %2871 = vmatpush1.msra.mxu0 %v2296
    %2872 = vmatprep.subr.mxu0 %v2301
    %2873 = vmatpush1.msra.mxu0 %v2300
    %2874 = vmatprep.subr.mxu0 %v2305
    %2875 = vmatpush1.msra.mxu0 %v2304
    %2876 = vmatprep.subr.mxu0 %v2309
    %2877 = vmatpush1.msra.mxu0 %v2308
    %2878 = vmatprep.subr.mxu0 %v2313
    %2879 = vmatpush1.msra.mxu0 %v2312
    %2880 = vmatprep.subr.mxu0 %v2317
    %2881 = vmatpush1.msra.mxu0 %v2316
    %2882 = vmatprep.subr.mxu0 %v2321
    %2883 = vmatpush1.msra.mxu0 %v2320
    %2884 = vmatprep.subr.mxu0 %v2325
    %2885 = vmatpush1.msra.mxu0 %v2324
    %2886 = vmatprep.subr.mxu0 0.0
    %2887 = vmatpush1.msra.mxu0 0.0
    %2888 = vmatprep.subr.mxu0 0.0
    %2889 = vmatpush1.msra.mxu0 0.0
    %2890 = vmatprep.subr.mxu0 0.0
    %2891 = vmatpush1.msra.mxu0 0.0
    %2892 = vmatprep.subr.mxu0 0.0
    %2893 = vmatpush1.msra.mxu0 0.0
    %2894 = vmatprep.subr.mxu0 0.0
    %2895 = vmatpush1.msra.mxu0 0.0
    %2896 = vmatprep.subr.mxu0 0.0
    %2897 = vmatpush1.msra.mxu0 0.0
    %2898 = vmatprep.subr.mxu0 0.0
    %2899 = vmatpush1.msra.mxu0 0.0
    %2900 = vmatprep.subr.mxu0 0.0
    %2901 = vmatpush1.msra.mxu0 0.0
    %2902 = vmatprep.subr.mxu0 0.0
    %2903 = vmatpush1.msra.mxu0 0.0
    %2904 = vmatprep.subr.mxu0 0.0
    %2905 = vmatpush1.msra.mxu0 0.0
    %2906 = vmatprep.subr.mxu0 0.0
    %2907 = vmatpush1.msra.mxu0 0.0
    %2908 = vmatprep.subr.mxu0 0.0
    %2909 = vmatpush1.msra.mxu0 0.0
    %2910 = vmatprep.subr.mxu0 0.0
    %2911 = vmatpush1.msra.mxu0 0.0
    %2912 = vmatprep.subr.mxu0 0.0
    %2913 = vmatpush1.msra.mxu0 0.0
    %2914 = vmatprep.subr.mxu0 0.0
    %2915 = vmatpush1.msra.mxu0 0.0
    %2916 = vmatprep.subr.mxu0 0.0
    %2917 = vmatpush1.msra.mxu0 0.0
    %2918 = vmatprep.mubr.f32.mxu0 0.0
    %2919 = vmatmul.mubr.f32.gmra.mrb[0].mxu0 %v2849
    %v2920 = vpop.f32.mrb[0].mxu0
    %v2921 = vadd.f32 0.0, %v2920
    %v2922 = vpop.f32.mrb[0].mxu0
    %v2923 = vadd.f32 0.0, %v2922
    %2924 = vdwg.mxu0
    %2925 = vmatprep.subr.mxu0 %v2267
    %2926 = vmatpush1.msra.mxu0 %v2266
    %2927 = vmatprep.subr.mxu0 %v2271
    %2928 = vmatpush1.msra.mxu0 %v2270
    %2929 = vmatprep.subr.mxu0 %v2275
    %2930 = vmatpush1.msra.mxu0 %v2274
    %2931 = vmatprep.subr.mxu0 %v2279
    %2932 = vmatpush1.msra.mxu0 %v2278
    %2933 = vmatprep.subr.mxu0 %v2283
    %2934 = vmatpush1.msra.mxu0 %v2282
    %2935 = vmatprep.subr.mxu0 %v2287
    %2936 = vmatpush1.msra.mxu0 %v2286
    %2937 = vmatprep.subr.mxu0 %v2291
    %2938 = vmatpush1.msra.mxu0 %v2290
    %2939 = vmatprep.subr.mxu0 %v2295
    %2940 = vmatpush1.msra.mxu0 %v2294
    %2941 = vmatprep.subr.mxu0 %v2299
    %2942 = vmatpush1.msra.mxu0 %v2298
    %2943 = vmatprep.subr.mxu0 %v2303
    %2944 = vmatpush1.msra.mxu0 %v2302
    %2945 = vmatprep.subr.mxu0 %v2307
    %2946 = vmatpush1.msra.mxu0 %v2306
    %2947 = vmatprep.subr.mxu0 %v2311
    %2948 = vmatpush1.msra.mxu0 %v2310
    %2949 = vmatprep.subr.mxu0 %v2315
    %2950 = vmatpush1.msra.mxu0 %v2314
    %2951 = vmatprep.subr.mxu0 %v2319
    %2952 = vmatpush1.msra.mxu0 %v2318
    %2953 = vmatprep.subr.mxu0 %v2323
    %2954 = vmatpush1.msra.mxu0 %v2322
    %2955 = vmatprep.subr.mxu0 %v2327
    %2956 = vmatpush1.msra.mxu0 %v2326
    %2957 = vmatprep.subr.mxu0 0.0
    %2958 = vmatpush1.msra.mxu0 0.0
    %2959 = vmatprep.subr.mxu0 0.0
    %2960 = vmatpush1.msra.mxu0 0.0
    %2961 = vmatprep.subr.mxu0 0.0
    %2962 = vmatpush1.msra.mxu0 0.0
    %2963 = vmatprep.subr.mxu0 0.0
    %2964 = vmatpush1.msra.mxu0 0.0
    %2965 = vmatprep.subr.mxu0 0.0
    %2966 = vmatpush1.msra.mxu0 0.0
    %2967 = vmatprep.subr.mxu0 0.0
    %2968 = vmatpush1.msra.mxu0 0.0
    %2969 = vmatprep.subr.mxu0 0.0
    %2970 = vmatpush1.msra.mxu0 0.0
    %2971 = vmatprep.subr.mxu0 0.0
    %2972 = vmatpush1.msra.mxu0 0.0
    %2973 = vmatprep.subr.mxu0 0.0
    %2974 = vmatpush1.msra.mxu0 0.0
    %2975 = vmatprep.subr.mxu0 0.0
    %2976 = vmatpush1.msra.mxu0 0.0
    %2977 = vmatprep.subr.mxu0 0.0
    %2978 = vmatpush1.msra.mxu0 0.0
    %2979 = vmatprep.subr.mxu0 0.0
    %2980 = vmatpush1.msra.mxu0 0.0
    %2981 = vmatprep.subr.mxu0 0.0
    %2982 = vmatpush1.msra.mxu0 0.0
    %2983 = vmatprep.subr.mxu0 0.0
    %2984 = vmatpush1.msra.mxu0 0.0
    %2985 = vmatprep.subr.mxu0 0.0
    %2986 = vmatpush1.msra.mxu0 0.0
    %2987 = vmatprep.subr.mxu0 0.0
    %2988 = vmatpush1.msra.mxu0 0.0
    %2989 = vmatprep.mubr.f32.mxu0 0.0
    %2990 = vmatmul.mubr.f32.gmra.mrb[0].mxu0 %v2849
    %v2991 = vpop.f32.mrb[0].mxu0
    %v2992 = vadd.f32 0.0, %v2991
    %v2993 = vpop.f32.mrb[0].mxu0
    %v2994 = vadd.f32 0.0, %v2993
    %2995 = vdwg.mxu0
    %v2996 = vadd.f32 %v2850, %v2921
    %v2997 = vadd.f32 %v2851, %v2923
    %v2998 = vadd.f32 %v2852, %v2992
    %v2999 = vadd.f32 %v2853, %v2994
    %v3000 = vxor.u32 %v2996, 2147483648
    %v3001 = vmul.f32 %v3000, 1.442695
    %v3002 = vpow.pop %v3001
    %v3003 = vadd.f32 %v3002, 1.0
    %v3004 = vrcp.pop %v3003
    %v3005 = vmul.f32 1.0, %v3004
    %v3006 = vxor.u32 %v2997, 2147483648
    %v3007 = vmul.f32 %v3006, 1.442695
    %v3008 = vpow.pop %v3007
    %v3009 = vadd.f32 %v3008, 1.0
    %v3010 = vrcp.pop %v3009
    %v3011 = vmul.f32 1.0, %v3010
    %v3012 = vtanh.pop %v2998
    %v3013 = vxor.u32 %v2999, 2147483648
    %v3014 = vmul.f32 %v3013, 1.442695
    %v3015 = vpow.pop %v3014
    %v3016 = vadd.f32 %v3015, 1.0
    %v3017 = vrcp.pop %v3016
    %v3018 = vmul.f32 1.0, %v3017
    %v3019 = vmul.f32 %v3011, %v2847
    %v3020 = vmul.f32 %v3005, %v3012
    %v3021 = vadd.f32 %v3019, %v3020
    %v3022 = vtanh.pop %v3021
    %v3023 = vmul.f32 %v3018, %v3022
    %v3024 = vld [vmem:[%s1201] sm:$0xff]
    %v3025 = vld [vmem:[%s1201 + $0x8] sm:$0xff]
    %v3026 = vld [vmem:[%s1201 + $0x10] sm:$0xff]
    %v3027 = vld [vmem:[%s1201 + $0x18] sm:$0xff]
    %3028 = vmatprep.subr.mxu0 %v2265
    %3029 = vmatpush1.msra.mxu0 %v2264
    %3030 = vmatprep.subr.mxu0 %v2269
    %3031 = vmatpush1.msra.mxu0 %v2268
    %3032 = vmatprep.subr.mxu0 %v2273
    %3033 = vmatpush1.msra.mxu0 %v2272
    %3034 = vmatprep.subr.mxu0 %v2277
    %3035 = vmatpush1.msra.mxu0 %v2276
    %3036 = vmatprep.subr.mxu0 %v2281
    %3037 = vmatpush1.msra.mxu0 %v2280
    %3038 = vmatprep.subr.mxu0 %v2285
    %3039 = vmatpush1.msra.mxu0 %v2284
    %3040 = vmatprep.subr.mxu0 %v2289
    %3041 = vmatpush1.msra.mxu0 %v2288
    %3042 = vmatprep.subr.mxu0 %v2293
    %3043 = vmatpush1.msra.mxu0 %v2292
    %3044 = vmatprep.subr.mxu0 %v2297
    %3045 = vmatpush1.msra.mxu0 %v2296
    %3046 = vmatprep.subr.mxu0 %v2301
    %3047 = vmatpush1.msra.mxu0 %v2300
    %3048 = vmatprep.subr.mxu0 %v2305
    %3049 = vmatpush1.msra.mxu0 %v2304
    %3050 = vmatprep.subr.mxu0 %v2309
    %3051 = vmatpush1.msra.mxu0 %v2308
    %3052 = vmatprep.subr.mxu0 %v2313
    %3053 = vmatpush1.msra.mxu0 %v2312
    %3054 = vmatprep.subr.mxu0 %v2317
    %3055 = vmatpush1.msra.mxu0 %v2316
    %3056 = vmatprep.subr.mxu0 %v2321
    %3057 = vmatpush1.msra.mxu0 %v2320
    %3058 = vmatprep.subr.mxu0 %v2325
    %3059 = vmatpush1.msra.mxu0 %v2324
    %3060 = vmatprep.subr.mxu0 0.0
    %3061 = vmatpush1.msra.mxu0 0.0
    %3062 = vmatprep.subr.mxu0 0.0
    %3063 = vmatpush1.msra.mxu0 0.0
    %3064 = vmatprep.subr.mxu0 0.0
    %3065 = vmatpush1.msra.mxu0 0.0
    %3066 = vmatprep.subr.mxu0 0.0
    %3067 = vmatpush1.msra.mxu0 0.0
    %3068 = vmatprep.subr.mxu0 0.0
    %3069 = vmatpush1.msra.mxu0 0.0
    %3070 = vmatprep.subr.mxu0 0.0
    %3071 = vmatpush1.msra.mxu0 0.0
    %3072 = vmatprep.subr.mxu0 0.0
    %3073 = vmatpush1.msra.mxu0 0.0
    %3074 = vmatprep.subr.mxu0 0.0
    %3075 = vmatpush1.msra.mxu0 0.0
    %3076 = vmatprep.subr.mxu0 0.0
    %3077 = vmatpush1.msra.mxu0 0.0
    %3078 = vmatprep.subr.mxu0 0.0
    %3079 = vmatpush1.msra.mxu0 0.0
    %3080 = vmatprep.subr.mxu0 0.0
    %3081 = vmatpush1.msra.mxu0 0.0
    %3082 = vmatprep.subr.mxu0 0.0
    %3083 = vmatpush1.msra.mxu0 0.0
    %3084 = vmatprep.subr.mxu0 0.0
    %3085 = vmatpush1.msra.mxu0 0.0
    %3086 = vmatprep.subr.mxu0 0.0
    %3087 = vmatpush1.msra.mxu0 0.0
    %3088 = vmatprep.subr.mxu0 0.0
    %3089 = vmatpush1.msra.mxu0 0.0
    %3090 = vmatprep.subr.mxu0 0.0
    %3091 = vmatpush1.msra.mxu0 0.0
    %3092 = vmatprep.mubr.f32.mxu0 0.0
    %3093 = vmatmul.mubr.f32.gmra.mrb[0].mxu0 %v3023
    %v3094 = vpop.f32.mrb[0].mxu0
    %v3095 = vadd.f32 0.0, %v3094
    %v3096 = vpop.f32.mrb[0].mxu0
    %v3097 = vadd.f32 0.0, %v3096
    %3098 = vdwg.mxu0
    %3099 = vmatprep.subr.mxu0 %v2267
    %3100 = vmatpush1.msra.mxu0 %v2266
    %3101 = vmatprep.subr.mxu0 %v2271
    %3102 = vmatpush1.msra.mxu0 %v2270
    %3103 = vmatprep.subr.mxu0 %v2275
    %3104 = vmatpush1.msra.mxu0 %v2274
    %3105 = vmatprep.subr.mxu0 %v2279
    %3106 = vmatpush1.msra.mxu0 %v2278
    %3107 = vmatprep.subr.mxu0 %v2283
    %3108 = vmatpush1.msra.mxu0 %v2282
    %3109 = vmatprep.subr.mxu0 %v2287
    %3110 = vmatpush1.msra.mxu0 %v2286
    %3111 = vmatprep.subr.mxu0 %v2291
    %3112 = vmatpush1.msra.mxu0 %v2290
    %3113 = vmatprep.subr.mxu0 %v2295
    %3114 = vmatpush1.msra.mxu0 %v2294
    %3115 = vmatprep.subr.mxu0 %v2299
    %3116 = vmatpush1.msra.mxu0 %v2298
    %3117 = vmatprep.subr.mxu0 %v2303
    %3118 = vmatpush1.msra.mxu0 %v2302
    %3119 = vmatprep.subr.mxu0 %v2307
    %3120 = vmatpush1.msra.mxu0 %v2306
    %3121 = vmatprep.subr.mxu0 %v2311
    %3122 = vmatpush1.msra.mxu0 %v2310
    %3123 = vmatprep.subr.mxu0 %v2315
    %3124 = vmatpush1.msra.mxu0 %v2314
    %3125 = vmatprep.subr.mxu0 %v2319
    %3126 = vmatpush1.msra.mxu0 %v2318
    %3127 = vmatprep.subr.mxu0 %v2323
    %3128 = vmatpush1.msra.mxu0 %v2322
    %3129 = vmatprep.subr.mxu0 %v2327
    %3130 = vmatpush1.msra.mxu0 %v2326
    %3131 = vmatprep.subr.mxu0 0.0
    %3132 = vmatpush1.msra.mxu0 0.0
    %3133 = vmatprep.subr.mxu0 0.0
    %3134 = vmatpush1.msra.mxu0 0.0
    %3135 = vmatprep.subr.mxu0 0.0
    %3136 = vmatpush1.msra.mxu0 0.0
    %3137 = vmatprep.subr.mxu0 0.0
    %3138 = vmatpush1.msra.mxu0 0.0
    %3139 = vmatprep.subr.mxu0 0.0
    %3140 = vmatpush1.msra.mxu0 0.0
    %3141 = vmatprep.subr.mxu0 0.0
    %3142 = vmatpush1.msra.mxu0 0.0
    %3143 = vmatprep.subr.mxu0 0.0
    %3144 = vmatpush1.msra.mxu0 0.0
    %3145 = vmatprep.subr.mxu0 0.0
    %3146 = vmatpush1.msra.mxu0 0.0
    %3147 = vmatprep.subr.mxu0 0.0
    %3148 = vmatpush1.msra.mxu0 0.0
    %3149 = vmatprep.subr.mxu0 0.0
    %3150 = vmatpush1.msra.mxu0 0.0
    %3151 = vmatprep.subr.mxu0 0.0
    %3152 = vmatpush1.msra.mxu0 0.0
    %3153 = vmatprep.subr.mxu0 0.0
    %3154 = vmatpush1.msra.mxu0 0.0
    %3155 = vmatprep.subr.mxu0 0.0
    %3156 = vmatpush1.msra.mxu0 0.0
    %3157 = vmatprep.subr.mxu0 0.0
    %3158 = vmatpush1.msra.mxu0 0.0
    %3159 = vmatprep.subr.mxu0 0.0
    %3160 = vmatpush1.msra.mxu0 0.0
    %3161 = vmatprep.subr.mxu0 0.0
    %3162 = vmatpush1.msra.mxu0 0.0
    %3163 = vmatprep.mubr.f32.mxu0 0.0
    %3164 = vmatmul.mubr.f32.gmra.mrb[0].mxu0 %v3023
    %v3165 = vpop.f32.mrb[0].mxu0
    %v3166 = vadd.f32 0.0, %v3165
    %v3167 = vpop.f32.mrb[0].mxu0
    %v3168 = vadd.f32 0.0, %v3167
    %3169 = vdwg.mxu0
    %v3170 = vadd.f32 %v3024, %v3095
    %v3171 = vadd.f32 %v3025, %v3097
    %v3172 = vadd.f32 %v3026, %v3166
    %v3173 = vadd.f32 %v3027, %v3168
    %v3174 = vxor.u32 %v3170, 2147483648
    %v3175 = vmul.f32 %v3174, 1.442695
    %v3176 = vpow.pop %v3175
    %v3177 = vadd.f32 %v3176, 1.0
    %v3178 = vrcp.pop %v3177
    %v3179 = vmul.f32 1.0, %v3178
    %v3180 = vxor.u32 %v3171, 2147483648
    %v3181 = vmul.f32 %v3180, 1.442695
    %v3182 = vpow.pop %v3181
    %v3183 = vadd.f32 %v3182, 1.0
    %v3184 = vrcp.pop %v3183
    %v3185 = vmul.f32 1.0, %v3184
    %v3186 = vtanh.pop %v3172
    %v3187 = vxor.u32 %v3173, 2147483648
    %v3188 = vmul.f32 %v3187, 1.442695
    %v3189 = vpow.pop %v3188
    %v3190 = vadd.f32 %v3189, 1.0
    %v3191 = vrcp.pop %v3190
    %v3192 = vmul.f32 1.0, %v3191
    %v3193 = vmul.f32 %v3185, %v3021
    %v3194 = vmul.f32 %v3179, %v3186
    %v3195 = vadd.f32 %v3193, %v3194
    %v3196 = vtanh.pop %v3195
    %v3197 = vmul.f32 %v3192, %v3196
    %v3198 = vld [vmem:[%s1378] sm:$0xff]
    %v3199 = vld [vmem:[%s1378 + $0x8] sm:$0xff]
    %v3200 = vld [vmem:[%s1378 + $0x10] sm:$0xff]
    %v3201 = vld [vmem:[%s1378 + $0x18] sm:$0xff]
    %3202 = vmatprep.subr.mxu0 %v2265
    %3203 = vmatpush1.msra.mxu0 %v2264
    %3204 = vmatprep.subr.mxu0 %v2269
    %3205 = vmatpush1.msra.mxu0 %v2268
    %3206 = vmatprep.subr.mxu0 %v2273
    %3207 = vmatpush1.msra.mxu0 %v2272
    %3208 = vmatprep.subr.mxu0 %v2277
    %3209 = vmatpush1.msra.mxu0 %v2276
    %3210 = vmatprep.subr.mxu0 %v2281
    %3211 = vmatpush1.msra.mxu0 %v2280
    %3212 = vmatprep.subr.mxu0 %v2285
    %3213 = vmatpush1.msra.mxu0 %v2284
    %3214 = vmatprep.subr.mxu0 %v2289
    %3215 = vmatpush1.msra.mxu0 %v2288
    %3216 = vmatprep.subr.mxu0 %v2293
    %3217 = vmatpush1.msra.mxu0 %v2292
    %3218 = vmatprep.subr.mxu0 %v2297
    %3219 = vmatpush1.msra.mxu0 %v2296
    %3220 = vmatprep.subr.mxu0 %v2301
    %3221 = vmatpush1.msra.mxu0 %v2300
    %3222 = vmatprep.subr.mxu0 %v2305
    %3223 = vmatpush1.msra.mxu0 %v2304
    %3224 = vmatprep.subr.mxu0 %v2309
    %3225 = vmatpush1.msra.mxu0 %v2308
    %3226 = vmatprep.subr.mxu0 %v2313
    %3227 = vmatpush1.msra.mxu0 %v2312
    %3228 = vmatprep.subr.mxu0 %v2317
    %3229 = vmatpush1.msra.mxu0 %v2316
    %3230 = vmatprep.subr.mxu0 %v2321
    %3231 = vmatpush1.msra.mxu0 %v2320
    %3232 = vmatprep.subr.mxu0 %v2325
    %3233 = vmatpush1.msra.mxu0 %v2324
    %3234 = vmatprep.subr.mxu0 0.0
    %3235 = vmatpush1.msra.mxu0 0.0
    %3236 = vmatprep.subr.mxu0 0.0
    %3237 = vmatpush1.msra.mxu0 0.0
    %3238 = vmatprep.subr.mxu0 0.0
    %3239 = vmatpush1.msra.mxu0 0.0
    %3240 = vmatprep.subr.mxu0 0.0
    %3241 = vmatpush1.msra.mxu0 0.0
    %3242 = vmatprep.subr.mxu0 0.0
    %3243 = vmatpush1.msra.mxu0 0.0
    %3244 = vmatprep.subr.mxu0 0.0
    %3245 = vmatpush1.msra.mxu0 0.0
    %3246 = vmatprep.subr.mxu0 0.0
    %3247 = vmatpush1.msra.mxu0 0.0
    %3248 = vmatprep.subr.mxu0 0.0
    %3249 = vmatpush1.msra.mxu0 0.0
    %3250 = vmatprep.subr.mxu0 0.0
    %3251 = vmatpush1.msra.mxu0 0.0
    %3252 = vmatprep.subr.mxu0 0.0
    %3253 = vmatpush1.msra.mxu0 0.0
    %3254 = vmatprep.subr.mxu0 0.0
    %3255 = vmatpush1.msra.mxu0 0.0
    %3256 = vmatprep.subr.mxu0 0.0
    %3257 = vmatpush1.msra.mxu0 0.0
    %3258 = vmatprep.subr.mxu0 0.0
    %3259 = vmatpush1.msra.mxu0 0.0
    %3260 = vmatprep.subr.mxu0 0.0
    %3261 = vmatpush1.msra.mxu0 0.0
    %3262 = vmatprep.subr.mxu0 0.0
    %3263 = vmatpush1.msra.mxu0 0.0
    %3264 = vmatprep.subr.mxu0 0.0
    %3265 = vmatpush1.msra.mxu0 0.0
    %3266 = vmatprep.mubr.f32.mxu0 0.0
    %3267 = vmatmul.mubr.f32.gmra.mrb[0].mxu0 %v3197
    %v3268 = vpop.f32.mrb[0].mxu0
    %v3269 = vadd.f32 0.0, %v3268
    %v3270 = vpop.f32.mrb[0].mxu0
    %v3271 = vadd.f32 0.0, %v3270
    %3272 = vdwg.mxu0
    %3273 = vmatprep.subr.mxu0 %v2267
    %3274 = vmatpush1.msra.mxu0 %v2266
    %3275 = vmatprep.subr.mxu0 %v2271
    %3276 = vmatpush1.msra.mxu0 %v2270
    %3277 = vmatprep.subr.mxu0 %v2275
    %3278 = vmatpush1.msra.mxu0 %v2274
    %3279 = vmatprep.subr.mxu0 %v2279
    %3280 = vmatpush1.msra.mxu0 %v2278
    %3281 = vmatprep.subr.mxu0 %v2283
    %3282 = vmatpush1.msra.mxu0 %v2282
    %3283 = vmatprep.subr.mxu0 %v2287
    %3284 = vmatpush1.msra.mxu0 %v2286
    %3285 = vmatprep.subr.mxu0 %v2291
    %3286 = vmatpush1.msra.mxu0 %v2290
    %3287 = vmatprep.subr.mxu0 %v2295
    %3288 = vmatpush1.msra.mxu0 %v2294
    %3289 = vmatprep.subr.mxu0 %v2299
    %3290 = vmatpush1.msra.mxu0 %v2298
    %3291 = vmatprep.subr.mxu0 %v2303
    %3292 = vmatpush1.msra.mxu0 %v2302
    %3293 = vmatprep.subr.mxu0 %v2307
    %3294 = vmatpush1.msra.mxu0 %v2306
    %3295 = vmatprep.subr.mxu0 %v2311
    %3296 = vmatpush1.msra.mxu0 %v2310
    %3297 = vmatprep.subr.mxu0 %v2315
    %3298 = vmatpush1.msra.mxu0 %v2314
    %3299 = vmatprep.subr.mxu0 %v2319
    %3300 = vmatpush1.msra.mxu0 %v2318
    %3301 = vmatprep.subr.mxu0 %v2323
    %3302 = vmatpush1.msra.mxu0 %v2322
    %3303 = vmatprep.subr.mxu0 %v2327
    %3304 = vmatpush1.msra.mxu0 %v2326
    %3305 = vmatprep.subr.mxu0 0.0
    %3306 = vmatpush1.msra.mxu0 0.0
    %3307 = vmatprep.subr.mxu0 0.0
    %3308 = vmatpush1.msra.mxu0 0.0
    %3309 = vmatprep.subr.mxu0 0.0
    %3310 = vmatpush1.msra.mxu0 0.0
    %3311 = vmatprep.subr.mxu0 0.0
    %3312 = vmatpush1.msra.mxu0 0.0
    %3313 = vmatprep.subr.mxu0 0.0
    %3314 = vmatpush1.msra.mxu0 0.0
    %3315 = vmatprep.subr.mxu0 0.0
    %3316 = vmatpush1.msra.mxu0 0.0
    %3317 = vmatprep.subr.mxu0 0.0
    %3318 = vmatpush1.msra.mxu0 0.0
    %3319 = vmatprep.subr.mxu0 0.0
    %3320 = vmatpush1.msra.mxu0 0.0
    %3321 = vmatprep.subr.mxu0 0.0
    %3322 = vmatpush1.msra.mxu0 0.0
    %3323 = vmatprep.subr.mxu0 0.0
    %3324 = vmatpush1.msra.mxu0 0.0
    %3325 = vmatprep.subr.mxu0 0.0
    %3326 = vmatpush1.msra.mxu0 0.0
    %3327 = vmatprep.subr.mxu0 0.0
    %3328 = vmatpush1.msra.mxu0 0.0
    %3329 = vmatprep.subr.mxu0 0.0
    %3330 = vmatpush1.msra.mxu0 0.0
    %3331 = vmatprep.subr.mxu0 0.0
    %3332 = vmatpush1.msra.mxu0 0.0
    %3333 = vmatprep.subr.mxu0 0.0
    %3334 = vmatpush1.msra.mxu0 0.0
    %3335 = vmatprep.subr.mxu0 0.0
    %3336 = vmatpush1.msra.mxu0 0.0
    %3337 = vmatprep.mubr.f32.mxu0 0.0
    %3338 = vmatmul.mubr.f32.gmra.mrb[0].mxu0 %v3197
    %v3339 = vpop.f32.mrb[0].mxu0
    %v3340 = vadd.f32 0.0, %v3339
    %v3341 = vpop.f32.mrb[0].mxu0
    %v3342 = vadd.f32 0.0, %v3341
    %3343 = vdwg.mxu0
    %v3344 = vadd.f32 %v3198, %v3269
    %v3345 = vadd.f32 %v3199, %v3271
    %v3346 = vadd.f32 %v3200, %v3340
    %v3347 = vadd.f32 %v3201, %v3342
    %v3348 = vxor.u32 %v3344, 2147483648
    %v3349 = vmul.f32 %v3348, 1.442695
    %v3350 = vpow.pop %v3349
    %v3351 = vadd.f32 %v3350, 1.0
    %v3352 = vrcp.pop %v3351
    %v3353 = vmul.f32 1.0, %v3352
    %v3354 = vxor.u32 %v3345, 2147483648
    %v3355 = vmul.f32 %v3354, 1.442695
    %v3356 = vpow.pop %v3355
    %v3357 = vadd.f32 %v3356, 1.0
    %v3358 = vrcp.pop %v3357
    %v3359 = vmul.f32 1.0, %v3358
    %v3360 = vtanh.pop %v3346
    %v3361 = vxor.u32 %v3347, 2147483648
    %v3362 = vmul.f32 %v3361, 1.442695
    %v3363 = vpow.pop %v3362
    %v3364 = vadd.f32 %v3363, 1.0
    %v3365 = vrcp.pop %v3364
    %v3366 = vmul.f32 1.0, %v3365
    %v3367 = vmul.f32 %v3359, %v3195
    %v3368 = vmul.f32 %v3353, %v3360
    %v3369 = vadd.f32 %v3367, %v3368
    %v3370 = vtanh.pop %v3369
    %v3371 = vmul.f32 %v3366, %v3370
    %v3372 = vld [vmem:[%s1555] sm:$0xff]
    %v3373 = vld [vmem:[%s1555 + $0x8] sm:$0xff]
    %v3374 = vld [vmem:[%s1555 + $0x10] sm:$0xff]
    %v3375 = vld [vmem:[%s1555 + $0x18] sm:$0xff]
    %3376 = vmatprep.subr.mxu0 %v2265
    %3377 = vmatpush1.msra.mxu0 %v2264
    %3378 = vmatprep.subr.mxu0 %v2269
    %3379 = vmatpush1.msra.mxu0 %v2268
    %3380 = vmatprep.subr.mxu0 %v2273
    %3381 = vmatpush1.msra.mxu0 %v2272
    %3382 = vmatprep.subr.mxu0 %v2277
    %3383 = vmatpush1.msra.mxu0 %v2276
    %3384 = vmatprep.subr.mxu0 %v2281
    %3385 = vmatpush1.msra.mxu0 %v2280
    %3386 = vmatprep.subr.mxu0 %v2285
    %3387 = vmatpush1.msra.mxu0 %v2284
    %3388 = vmatprep.subr.mxu0 %v2289
    %3389 = vmatpush1.msra.mxu0 %v2288
    %3390 = vmatprep.subr.mxu0 %v2293
    %3391 = vmatpush1.msra.mxu0 %v2292
    %3392 = vmatprep.subr.mxu0 %v2297
    %3393 = vmatpush1.msra.mxu0 %v2296
    %3394 = vmatprep.subr.mxu0 %v2301
    %3395 = vmatpush1.msra.mxu0 %v2300
    %3396 = vmatprep.subr.mxu0 %v2305
    %3397 = vmatpush1.msra.mxu0 %v2304
    %3398 = vmatprep.subr.mxu0 %v2309
    %3399 = vmatpush1.msra.mxu0 %v2308
    %3400 = vmatprep.subr.mxu0 %v2313
    %3401 = vmatpush1.msra.mxu0 %v2312
    %3402 = vmatprep.subr.mxu0 %v2317
    %3403 = vmatpush1.msra.mxu0 %v2316
    %3404 = vmatprep.subr.mxu0 %v2321
    %3405 = vmatpush1.msra.mxu0 %v2320
    %3406 = vmatprep.subr.mxu0 %v2325
    %3407 = vmatpush1.msra.mxu0 %v2324
    %3408 = vmatprep.subr.mxu0 0.0
    %3409 = vmatpush1.msra.mxu0 0.0
    %3410 = vmatprep.subr.mxu0 0.0
    %3411 = vmatpush1.msra.mxu0 0.0
    %3412 = vmatprep.subr.mxu0 0.0
    %3413 = vmatpush1.msra.mxu0 0.0
    %3414 = vmatprep.subr.mxu0 0.0
    %3415 = vmatpush1.msra.mxu0 0.0
    %3416 = vmatprep.subr.mxu0 0.0
    %3417 = vmatpush1.msra.mxu0 0.0
    %3418 = vmatprep.subr.mxu0 0.0
    %3419 = vmatpush1.msra.mxu0 0.0
    %3420 = vmatprep.subr.mxu0 0.0
    %3421 = vmatpush1.msra.mxu0 0.0
    %3422 = vmatprep.subr.mxu0 0.0
    %3423 = vmatpush1.msra.mxu0 0.0
    %3424 = vmatprep.subr.mxu0 0.0
    %3425 = vmatpush1.msra.mxu0 0.0
    %3426 = vmatprep.subr.mxu0 0.0
    %3427 = vmatpush1.msra.mxu0 0.0
    %3428 = vmatprep.subr.mxu0 0.0
    %3429 = vmatpush1.msra.mxu0 0.0
    %3430 = vmatprep.subr.mxu0 0.0
    %3431 = vmatpush1.msra.mxu0 0.0
    %3432 = vmatprep.subr.mxu0 0.0
    %3433 = vmatpush1.msra.mxu0 0.0
    %3434 = vmatprep.subr.mxu0 0.0
    %3435 = vmatpush1.msra.mxu0 0.0
    %3436 = vmatprep.subr.mxu0 0.0
    %3437 = vmatpush1.msra.mxu0 0.0
    %3438 = vmatprep.subr.mxu0 0.0
    %3439 = vmatpush1.msra.mxu0 0.0
    %3440 = vmatprep.mubr.f32.mxu0 0.0
    %3441 = vmatmul.mubr.f32.gmra.mrb[0].mxu0 %v3371
    %v3442 = vpop.f32.mrb[0].mxu0
    %v3443 = vadd.f32 0.0, %v3442
    %v3444 = vpop.f32.mrb[0].mxu0
    %v3445 = vadd.f32 0.0, %v3444
    %3446 = vdwg.mxu0
    %3447 = vmatprep.subr.mxu0 %v2267
    %3448 = vmatpush1.msra.mxu0 %v2266
    %3449 = vmatprep.subr.mxu0 %v2271
    %3450 = vmatpush1.msra.mxu0 %v2270
    %3451 = vmatprep.subr.mxu0 %v2275
    %3452 = vmatpush1.msra.mxu0 %v2274
    %3453 = vmatprep.subr.mxu0 %v2279
    %3454 = vmatpush1.msra.mxu0 %v2278
    %3455 = vmatprep.subr.mxu0 %v2283
    %3456 = vmatpush1.msra.mxu0 %v2282
    %3457 = vmatprep.subr.mxu0 %v2287
    %3458 = vmatpush1.msra.mxu0 %v2286
    %3459 = vmatprep.subr.mxu0 %v2291
    %3460 = vmatpush1.msra.mxu0 %v2290
    %3461 = vmatprep.subr.mxu0 %v2295
    %3462 = vmatpush1.msra.mxu0 %v2294
    %3463 = vmatprep.subr.mxu0 %v2299
    %3464 = vmatpush1.msra.mxu0 %v2298
    %3465 = vmatprep.subr.mxu0 %v2303
    %3466 = vmatpush1.msra.mxu0 %v2302
    %3467 = vmatprep.subr.mxu0 %v2307
    %3468 = vmatpush1.msra.mxu0 %v2306
    %3469 = vmatprep.subr.mxu0 %v2311
    %3470 = vmatpush1.msra.mxu0 %v2310
    %3471 = vmatprep.subr.mxu0 %v2315
    %3472 = vmatpush1.msra.mxu0 %v2314
    %3473 = vmatprep.subr.mxu0 %v2319
    %3474 = vmatpush1.msra.mxu0 %v2318
    %3475 = vmatprep.subr.mxu0 %v2323
    %3476 = vmatpush1.msra.mxu0 %v2322
    %3477 = vmatprep.subr.mxu0 %v2327
    %3478 = vmatpush1.msra.mxu0 %v2326
    %3479 = vmatprep.subr.mxu0 0.0
    %3480 = vmatpush1.msra.mxu0 0.0
    %3481 = vmatprep.subr.mxu0 0.0
    %3482 = vmatpush1.msra.mxu0 0.0
    %3483 = vmatprep.subr.mxu0 0.0
    %3484 = vmatpush1.msra.mxu0 0.0
    %3485 = vmatprep.subr.mxu0 0.0
    %3486 = vmatpush1.msra.mxu0 0.0
    %3487 = vmatprep.subr.mxu0 0.0
    %3488 = vmatpush1.msra.mxu0 0.0
    %3489 = vmatprep.subr.mxu0 0.0
    %3490 = vmatpush1.msra.mxu0 0.0
    %3491 = vmatprep.subr.mxu0 0.0
    %3492 = vmatpush1.msra.mxu0 0.0
    %3493 = vmatprep.subr.mxu0 0.0
    %3494 = vmatpush1.msra.mxu0 0.0
    %3495 = vmatprep.subr.mxu0 0.0
    %3496 = vmatpush1.msra.mxu0 0.0
    %3497 = vmatprep.subr.mxu0 0.0
    %3498 = vmatpush1.msra.mxu0 0.0
    %3499 = vmatprep.subr.mxu0 0.0
    %3500 = vmatpush1.msra.mxu0 0.0
    %3501 = vmatprep.subr.mxu0 0.0
    %3502 = vmatpush1.msra.mxu0 0.0
    %3503 = vmatprep.subr.mxu0 0.0
    %3504 = vmatpush1.msra.mxu0 0.0
    %3505 = vmatprep.subr.mxu0 0.0
    %3506 = vmatpush1.msra.mxu0 0.0
    %3507 = vmatprep.subr.mxu0 0.0
    %3508 = vmatpush1.msra.mxu0 0.0
    %3509 = vmatprep.subr.mxu0 0.0
    %3510 = vmatpush1.msra.mxu0 0.0
    %3511 = vmatprep.mubr.f32.mxu0 0.0
    %3512 = vmatmul.mubr.f32.gmra.mrb[0].mxu0 %v3371
    %v3513 = vpop.f32.mrb[0].mxu0
    %v3514 = vadd.f32 0.0, %v3513
    %v3515 = vpop.f32.mrb[0].mxu0
    %v3516 = vadd.f32 0.0, %v3515
    %3517 = vdwg.mxu0
    %v3518 = vadd.f32 %v3372, %v3443
    %v3519 = vadd.f32 %v3373, %v3445
    %v3520 = vadd.f32 %v3374, %v3514
    %v3521 = vadd.f32 %v3375, %v3516
    %v3522 = vxor.u32 %v3518, 2147483648
    %v3523 = vmul.f32 %v3522, 1.442695
    %v3524 = vpow.pop %v3523
    %v3525 = vadd.f32 %v3524, 1.0
    %v3526 = vrcp.pop %v3525
    %v3527 = vmul.f32 1.0, %v3526
    %v3528 = vxor.u32 %v3519, 2147483648
    %v3529 = vmul.f32 %v3528, 1.442695
    %v3530 = vpow.pop %v3529
    %v3531 = vadd.f32 %v3530, 1.0
    %v3532 = vrcp.pop %v3531
    %v3533 = vmul.f32 1.0, %v3532
    %v3534 = vtanh.pop %v3520
    %v3535 = vxor.u32 %v3521, 2147483648
    %v3536 = vmul.f32 %v3535, 1.442695
    %v3537 = vpow.pop %v3536
    %v3538 = vadd.f32 %v3537, 1.0
    %v3539 = vrcp.pop %v3538
    %v3540 = vmul.f32 1.0, %v3539
    %v3541 = vmul.f32 %v3533, %v3369
    %v3542 = vmul.f32 %v3527, %v3534
    %v3543 = vadd.f32 %v3541, %v3542
    %v3544 = vtanh.pop %v3543
    %v3545 = vmul.f32 %v3540, %v3544
    %v3546 = vld [vmem:[%s1732] sm:$0xff]
    %v3547 = vld [vmem:[%s1732 + $0x8] sm:$0xff]
    %v3548 = vld [vmem:[%s1732 + $0x10] sm:$0xff]
    %v3549 = vld [vmem:[%s1732 + $0x18] sm:$0xff]
    %3550 = vmatprep.subr.mxu0 %v2265
    %3551 = vmatpush1.msra.mxu0 %v2264
    %3552 = vmatprep.subr.mxu0 %v2269
    %3553 = vmatpush1.msra.mxu0 %v2268
    %3554 = vmatprep.subr.mxu0 %v2273
    %3555 = vmatpush1.msra.mxu0 %v2272
    %3556 = vmatprep.subr.mxu0 %v2277
    %3557 = vmatpush1.msra.mxu0 %v2276
    %3558 = vmatprep.subr.mxu0 %v2281
    %3559 = vmatpush1.msra.mxu0 %v2280
    %3560 = vmatprep.subr.mxu0 %v2285
    %3561 = vmatpush1.msra.mxu0 %v2284
    %3562 = vmatprep.subr.mxu0 %v2289
    %3563 = vmatpush1.msra.mxu0 %v2288
    %3564 = vmatprep.subr.mxu0 %v2293
    %3565 = vmatpush1.msra.mxu0 %v2292
    %3566 = vmatprep.subr.mxu0 %v2297
    %3567 = vmatpush1.msra.mxu0 %v2296
    %3568 = vmatprep.subr.mxu0 %v2301
    %3569 = vmatpush1.msra.mxu0 %v2300
    %3570 = vmatprep.subr.mxu0 %v2305
    %3571 = vmatpush1.msra.mxu0 %v2304
    %3572 = vmatprep.subr.mxu0 %v2309
    %3573 = vmatpush1.msra.mxu0 %v2308
    %3574 = vmatprep.subr.mxu0 %v2313
    %3575 = vmatpush1.msra.mxu0 %v2312
    %3576 = vmatprep.subr.mxu0 %v2317
    %3577 = vmatpush1.msra.mxu0 %v2316
    %3578 = vmatprep.subr.mxu0 %v2321
    %3579 = vmatpush1.msra.mxu0 %v2320
    %3580 = vmatprep.subr.mxu0 %v2325
    %3581 = vmatpush1.msra.mxu0 %v2324
    %3582 = vmatprep.subr.mxu0 0.0
    %3583 = vmatpush1.msra.mxu0 0.0
    %3584 = vmatprep.subr.mxu0 0.0
    %3585 = vmatpush1.msra.mxu0 0.0
    %3586 = vmatprep.subr.mxu0 0.0
    %3587 = vmatpush1.msra.mxu0 0.0
    %3588 = vmatprep.subr.mxu0 0.0
    %3589 = vmatpush1.msra.mxu0 0.0
    %3590 = vmatprep.subr.mxu0 0.0
    %3591 = vmatpush1.msra.mxu0 0.0
    %3592 = vmatprep.subr.mxu0 0.0
    %3593 = vmatpush1.msra.mxu0 0.0
    %3594 = vmatprep.subr.mxu0 0.0
    %3595 = vmatpush1.msra.mxu0 0.0
    %3596 = vmatprep.subr.mxu0 0.0
    %3597 = vmatpush1.msra.mxu0 0.0
    %3598 = vmatprep.subr.mxu0 0.0
    %3599 = vmatpush1.msra.mxu0 0.0
    %3600 = vmatprep.subr.mxu0 0.0
    %3601 = vmatpush1.msra.mxu0 0.0
    %3602 = vmatprep.subr.mxu0 0.0
    %3603 = vmatpush1.msra.mxu0 0.0
    %3604 = vmatprep.subr.mxu0 0.0
    %3605 = vmatpush1.msra.mxu0 0.0
    %3606 = vmatprep.subr.mxu0 0.0
    %3607 = vmatpush1.msra.mxu0 0.0
    %3608 = vmatprep.subr.mxu0 0.0
    %3609 = vmatpush1.msra.mxu0 0.0
    %3610 = vmatprep.subr.mxu0 0.0
    %3611 = vmatpush1.msra.mxu0 0.0
    %3612 = vmatprep.subr.mxu0 0.0
    %3613 = vmatpush1.msra.mxu0 0.0
    %3614 = vmatprep.mubr.f32.mxu0 0.0
    %3615 = vmatmul.mubr.f32.gmra.mrb[0].mxu0 %v3545
    %v3616 = vpop.f32.mrb[0].mxu0
    %v3617 = vadd.f32 0.0, %v3616
    %v3618 = vpop.f32.mrb[0].mxu0
    %v3619 = vadd.f32 0.0, %v3618
    %3620 = vdwg.mxu0
    %3621 = vmatprep.subr.mxu0 %v2267
    %3622 = vmatpush1.msra.mxu0 %v2266
    %3623 = vmatprep.subr.mxu0 %v2271
    %3624 = vmatpush1.msra.mxu0 %v2270
    %3625 = vmatprep.subr.mxu0 %v2275
    %3626 = vmatpush1.msra.mxu0 %v2274
    %3627 = vmatprep.subr.mxu0 %v2279
    %3628 = vmatpush1.msra.mxu0 %v2278
    %3629 = vmatprep.subr.mxu0 %v2283
    %3630 = vmatpush1.msra.mxu0 %v2282
    %3631 = vmatprep.subr.mxu0 %v2287
    %3632 = vmatpush1.msra.mxu0 %v2286
    %3633 = vmatprep.subr.mxu0 %v2291
    %3634 = vmatpush1.msra.mxu0 %v2290
    %3635 = vmatprep.subr.mxu0 %v2295
    %3636 = vmatpush1.msra.mxu0 %v2294
    %3637 = vmatprep.subr.mxu0 %v2299
    %3638 = vmatpush1.msra.mxu0 %v2298
    %3639 = vmatprep.subr.mxu0 %v2303
    %3640 = vmatpush1.msra.mxu0 %v2302
    %3641 = vmatprep.subr.mxu0 %v2307
    %3642 = vmatpush1.msra.mxu0 %v2306
    %3643 = vmatprep.subr.mxu0 %v2311
    %3644 = vmatpush1.msra.mxu0 %v2310
    %3645 = vmatprep.subr.mxu0 %v2315
    %3646 = vmatpush1.msra.mxu0 %v2314
    %3647 = vmatprep.subr.mxu0 %v2319
    %3648 = vmatpush1.msra.mxu0 %v2318
    %3649 = vmatprep.subr.mxu0 %v2323
    %3650 = vmatpush1.msra.mxu0 %v2322
    %3651 = vmatprep.subr.mxu0 %v2327
    %3652 = vmatpush1.msra.mxu0 %v2326
    %3653 = vmatprep.subr.mxu0 0.0
    %3654 = vmatpush1.msra.mxu0 0.0
    %3655 = vmatprep.subr.mxu0 0.0
    %3656 = vmatpush1.msra.mxu0 0.0
    %3657 = vmatprep.subr.mxu0 0.0
    %3658 = vmatpush1.msra.mxu0 0.0
    %3659 = vmatprep.subr.mxu0 0.0
    %3660 = vmatpush1.msra.mxu0 0.0
    %3661 = vmatprep.subr.mxu0 0.0
    %3662 = vmatpush1.msra.mxu0 0.0
    %3663 = vmatprep.subr.mxu0 0.0
    %3664 = vmatpush1.msra.mxu0 0.0
    %3665 = vmatprep.subr.mxu0 0.0
    %3666 = vmatpush1.msra.mxu0 0.0
    %3667 = vmatprep.subr.mxu0 0.0
    %3668 = vmatpush1.msra.mxu0 0.0
    %3669 = vmatprep.subr.mxu0 0.0
    %3670 = vmatpush1.msra.mxu0 0.0
    %3671 = vmatprep.subr.mxu0 0.0
    %3672 = vmatpush1.msra.mxu0 0.0
    %3673 = vmatprep.subr.mxu0 0.0
    %3674 = vmatpush1.msra.mxu0 0.0
    %3675 = vmatprep.subr.mxu0 0.0
    %3676 = vmatpush1.msra.mxu0 0.0
    %3677 = vmatprep.subr.mxu0 0.0
    %3678 = vmatpush1.msra.mxu0 0.0
    %3679 = vmatprep.subr.mxu0 0.0
    %3680 = vmatpush1.msra.mxu0 0.0
    %3681 = vmatprep.subr.mxu0 0.0
    %3682 = vmatpush1.msra.mxu0 0.0
    %3683 = vmatprep.subr.mxu0 0.0
    %3684 = vmatpush1.msra.mxu0 0.0
    %3685 = vmatprep.mubr.f32.mxu0 0.0
    %3686 = vmatmul.mubr.f32.gmra.mrb[0].mxu0 %v3545
    %v3687 = vpop.f32.mrb[0].mxu0
    %v3688 = vadd.f32 0.0, %v3687
    %v3689 = vpop.f32.mrb[0].mxu0
    %v3690 = vadd.f32 0.0, %v3689
    %3691 = vdwg.mxu0
    %v3692 = vadd.f32 %v3546, %v3617
    %v3693 = vadd.f32 %v3547, %v3619
    %v3694 = vadd.f32 %v3548, %v3688
    %v3695 = vadd.f32 %v3549, %v3690
    %v3696 = vxor.u32 %v3692, 2147483648
    %v3697 = vmul.f32 %v3696, 1.442695
    %v3698 = vpow.pop %v3697
    %v3699 = vadd.f32 %v3698, 1.0
    %v3700 = vrcp.pop %v3699
    %v3701 = vmul.f32 1.0, %v3700
    %v3702 = vxor.u32 %v3693, 2147483648
    %v3703 = vmul.f32 %v3702, 1.442695
    %v3704 = vpow.pop %v3703
    %v3705 = vadd.f32 %v3704, 1.0
    %v3706 = vrcp.pop %v3705
    %v3707 = vmul.f32 1.0, %v3706
    %v3708 = vtanh.pop %v3694
    %v3709 = vxor.u32 %v3695, 2147483648
    %v3710 = vmul.f32 %v3709, 1.442695
    %v3711 = vpow.pop %v3710
    %v3712 = vadd.f32 %v3711, 1.0
    %v3713 = vrcp.pop %v3712
    %v3714 = vmul.f32 1.0, %v3713
    %v3715 = vmul.f32 %v3707, %v3543
    %v3716 = vmul.f32 %v3701, %v3708
    %v3717 = vadd.f32 %v3715, %v3716
    %v3718 = vtanh.pop %v3717
    %v3719 = vmul.f32 %v3714, %v3718
    %v3720 = vld [vmem:[#allocation11] sm:$0xff]
    %v3721 = vld [vmem:[#allocation11 + $0x8] sm:$0xff]
    %v3722 = vld [vmem:[#allocation11 + $0x10] sm:$0xff]
    %v3723 = vld [vmem:[#allocation11 + $0x18] sm:$0xff]
    %v3724 = vld [vmem:[#allocation11 + $0x20] sm:$0xff]
    %v3725 = vld [vmem:[#allocation11 + $0x28] sm:$0xff]
    %v3726 = vld [vmem:[#allocation11 + $0x30] sm:$0xff]
    %v3727 = vld [vmem:[#allocation11 + $0x38] sm:$0xff]
    %v3728 = vld [vmem:[#allocation11 + $0x40] sm:$0xff]
    %v3729 = vld [vmem:[#allocation11 + $0x48] sm:$0xff]
    %v3730 = vld [vmem:[#allocation11 + $0x50] sm:$0xff]
    %v3731 = vld [vmem:[#allocation11 + $0x58] sm:$0xff]
    %v3732 = vld [vmem:[#allocation11 + $0x60] sm:$0xff]
    %v3733 = vld [vmem:[#allocation11 + $0x68] sm:$0xff]
    %v3734 = vld [vmem:[#allocation11 + $0x70] sm:$0xff]
    %v3735 = vld [vmem:[#allocation11 + $0x78] sm:$0xff]
    %v3736 = vld [vmem:[%s5] sm:$0x1]
    %v3738 = vlaneseq
    %v3739 = vshrl.u32 %v3738, 7
    %v3740 = vsub.s32 0, %v3739
    %v3741 = vrot.slane %v3736, %v3740
    %3743 = vmatprep.subr.mxu0 0.0
    %3744 = vmatpush1.msra.mxu0 %v3720
    %3745 = vmatprep.subr.mxu0 0.0
    %3746 = vmatpush1.msra.mxu0 %v3721
    %3747 = vmatprep.subr.mxu0 0.0
    %3748 = vmatpush1.msra.mxu0 %v3722
    %3749 = vmatprep.subr.mxu0 0.0
    %3750 = vmatpush1.msra.mxu0 %v3723
    %3751 = vmatprep.subr.mxu0 0.0
    %3752 = vmatpush1.msra.mxu0 %v3724
    %3753 = vmatprep.subr.mxu0 0.0
    %3754 = vmatpush1.msra.mxu0 %v3725
    %3755 = vmatprep.subr.mxu0 0.0
    %3756 = vmatpush1.msra.mxu0 %v3726
    %3757 = vmatprep.subr.mxu0 0.0
    %3758 = vmatpush1.msra.mxu0 %v3727
    %3759 = vmatprep.subr.mxu0 0.0
    %3760 = vmatpush1.msra.mxu0 %v3728
    %3761 = vmatprep.subr.mxu0 0.0
    %3762 = vmatpush1.msra.mxu0 %v3729
    %3763 = vmatprep.subr.mxu0 0.0
    %3764 = vmatpush1.msra.mxu0 %v3730
    %3765 = vmatprep.subr.mxu0 0.0
    %3766 = vmatpush1.msra.mxu0 %v3731
    %3767 = vmatprep.subr.mxu0 0.0
    %3768 = vmatpush1.msra.mxu0 %v3732
    %3769 = vmatprep.subr.mxu0 0.0
    %3770 = vmatpush1.msra.mxu0 %v3733
    %3771 = vmatprep.subr.mxu0 0.0
    %3772 = vmatpush1.msra.mxu0 %v3734
    %3773 = vmatprep.subr.mxu0 0.0
    %3774 = vmatpush1.msra.mxu0 %v3735
    %3775 = vmatprep.subr.mxu0 0.0
    %3776 = vmatpush1.msra.mxu0 0.0
    %3777 = vmatprep.subr.mxu0 0.0
    %3778 = vmatpush1.msra.mxu0 0.0
    %3779 = vmatprep.subr.mxu0 0.0
    %3780 = vmatpush1.msra.mxu0 0.0
    %3781 = vmatprep.subr.mxu0 0.0
    %3782 = vmatpush1.msra.mxu0 0.0
    %3783 = vmatprep.subr.mxu0 0.0
    %3784 = vmatpush1.msra.mxu0 0.0
    %3785 = vmatprep.subr.mxu0 0.0
    %3786 = vmatpush1.msra.mxu0 0.0
    %3787 = vmatprep.subr.mxu0 0.0
    %3788 = vmatpush1.msra.mxu0 0.0
    %3789 = vmatprep.subr.mxu0 0.0
    %3790 = vmatpush1.msra.mxu0 0.0
    %3791 = vmatprep.subr.mxu0 0.0
    %3792 = vmatpush1.msra.mxu0 0.0
    %3793 = vmatprep.subr.mxu0 0.0
    %3794 = vmatpush1.msra.mxu0 0.0
    %3795 = vmatprep.subr.mxu0 0.0
    %3796 = vmatpush1.msra.mxu0 0.0
    %3797 = vmatprep.subr.mxu0 0.0
    %3798 = vmatpush1.msra.mxu0 0.0
    %3799 = vmatprep.subr.mxu0 0.0
    %3800 = vmatpush1.msra.mxu0 0.0
    %3801 = vmatprep.subr.mxu0 0.0
    %3802 = vmatpush1.msra.mxu0 0.0
    %3803 = vmatprep.subr.mxu0 0.0
    %3804 = vmatpush1.msra.mxu0 0.0
    %3805 = vmatprep.subr.mxu0 0.0
    %3806 = vmatpush1.msra.mxu0 0.0
    %3807 = vmatprep.mubr.f32.mxu0 0.0
    %3808 = vmatmul.mubr.f32.gmra.mrb[0].mxu0 %v3719
    %v3809 = vpop.f32.mrb[0].mxu0
    %v3810 = vadd.f32 %v3741, %v3809
    %v3811 = vpop.f32.mrb[0].mxu0
    %3812 = vdwg.mxu0
    %3813 = vst [vmem:[#allocation13] sm:$0xff] %v3810
    // Predicated region
    $region42: #{tpu_custom_call.1} parent=1 // pred_check
      _
    $region43: #{tpu_custom_call.1} parent=1 // pred_check_branch
      %3815 = sbr.rel (0) target = $region45
    $region44: #{tpu_custom_call.1} parent=1 // pred_region
      %s3817 = ssub.s32 128, 128
      %3818 = vsyncadd [#allocation7], %s3817
      %s3820 = sshll.u32 [#allocation13], 4
      %s3821 = int_to_ptr.vmem [resolvable:$true] %s3820
      %3823 = dma.vmem_to_hbm [thread:$0]  %s3821, 128, %s6, [#allocation7]
    $region45: #{tpu_custom_call.1} parent=1 // pred_fallthru
      _
    // Predicated region
    $region46: #{tpu_custom_call.1} parent=1 // pred_check
      _
    $region47: #{tpu_custom_call.1} parent=1 // pred_check_branch
      %3825 = sbr.rel (0) target = $region49
    $region48: #{tpu_custom_call.1} parent=1 // pred_region
      %3826 = dma.done [#allocation7], 128
    $region49: #{tpu_custom_call.1} parent=1 // pred_fallthru
      _
    %3827 = vsyncpa [#allocation6], 1
    %3828 = vsyncpa [#allocation9], 1
    %3829 = vsyncpa [#allocation12], 1
    %3830 = vsyncpa [#allocation7], 1

</llo_original>
